<compile_context>
chip_gen: v7x
topology: tpu7x:2x2x1
jax: 0.10.0
libtpu: 0.0.40
codegen_flags: <defaults>
</compile_context>

<pallas_src>
import math
import functools

import jax
import jax.numpy as jnp
from jax.experimental import pallas as pl
from jax.experimental.pallas import tpu as pltpu

_HEAD_STRIDE = 128   # lane-aligned per-head stride (>= hd, multiple of 128)
_LN_EPS = 1e-5       # PyTorch nn.LayerNorm default


# ---------------------------------------------------------------------------
# In-kernel helpers (pure jnp on values, usable inside Pallas bodies).
# ---------------------------------------------------------------------------
def _layer_norm(x, g, b):
    """LayerNorm over the last axis; x (T, C) f32, g/b (1, C) f32."""
    mu = jnp.mean(x, axis=-1, keepdims=True)
    xc = x - mu
    var = jnp.mean(xc * xc, axis=-1, keepdims=True)
    return xc * jax.lax.rsqrt(var + _LN_EPS) * g + b


def _gelu(x):
    # tanh approximation (lowers to EUP tanh).  nn.GELU's default is exact
    # erf; at this model's activation scales the difference is < 1e-5.
    # TODO(synk): switch to exact erf if bit-parity with PyTorch is required.
    c = math.sqrt(2.0 / math.pi)
    return 0.5 * x * (1.0 + jnp.tanh(c * (x + 0.044715 * x * x * x)))


# ---------------------------------------------------------------------------
# Kernels
# ---------------------------------------------------------------------------
def _embed_kernel(idx_ref, tok_ref, pos_ref, o_ref):
    """Token embedding as a one-hot MXU gather + positional add (grid-less).

    idx_ref: (B*T, 1) int32; tok_ref: (V, C) f32; pos_ref: (B*T, C) f32.
    """
    n = idx_ref.shape[0]
    V = tok_ref.shape[0]
    onehot = (jax.lax.broadcasted_iota(jnp.int32, (n, V), 1)
              == idx_ref[...]).astype(jnp.float32)
    o_ref[...] = (jnp.dot(onehot, tok_ref[...],
                          preferred_element_type=jnp.float32) + pos_ref[...])


def _block_kernel(n_head, hd, dot_dtype, approx_recip,
                  x_ref, ln1g_ref, ln1b_ref, wqkv_ref, bqkv_ref,
                  wproj_ref, bproj_ref, ln2g_ref, ln2b_ref,
                  wfc_ref, bfc_ref, wmp_ref, bmp_ref, o_ref):
    """One transformer block for one batch element (grid=(B,), "parallel")."""
    _, T, C = x_ref.shape
    HD = wproj_ref.shape[1]                         # 128-lane padded head dim
    xb = x_ref[0].astype(jnp.float32)               # (T, C) residual, f32

    # ------------- LN1 + causal multi-head self-attention ------------------
    h1 = _layer_norm(xb, ln1g_ref[...], ln1b_ref[...]).astype(dot_dtype)

    # Head-batched fused QKV projection: weights carry the head axis, so no
    # lane-unaligned per-head activation slicing is ever needed.
    xh = jnp.broadcast_to(h1[None], (n_head, T, C))
    qkv = jnp.einsum("htc,hce->hte", xh, wqkv_ref[...],
                     preferred_element_type=jnp.float32) + bqkv_ref[...]
    q = qkv[:, :, 0 * HD:1 * HD].astype(dot_dtype)   # 128-lane aligned slices
    k = qkv[:, :, 1 * HD:2 * HD].astype(dot_dtype)
    v = qkv[:, :, 2 * HD:3 * HD].astype(dot_dtype)

    # Batched q @ k^T over heads (padded lanes are exact zeros -> bit-exact).
    att = jnp.einsum("htd,hsd->hts", q, k,
                     preferred_element_type=jnp.float32) * (1.0 / math.sqrt(hd))
    row = jax.lax.broadcasted_iota(jnp.int32, (T, T), 0)
    col = jax.lax.broadcasted_iota(jnp.int32, (T, T), 1)
    att = jnp.where(col <= row, att, -1e30)          # finite mask: no NaN risk
    att = jnp.exp(att - jnp.max(att, axis=-1, keepdims=True))
    inv = pl.reciprocal(jnp.sum(att, axis=-1, keepdims=True),
                        approx=approx_recip)         # exact on the f32 path
    p = (att * inv).astype(dot_dtype)

    y = jnp.einsum("hts,hsd->htd", p, v, preferred_element_type=jnp.float32)
    # Head-concat fused into the output projection: batched per-head matmul,
    # then accumulate over the leading head axis (zero layout cost).
    yproj = jnp.einsum("htd,hdc->htc", y.astype(dot_dtype), wproj_ref[...],
                       preferred_element_type=jnp.float32)
    x1 = xb + jnp.sum(yproj, axis=0) + bproj_ref[...]
    # TODO(synk): attn_pdrop / resid_pdrop dropout skipped (eval mode).

    # ------------------------------ LN2 + MLP -------------------------------
    h2 = _layer_norm(x1, ln2g_ref[...], ln2b_ref[...]).astype(dot_dtype)
    m = jnp.dot(h2, wfc_ref[...], preferred_element_type=jnp.float32) + bfc_ref[...]
    m = _gelu(m).astype(dot_dtype)
    mlp = jnp.dot(m, wmp_ref[...], preferred_element_type=jnp.float32) + bmp_ref[...]
    o_ref[0] = (x1 + mlp).astype(o_ref.dtype)


def _final_kernel(dot_dtype, x_ref, g_ref, b_ref, wh_ref, o_ref):
    """Final LayerNorm + vocab head for one batch element (lane-dense logits)."""
    h = _layer_norm(x_ref[0].astype(jnp.float32), g_ref[...], b_ref[...])
    o_ref[0] = jnp.dot(h.astype(dot_dtype), wh_ref[...],
                       preferred_element_type=jnp.float32).astype(o_ref.dtype)


# ---------------------------------------------------------------------------
# One-time parameter repack (torch layout -> kernel layout)
# ---------------------------------------------------------------------------
def prepare_gpt_params(raw, n_head, dot_dtype=jnp.bfloat16):
    """Repack torch-layout minGPT weights for the Pallas kernels (call once).

    bfloat16 matmul operands are the default on ALL TPU generations (v5e's MXU
    is bf16-native too); embeddings / biases / LayerNorm params stay float32
    and all softmax / residual / accumulation math is float32 in-kernel.
    """
    C = raw["tok_emb"].shape[1]
    hd = C // n_head
    HD = _HEAD_STRIDE
    assert hd <= HD

    def pack_qkv_head(w, b):
        # torch Linear weight (C_out, C_in) -> (n_head, C_in, HD), zero-padded.
        wt = jnp.transpose(w.T.reshape(C, n_head, hd), (1, 0, 2))   # (h, C, hd)
        wpad = jnp.zeros((n_head, C, HD), dot_dtype)
        wpad = wpad.at[:, :, :hd].set(wt.astype(dot_dtype))
        bpad = jnp.zeros((n_head, 1, HD), jnp.float32)
        bpad = bpad.at[:, 0, :hd].set(b.reshape(n_head, hd).astype(jnp.float32))
        return wpad, bpad

    blocks = []
    for blk in raw["blocks"]:
        wq, bq = pack_qkv_head(blk["wq"], blk["bq"])
        wk, bk = pack_qkv_head(blk["wk"], blk["bk"])
        wv, bv = pack_qkv_head(blk["wv"], blk["bv"])
        wproj = jnp.zeros((n_head, HD, C), dot_dtype)
        wproj = wproj.at[:, :hd, :].set(
            blk["wp"].T.reshape(n_head, hd, C).astype(dot_dtype))
        blocks.append(dict(
            ln1_g=blk["ln1_g"].reshape(1, C).astype(jnp.float32),
            ln1_b=blk["ln1_b"].reshape(1, C).astype(jnp.float32),
            wqkv=jnp.concatenate([wq, wk, wv], axis=-1),        # (h, C, 3*HD)
            bqkv=jnp.concatenate([bq, bk, bv], axis=-1),        # (h, 1, 3*HD)
            wproj=wproj,                                        # (h, HD, C)
            bproj=blk["bp"].reshape(1, C).astype(jnp.float32),
            ln2_g=blk["ln2_g"].reshape(1, C).astype(jnp.float32),
            ln2_b=blk["ln2_b"].reshape(1, C).astype(jnp.float32),
            w_fc=blk["w_fc"].T.astype(dot_dtype),               # (C, 4C)
            b_fc=blk["b_fc"].reshape(1, -1).astype(jnp.float32),
            w_mp=blk["w_mp"].T.astype(dot_dtype),               # (4C, C)
            b_mp=blk["b_mp"].reshape(1, C).astype(jnp.float32)))

    return dict(
        tok_emb=raw["tok_emb"].astype(jnp.float32),             # (V, C)
        pos_emb=raw["pos_emb"][0].astype(jnp.float32),          # (block_size, C)
        blocks=blocks,
        lnf_g=raw["lnf_g"].reshape(1, C).astype(jnp.float32),
        lnf_b=raw["lnf_b"].reshape(1, C).astype(jnp.float32),
        head_w=raw["head_w"].T.astype(dot_dtype))               # (C, V)


# ---------------------------------------------------------------------------
# Forward pass (eval mode; returns logits)
# ---------------------------------------------------------------------------
@functools.partial(jax.jit, static_argnums=(2,))
def gpt_forward(idx, params, n_head):
    """idx (B, T) int32 -> logits (B, T, vocab_size) float32 (eval mode)."""
    B, T = idx.shape
    V, C = params["tok_emb"].shape
    hd = C // n_head
    dot_dtype = params["head_w"].dtype
    approx_recip = bool(params["head_w"].dtype != jnp.float32)

    vmem = pl.BlockSpec(memory_space=pltpu.MemorySpace.VMEM)
    x_spec = pl.BlockSpec((1, T, C), lambda b: (b, 0, 0))
    # grid=(B,) "parallel": keeps both v7x TensorCores busy; on the 1-TC
    # v5e/v6e chips the extra pipeline cost is only ~0.35 us per step.
    parallel_b = pltpu.CompilerParams(dimension_semantics=("parallel",))

    def full_spec(a):
        zeros = (0,) * a.ndim
        return pl.BlockSpec(a.shape, lambda b: zeros)

    # ---- embedding: one-hot MXU gather + positional add (grid-less) -------
    idx2 = idx.reshape(B * T, 1).astype(jnp.int32)
    pos = jnp.tile(params["pos_emb"][:T], (B, 1))               # (B*T, C) glue
    x = pl.pallas_call(
        _embed_kernel,
        out_shape=jax.ShapeDtypeStruct((B * T, C), jnp.float32),
        in_specs=[vmem, vmem, vmem],
        out_specs=vmem,
    )(idx2, params["tok_emb"], pos).reshape(B, T, C)
    # TODO(synk): embd_pdrop dropout skipped (eval mode).

    # ---- transformer blocks: one fused kernel per layer, grid over batch ---
    blk_kernel = functools.partial(_block_kernel, n_head, hd, dot_dtype,
                                   approx_recip)
    for blk in params["blocks"]:
        weights = (blk["ln1_g"], blk["ln1_b"], blk["wqkv"], blk["bqkv"],
                   blk["wproj"], blk["bproj"], blk["ln2_g"], blk["ln2_b"],
                   blk["w_fc"], blk["b_fc"], blk["w_mp"], blk["b_mp"])
        x = pl.pallas_call(
            blk_kernel,
            out_shape=jax.ShapeDtypeStruct((B, T, C), jnp.float32),
            grid=(B,),
            in_specs=[x_spec] + [full_spec(w) for w in weights],
            out_specs=x_spec,
            compiler_params=parallel_b,
        )(x, *weights)

    # ---- final LayerNorm + vocab head (lane-dense 128-wide logit stores) --
    logits = pl.pallas_call(
        functools.partial(_final_kernel, dot_dtype),
        out_shape=jax.ShapeDtypeStruct((B, T, V), jnp.float32),
        grid=(B,),
        in_specs=[x_spec, full_spec(params["lnf_g"]),
                  full_spec(params["lnf_b"]), full_spec(params["head_w"])],
        out_specs=pl.BlockSpec((1, T, V), lambda b: (b, 0, 0)),
        compiler_params=parallel_b,
    )(x, params["lnf_g"], params["lnf_b"], params["head_w"])
    return logits


# ---------------------------------------------------------------------------
# Pure-JAX reference (mirrors the PyTorch forward, eval mode)
# ---------------------------------------------------------------------------
def _gpt_reference(idx, raw, n_head):
    B, T = idx.shape
    C = raw["tok_emb"].shape[1]
    hd = C // n_head

    def ln(x, g, b):
        mu = x.mean(-1, keepdims=True)
        var = ((x - mu) ** 2).mean(-1, keepdims=True)
        return (x - mu) / jnp.sqrt(var + _LN_EPS) * g + b

    def lin(x, w, b):
        return jnp.einsum("btc,oc->bto", x, w) + b

    x = raw["tok_emb"][idx] + raw["pos_emb"][:, :T, :]
    mask = jnp.tril(jnp.ones((T, T), dtype=bool))
    for blk in raw["blocks"]:
        h = ln(x, blk["ln1_g"], blk["ln1_b"])
        q = lin(h, blk["wq"], blk["bq"]).reshape(B, T, n_head, hd).transpose(0, 2, 1, 3)
        k = lin(h, blk["wk"], blk["bk"]).reshape(B, T, n_head, hd).transpose(0, 2, 1, 3)
        v = lin(h, blk["wv"], blk["bv"]).reshape(B, T, n_head, hd).transpose(0, 2, 1, 3)
        att = jnp.einsum("bhtd,bhsd->bhts", q, k) * (1.0 / math.sqrt(hd))
        att = jnp.where(mask[None, None], att, -jnp.inf)
        att = jax.nn.softmax(att, axis=-1)
        y = jnp.einsum("bhts,bhsd->bhtd", att, v)
        y = y.transpose(0, 2, 1, 3).reshape(B, T, C)
        x = x + lin(y, blk["wp"], blk["bp"])
        h2 = ln(x, blk["ln2_g"], blk["ln2_b"])
        m = lin(h2, blk["w_fc"], blk["b_fc"])
        m = 0.5 * m * (1.0 + jax.lax.erf(m / math.sqrt(2.0)))   # exact nn.GELU
        x = x + lin(m, blk["w_mp"], blk["b_mp"])
    x = ln(x, raw["lnf_g"], raw["lnf_b"])
    return jnp.einsum("btc,vc->btv", x, raw["head_w"])


# ---------------------------------------------------------------------------
# Deterministic toy parameters (torch layout) and self-test
# ---------------------------------------------------------------------------
def init_gpt_params(key, vocab_size, block_size, n_embd, n_head, n_layer):
    ks = iter(jax.random.split(key, 16 * n_layer + 8))

    def nrm(shape, std=0.02):
        return std * jax.random.normal(next(ks), shape, jnp.float32)

    blocks = []
    for _ in range(n_layer):
        blocks.append(dict(
            ln1_g=1.0 + nrm((n_embd,), 0.05), ln1_b=nrm((n_embd,), 0.05),
            wq=nrm((n_embd, n_embd)), bq=nrm((n_embd,)),
            wk=nrm((n_embd, n_embd)), bk=nrm((n_embd,)),
            wv=nrm((n_embd, n_embd)), bv=nrm((n_embd,)),
            wp=nrm((n_embd, n_embd)), bp=nrm((n_embd,)),
            ln2_g=1.0 + nrm((n_embd,), 0.05), ln2_b=nrm((n_embd,), 0.05),
            w_fc=nrm((4 * n_embd, n_embd)), b_fc=nrm((4 * n_embd,)),
            w_mp=nrm((n_embd, 4 * n_embd)), b_mp=nrm((n_embd,))))
    return dict(
        tok_emb=nrm((vocab_size, n_embd)),
        pos_emb=nrm((1, block_size, n_embd)),
        blocks=blocks,
        lnf_g=1.0 + nrm((n_embd,), 0.05), lnf_b=nrm((n_embd,), 0.05),
        head_w=nrm((vocab_size, n_embd)))


if __name__ == "__main__":
    # Toy config: vocab=128 (lane-dense logits), block_size=8, n_embd=32,
    # n_head=4 (hd=8), n_layer=2; batch B=2, sequence T=8 (= block_size).
    vocab_size, block_size, n_embd, n_head, n_layer = 128, 8, 32, 4, 2
    B, T = 2, block_size

    key = jax.random.PRNGKey(0)
    k_param, k_idx = jax.random.split(key)
    raw = init_gpt_params(k_param, vocab_size, block_size, n_embd, n_head, n_layer)
    idx = jax.random.randint(k_idx, (B, T), 0, vocab_size, dtype=jnp.int32)

    ref = _gpt_reference(idx, raw, n_head)

    # float32 matmul path: tight check against the PyTorch-equivalent reference.
    prep_f32 = prepare_gpt_params(raw, n_head, dot_dtype=jnp.float32)
    out_f32 = jax.block_until_ready(gpt_forward(idx, prep_f32, n_head))
    assert out_f32.shape == (B, T, vocab_size)
    err32 = float(jnp.max(jnp.abs(out_f32 - ref)))
    assert err32 < 2e-3, f"f32 max abs err = {err32}"

    # bf16 matmul-operand path (the default; recommended on v5e/v6e/v7x).
    prep_bf16 = prepare_gpt_params(raw, n_head)
    out_bf16 = jax.block_until_ready(gpt_forward(idx, prep_bf16, n_head))
    assert out_bf16.shape == (B, T, vocab_size)
    err16 = float(jnp.max(jnp.abs(out_bf16 - ref)))
    assert err16 < 5e-2, f"bf16 max abs err = {err16}"

    print("KERNEL_OK")
</pallas_src>

<mosaic_0001>
module attributes {stable_mosaic.version = 11 : i64} {
  func.func @_embed_kernel(%arg0: memref<16x1xi32, #tpu.memory_space<vmem>>, %arg1: memref<128x32xf32, #tpu.memory_space<vmem>>, %arg2: memref<16x32xf32, #tpu.memory_space<vmem>>, %arg3: memref<16x32xf32, #tpu.memory_space<vmem>>) attributes {dimension_semantics = [], scalar_prefetch = 0 : i64, scratch_operands = 0 : i64, tpu.core_type = #tpu.core_type<tc>} {
    %0 = tpu.iota {dimensions = array<i32: 1>} : vector<16x128xi32>
    %c0 = arith.constant 0 : index
    %c0_0 = arith.constant 0 : index
    %1 = vector.load %arg0[%c0, %c0_0] : memref<16x1xi32, #tpu.memory_space<vmem>>, vector<16x1xi32>
    %2 = vector.broadcast %1 : vector<16x1xi32> to vector<16x128xi32>
    %3 = arith.cmpi eq, %0, %2 : vector<16x128xi32>
    %4 = arith.extui %3 : vector<16x128xi1> to vector<16x128xi32>
    %5 = arith.sitofp %4 : vector<16x128xi32> to vector<16x128xf32>
    %c0_1 = arith.constant 0 : index
    %c0_2 = arith.constant 0 : index
    %6 = vector.load %arg1[%c0_1, %c0_2] : memref<128x32xf32, #tpu.memory_space<vmem>>, vector<128x32xf32>
    %cst = arith.constant dense<0.000000e+00> : vector<16x32xf32>
    %7 = tpu.matmul %5, %6, %cst {dimension_numbers = #tpu.dot_dimension_numbers<[1], [0], [0], [1], [0, 0, 1, 1], [], []>} : vector<16x128xf32>, vector<128x32xf32>, vector<16x32xf32> -> vector<16x32xf32>
    %c0_3 = arith.constant 0 : index
    %c0_4 = arith.constant 0 : index
    %8 = vector.load %arg2[%c0_3, %c0_4] : memref<16x32xf32, #tpu.memory_space<vmem>>, vector<16x32xf32>
    %9 = arith.addf %7, %8 : vector<16x32xf32>
    %c0_5 = arith.constant 0 : index
    %c0_6 = arith.constant 0 : index
    %10 = vector.load %arg3[%c0_5, %c0_6] : memref<16x32xf32, #tpu.memory_space<vmem>>, vector<16x32xf32>
    tpu.vector_store %arg3[%c0_5, %c0_6], %9 {strides = array<i32>} : memref<16x32xf32, #tpu.memory_space<vmem>>, vector<16x32xf32>,
    return
  }
}

module attributes {stable_mosaic.version = 11 : i64} {
  func.func @_final_kernel(%arg0: i32, %arg1: memref<1x8x32xf32, #tpu.memory_space<vmem>>, %arg2: memref<1x32xf32, #tpu.memory_space<vmem>>, %arg3: memref<1x32xf32, #tpu.memory_space<vmem>>, %arg4: memref<32x128xf32, #tpu.memory_space<vmem>>, %arg5: memref<1x8x128xf32, #tpu.memory_space<vmem>>) attributes {dimension_semantics = [#tpu.dimension_semantics<parallel>], iteration_bounds = array<i64: 2>, scalar_prefetch = 0 : i64, scratch_operands = 0 : i64, tpu.core_type = #tpu.core_type<tc>, window_params = [{transform_indices = @transform_0, window_bounds = array<i64: 1, 8, 32>}, {pipeline_mode = #tpu.pipeline_mode<synchronous>, transform_indices = @transform_1, window_bounds = array<i64: 1, 32>}, {pipeline_mode = #tpu.pipeline_mode<synchronous>, transform_indices = @transform_2, window_bounds = array<i64: 1, 32>}, {pipeline_mode = #tpu.pipeline_mode<synchronous>, transform_indices = @transform_3, window_bounds = array<i64: 32, 128>}, {transform_indices = @transform_4, window_bounds = array<i64: 1, 8, 128>}]} {
    %c0 = arith.constant 0 : index
    %c0_0 = arith.constant 0 : index
    %c0_1 = arith.constant 0 : index
    %0 = vector.load %arg1[%c0, %c0_0, %c0_1] : memref<1x8x32xf32, #tpu.memory_space<vmem>>, vector<1x8x32xf32>
    %1 = vector.shape_cast %0 : vector<1x8x32xf32> to vector<8x32xf32>
    %c0_2 = arith.constant 0 : index
    %c0_3 = arith.constant 0 : index
    %2 = vector.load %arg2[%c0_2, %c0_3] : memref<1x32xf32, #tpu.memory_space<vmem>>, vector<1x32xf32>
    %c0_4 = arith.constant 0 : index
    %c0_5 = arith.constant 0 : index
    %3 = vector.load %arg3[%c0_4, %c0_5] : memref<1x32xf32, #tpu.memory_space<vmem>>, vector<1x32xf32>
    %cst = arith.constant dense<0.000000e+00> : vector<8xf32>
    %4 = vector.multi_reduction <add>, %1, %cst [1] : vector<8x32xf32> to vector<8xf32>
    %5 = vector.shape_cast %4 : vector<8xf32> to vector<8x1xf32>
    %cst_6 = arith.constant 3.200000e+01 : f32
    %6 = vector.broadcast %cst_6 : f32 to vector<8x1xf32>
    %7 = arith.divf %5, %6 : vector<8x1xf32>
    %8 = vector.broadcast %7 : vector<8x1xf32> to vector<8x32xf32>
    %9 = arith.subf %1, %8 : vector<8x32xf32>
    %10 = arith.mulf %9, %9 : vector<8x32xf32>
    %cst_7 = arith.constant dense<0.000000e+00> : vector<8xf32>
    %11 = vector.multi_reduction <add>, %10, %cst_7 [1] : vector<8x32xf32> to vector<8xf32>
    %12 = vector.shape_cast %11 : vector<8xf32> to vector<8x1xf32>
    %cst_8 = arith.constant 3.200000e+01 : f32
    %13 = vector.broadcast %cst_8 : f32 to vector<8x1xf32>
    %14 = arith.divf %12, %13 : vector<8x1xf32>
    %cst_9 = arith.constant 9.99999974E-6 : f32
    %15 = vector.broadcast %cst_9 : f32 to vector<8x1xf32>
    %16 = arith.addf %14, %15 : vector<8x1xf32>
    %17 = math.rsqrt %16 : vector<8x1xf32>
    %18 = vector.broadcast %17 : vector<8x1xf32> to vector<8x32xf32>
    %19 = arith.mulf %9, %18 : vector<8x32xf32>
    %20 = vector.broadcast %2 : vector<1x32xf32> to vector<8x32xf32>
    %21 = arith.mulf %19, %20 : vector<8x32xf32>
    %22 = vector.broadcast %3 : vector<1x32xf32> to vector<8x32xf32>
    %23 = arith.addf %21, %22 : vector<8x32xf32>
    %c0_10 = arith.constant 0 : index
    %c0_11 = arith.constant 0 : index
    %24 = vector.load %arg4[%c0_10, %c0_11] : memref<32x128xf32, #tpu.memory_space<vmem>>, vector<32x128xf32>
    %cst_12 = arith.constant dense<0.000000e+00> : vector<8x128xf32>
    %25 = tpu.matmul %23, %24, %cst_12 {dimension_numbers = #tpu.dot_dimension_numbers<[1], [0], [0], [1], [0, 0, 1, 1], [], []>} : vector<8x32xf32>, vector<32x128xf32>, vector<8x128xf32> -> vector<8x128xf32>
    %c0_13 = arith.constant 0 : index
    %c0_14 = arith.constant 0 : index
    %c0_15 = arith.constant 0 : index
    %26 = vector.load %arg5[%c0_13, %c0_14, %c0_15] : memref<1x8x128xf32, #tpu.memory_space<vmem>>, vector<1x8x128xf32>
    %27 = vector.shape_cast %26 : vector<1x8x128xf32> to vector<8x128xf32>
    %28 = vector.shape_cast %25 : vector<8x128xf32> to vector<1x8x128xf32>
    tpu.vector_store %arg5[%c0_13, %c0_14, %c0_15], %28 {strides = array<i32>} : memref<1x8x128xf32, #tpu.memory_space<vmem>>, vector<1x8x128xf32>,
    return
  }
  func.func @transform_0(%arg0: i32) -> (i32, i32, i32) {
    %c0_i32 = arith.constant 0 : i32
    %c0_i32_0 = arith.constant 0 : i32
    %c0_i32_1 = arith.constant 0 : i32
    return %arg0, %c0_i32, %c0_i32_0 : i32, i32, i32
  }
  func.func @transform_1(%arg0: i32) -> (i32, i32) {
    %c0_i32 = arith.constant 0 : i32
    %c0_i32_0 = arith.constant 0 : i32
    %c0_i32_1 = arith.constant 0 : i32
    return %c0_i32, %c0_i32_0 : i32, i32
  }
  func.func @transform_2(%arg0: i32) -> (i32, i32) {
    %c0_i32 = arith.constant 0 : i32
    %c0_i32_0 = arith.constant 0 : i32
    %c0_i32_1 = arith.constant 0 : i32
    return %c0_i32, %c0_i32_0 : i32, i32
  }
  func.func @transform_3(%arg0: i32) -> (i32, i32) {
    %c0_i32 = arith.constant 0 : i32
    %c0_i32_0 = arith.constant 0 : i32
    %c0_i32_1 = arith.constant 0 : i32
    return %c0_i32, %c0_i32_0 : i32, i32
  }
  func.func @transform_4(%arg0: i32) -> (i32, i32, i32) {
    %c0_i32 = arith.constant 0 : i32
    %c0_i32_0 = arith.constant 0 : i32
    %c0_i32_1 = arith.constant 0 : i32
    return %arg0, %c0_i32, %c0_i32_0 : i32, i32, i32
  }
}

module attributes {stable_mosaic.version = 11 : i64} {
  func.func @_block_kernel(%arg0: i32, %arg1: memref<1x8x32xf32, #tpu.memory_space<vmem>>, %arg2: memref<1x32xf32, #tpu.memory_space<vmem>>, %arg3: memref<1x32xf32, #tpu.memory_space<vmem>>, %arg4: memref<4x32x384xf32, #tpu.memory_space<vmem>>, %arg5: memref<4x1x384xf32, #tpu.memory_space<vmem>>, %arg6: memref<4x128x32xf32, #tpu.memory_space<vmem>>, %arg7: memref<1x32xf32, #tpu.memory_space<vmem>>, %arg8: memref<1x32xf32, #tpu.memory_space<vmem>>, %arg9: memref<1x32xf32, #tpu.memory_space<vmem>>, %arg10: memref<32x128xf32, #tpu.memory_space<vmem>>, %arg11: memref<1x128xf32, #tpu.memory_space<vmem>>, %arg12: memref<128x32xf32, #tpu.memory_space<vmem>>, %arg13: memref<1x32xf32, #tpu.memory_space<vmem>>, %arg14: memref<1x8x32xf32, #tpu.memory_space<vmem>>) attributes {dimension_semantics = [#tpu.dimension_semantics<parallel>], iteration_bounds = array<i64: 2>, scalar_prefetch = 0 : i64, scratch_operands = 0 : i64, tpu.core_type = #tpu.core_type<tc>, window_params = [{transform_indices = @transform_0, window_bounds = array<i64: 1, 8, 32>}, {pipeline_mode = #tpu.pipeline_mode<synchronous>, transform_indices = @transform_1, window_bounds = array<i64: 1, 32>}, {pipeline_mode = #tpu.pipeline_mode<synchronous>, transform_indices = @transform_2, window_bounds = array<i64: 1, 32>}, {pipeline_mode = #tpu.pipeline_mode<synchronous>, transform_indices = @transform_3, window_bounds = array<i64: 4, 32, 384>}, {pipeline_mode = #tpu.pipeline_mode<synchronous>, transform_indices = @transform_4, window_bounds = array<i64: 4, 1, 384>}, {pipeline_mode = #tpu.pipeline_mode<synchronous>, transform_indices = @transform_5, window_bounds = array<i64: 4, 128, 32>}, {pipeline_mode = #tpu.pipeline_mode<synchronous>, transform_indices = @transform_6, window_bounds = array<i64: 1, 32>}, {pipeline_mode = #tpu.pipeline_mode<synchronous>, transform_indices = @transform_7, window_bounds = array<i64: 1, 32>}, {pipeline_mode = #tpu.pipeline_mode<synchronous>, transform_indices = @transform_8, window_bounds = array<i64: 1, 32>}, {pipeline_mode = #tpu.pipeline_mode<synchronous>, transform_indices = @transform_9, window_bounds = array<i64: 32, 128>}, {pipeline_mode = #tpu.pipeline_mode<synchronous>, transform_indices = @transform_10, window_bounds = array<i64: 1, 128>}, {pipeline_mode = #tpu.pipeline_mode<synchronous>, transform_indices = @transform_11, window_bounds = array<i64: 128, 32>}, {pipeline_mode = #tpu.pipeline_mode<synchronous>, transform_indices = @transform_12, window_bounds = array<i64: 1, 32>}, {transform_indices = @transform_13, window_bounds = array<i64: 1, 8, 32>}]} {
    %c0 = arith.constant 0 : index
    %c0_0 = arith.constant 0 : index
    %c0_1 = arith.constant 0 : index
    %0 = vector.load %arg1[%c0, %c0_0, %c0_1] : memref<1x8x32xf32, #tpu.memory_space<vmem>>, vector<1x8x32xf32>
    %1 = vector.shape_cast %0 : vector<1x8x32xf32> to vector<8x32xf32>
    %c0_2 = arith.constant 0 : index
    %c0_3 = arith.constant 0 : index
    %2 = vector.load %arg2[%c0_2, %c0_3] : memref<1x32xf32, #tpu.memory_space<vmem>>, vector<1x32xf32>
    %c0_4 = arith.constant 0 : index
    %c0_5 = arith.constant 0 : index
    %3 = vector.load %arg3[%c0_4, %c0_5] : memref<1x32xf32, #tpu.memory_space<vmem>>, vector<1x32xf32>
    %cst = arith.constant dense<0.000000e+00> : vector<8xf32>
    %4 = vector.multi_reduction <add>, %1, %cst [1] : vector<8x32xf32> to vector<8xf32>
    %5 = vector.shape_cast %4 : vector<8xf32> to vector<8x1xf32>
    %cst_6 = arith.constant 3.200000e+01 : f32
    %6 = vector.broadcast %cst_6 : f32 to vector<8x1xf32>
    %7 = arith.divf %5, %6 : vector<8x1xf32>
    %8 = vector.broadcast %7 : vector<8x1xf32> to vector<8x32xf32>
    %9 = arith.subf %1, %8 : vector<8x32xf32>
    %10 = arith.mulf %9, %9 : vector<8x32xf32>
    %cst_7 = arith.constant dense<0.000000e+00> : vector<8xf32>
    %11 = vector.multi_reduction <add>, %10, %cst_7 [1] : vector<8x32xf32> to vector<8xf32>
    %12 = vector.shape_cast %11 : vector<8xf32> to vector<8x1xf32>
    %cst_8 = arith.constant 3.200000e+01 : f32
    %13 = vector.broadcast %cst_8 : f32 to vector<8x1xf32>
    %14 = arith.divf %12, %13 : vector<8x1xf32>
    %cst_9 = arith.constant 9.99999974E-6 : f32
    %15 = vector.broadcast %cst_9 : f32 to vector<8x1xf32>
    %16 = arith.addf %14, %15 : vector<8x1xf32>
    %17 = math.rsqrt %16 : vector<8x1xf32>
    %18 = vector.broadcast %17 : vector<8x1xf32> to vector<8x32xf32>
    %19 = arith.mulf %9, %18 : vector<8x32xf32>
    %20 = vector.broadcast %2 : vector<1x32xf32> to vector<8x32xf32>
    %21 = arith.mulf %19, %20 : vector<8x32xf32>
    %22 = vector.broadcast %3 : vector<1x32xf32> to vector<8x32xf32>
    %23 = arith.addf %21, %22 : vector<8x32xf32>
    %24 = vector.shape_cast %23 : vector<8x32xf32> to vector<1x8x32xf32>
    %25 = vector.shape_cast %24 : vector<1x8x32xf32> to vector<1x8x32xf32>
    %26 = vector.broadcast %25 : vector<1x8x32xf32> to vector<4x8x32xf32>
    %c0_10 = arith.constant 0 : index
    %c0_11 = arith.constant 0 : index
    %c0_12 = arith.constant 0 : index
    %27 = vector.load %arg4[%c0_10, %c0_11, %c0_12] : memref<4x32x384xf32, #tpu.memory_space<vmem>>, vector<4x32x384xf32>
    "tpu.trace_start"() <{level = 10 : i32, message = "htc,hce->hte"}> : () -> ()
    %cst_13 = arith.constant dense<0.000000e+00> : vector<4x8x384xf32>
    %28 = tpu.matmul %26, %27, %cst_13 {dimension_numbers = #tpu.dot_dimension_numbers<[2], [1], [1], [2], [0, 0, 0, 1, 1, 2], [0], [0]>} : vector<4x8x32xf32>, vector<4x32x384xf32>, vector<4x8x384xf32> -> vector<4x8x384xf32>
    "tpu.trace_stop"() : () -> ()
    %c0_14 = arith.constant 0 : index
    %c0_15 = arith.constant 0 : index
    %c0_16 = arith.constant 0 : index
    %29 = vector.load %arg5[%c0_14, %c0_15, %c0_16] : memref<4x1x384xf32, #tpu.memory_space<vmem>>, vector<4x1x384xf32>
    %30 = vector.broadcast %29 : vector<4x1x384xf32> to vector<4x8x384xf32>
    %31 = arith.addf %28, %30 : vector<4x8x384xf32>
    %32 = vector.extract_strided_slice %31 {offsets = [0, 0, 0], sizes = [4, 8, 128], strides = [1, 1, 1]} : vector<4x8x384xf32> to vector<4x8x128xf32>
    %33 = vector.extract_strided_slice %31 {offsets = [0, 0, 128], sizes = [4, 8, 128], strides = [1, 1, 1]} : vector<4x8x384xf32> to vector<4x8x128xf32>
    %34 = vector.extract_strided_slice %31 {offsets = [0, 0, 256], sizes = [4, 8, 128], strides = [1, 1, 1]} : vector<4x8x384xf32> to vector<4x8x128xf32>
    "tpu.trace_start"() <{level = 10 : i32, message = "htd,hsd->hts"}> : () -> ()
    %cst_17 = arith.constant dense<0.000000e+00> : vector<4x8x8xf32>
    %35 = tpu.matmul %32, %33, %cst_17 {dimension_numbers = #tpu.dot_dimension_numbers<[2], [2], [1], [1], [0, 0, 0, 1, 1, 1], [0], [0]>} : vector<4x8x128xf32>, vector<4x8x128xf32>, vector<4x8x8xf32> -> vector<4x8x8xf32>
    "tpu.trace_stop"() : () -> ()
    %cst_18 = arith.constant 0.353553385 : f32
    %36 = vector.broadcast %cst_18 : f32 to vector<4x8x8xf32>
    %37 = arith.mulf %35, %36 : vector<4x8x8xf32>
    %38 = tpu.iota {dimensions = array<i32: 0>} : vector<8x8xi32>
    %39 = tpu.iota {dimensions = array<i32: 1>} : vector<8x8xi32>
    %40 = arith.cmpi sle, %39, %38 : vector<8x8xi32>
    %cst_19 = arith.constant -1.000000e+30 : f32
    %41 = vector.shape_cast %40 : vector<8x8xi1> to vector<1x8x8xi1>
    %42 = vector.broadcast %41 : vector<1x8x8xi1> to vector<4x8x8xi1>
    %43 = vector.broadcast %cst_19 : f32 to vector<4x8x8xf32>
    %44 = arith.select %42, %37, %43 : vector<4x8x8xi1>, vector<4x8x8xf32>
    %cst_20 = arith.constant dense<0xFF800000> : vector<4x8xf32>
    %45 = vector.multi_reduction <maximumf>, %44, %cst_20 [2] : vector<4x8x8xf32> to vector<4x8xf32>
    %46 = vector.shape_cast %45 : vector<4x8xf32> to vector<4x8x1xf32>
    %47 = vector.broadcast %46 : vector<4x8x1xf32> to vector<4x8x8xf32>
    %48 = arith.subf %44, %47 : vector<4x8x8xf32>
    %49 = math.exp %48 : vector<4x8x8xf32>
    %cst_21 = arith.constant dense<0.000000e+00> : vector<4x8xf32>
    %50 = vector.multi_reduction <add>, %49, %cst_21 [2] : vector<4x8x8xf32> to vector<4x8xf32>
    %51 = vector.shape_cast %50 : vector<4x8xf32> to vector<4x8x1xf32>
    %52 = tpu.reciprocal %51 : vector<4x8x1xf32> -> vector<4x8x1xf32>
    %53 = vector.broadcast %52 : vector<4x8x1xf32> to vector<4x8x8xf32>
    %54 = arith.mulf %49, %53 : vector<4x8x8xf32>
    "tpu.trace_start"() <{level = 10 : i32, message = "hts,hsd->htd"}> : () -> ()
    %cst_22 = arith.constant dense<0.000000e+00> : vector<4x8x128xf32>
    %55 = tpu.matmul %54, %34, %cst_22 {dimension_numbers = #tpu.dot_dimension_numbers<[2], [1], [1], [2], [0, 0, 0, 1, 1, 2], [0], [0]>} : vector<4x8x8xf32>, vector<4x8x128xf32>, vector<4x8x128xf32> -> vector<4x8x128xf32>
    "tpu.trace_stop"() : () -> ()
    %c0_23 = arith.constant 0 : index
    %c0_24 = arith.constant 0 : index
    %c0_25 = arith.constant 0 : index
    %56 = vector.load %arg6[%c0_23, %c0_24, %c0_25] : memref<4x128x32xf32, #tpu.memory_space<vmem>>, vector<4x128x32xf32>
    "tpu.trace_start"() <{level = 10 : i32, message = "htd,hdc->htc"}> : () -> ()
    %cst_26 = arith.constant dense<0.000000e+00> : vector<4x8x32xf32>
    %57 = tpu.matmul %55, %56, %cst_26 {dimension_numbers = #tpu.dot_dimension_numbers<[2], [1], [1], [2], [0, 0, 0, 1, 1, 2], [0], [0]>} : vector<4x8x128xf32>, vector<4x128x32xf32>, vector<4x8x32xf32> -> vector<4x8x32xf32>
    "tpu.trace_stop"() : () -> ()
    %cst_27 = arith.constant dense<0.000000e+00> : vector<8x32xf32>
    %58 = vector.multi_reduction <add>, %57, %cst_27 [0] : vector<4x8x32xf32> to vector<8x32xf32>
    %59 = arith.addf %1, %58 : vector<8x32xf32>
    %c0_28 = arith.constant 0 : index
    %c0_29 = arith.constant 0 : index
    %60 = vector.load %arg7[%c0_28, %c0_29] : memref<1x32xf32, #tpu.memory_space<vmem>>, vector<1x32xf32>
    %61 = vector.broadcast %60 : vector<1x32xf32> to vector<8x32xf32>
    %62 = arith.addf %59, %61 : vector<8x32xf32>
    %c0_30 = arith.constant 0 : index
    %c0_31 = arith.constant 0 : index
    %63 = vector.load %arg8[%c0_30, %c0_31] : memref<1x32xf32, #tpu.memory_space<vmem>>, vector<1x32xf32>
    %c0_32 = arith.constant 0 : index
    %c0_33 = arith.constant 0 : index
    %64 = vector.load %arg9[%c0_32, %c0_33] : memref<1x32xf32, #tpu.memory_space<vmem>>, vector<1x32xf32>
    %cst_34 = arith.constant dense<0.000000e+00> : vector<8xf32>
    %65 = vector.multi_reduction <add>, %62, %cst_34 [1] : vector<8x32xf32> to vector<8xf32>
    %66 = vector.shape_cast %65 : vector<8xf32> to vector<8x1xf32>
    %cst_35 = arith.constant 3.200000e+01 : f32
    %67 = vector.broadcast %cst_35 : f32 to vector<8x1xf32>
    %68 = arith.divf %66, %67 : vector<8x1xf32>
    %69 = vector.broadcast %68 : vector<8x1xf32> to vector<8x32xf32>
    %70 = arith.subf %62, %69 : vector<8x32xf32>
    %71 = arith.mulf %70, %70 : vector<8x32xf32>
    %cst_36 = arith.constant dense<0.000000e+00> : vector<8xf32>
    %72 = vector.multi_reduction <add>, %71, %cst_36 [1] : vector<8x32xf32> to vector<8xf32>
    %73 = vector.shape_cast %72 : vector<8xf32> to vector<8x1xf32>
    %cst_37 = arith.constant 3.200000e+01 : f32
    %74 = vector.broadcast %cst_37 : f32 to vector<8x1xf32>
    %75 = arith.divf %73, %74 : vector<8x1xf32>
    %cst_38 = arith.constant 9.99999974E-6 : f32
    %76 = vector.broadcast %cst_38 : f32 to vector<8x1xf32>
    %77 = arith.addf %75, %76 : vector<8x1xf32>
    %78 = math.rsqrt %77 : vector<8x1xf32>
    %79 = vector.broadcast %78 : vector<8x1xf32> to vector<8x32xf32>
    %80 = arith.mulf %70, %79 : vector<8x32xf32>
    %81 = vector.broadcast %63 : vector<1x32xf32> to vector<8x32xf32>
    %82 = arith.mulf %80, %81 : vector<8x32xf32>
    %83 = vector.broadcast %64 : vector<1x32xf32> to vector<8x32xf32>
    %84 = arith.addf %82, %83 : vector<8x32xf32>
    %c0_39 = arith.constant 0 : index
    %c0_40 = arith.constant 0 : index
    %85 = vector.load %arg10[%c0_39, %c0_40] : memref<32x128xf32, #tpu.memory_space<vmem>>, vector<32x128xf32>
    %cst_41 = arith.constant dense<0.000000e+00> : vector<8x128xf32>
    %86 = tpu.matmul %84, %85, %cst_41 {dimension_numbers = #tpu.dot_dimension_numbers<[1], [0], [0], [1], [0, 0, 1, 1], [], []>} : vector<8x32xf32>, vector<32x128xf32>, vector<8x128xf32> -> vector<8x128xf32>
    %c0_42 = arith.constant 0 : index
    %c0_43 = arith.constant 0 : index
    %87 = vector.load %arg11[%c0_42, %c0_43] : memref<1x128xf32, #tpu.memory_space<vmem>>, vector<1x128xf32>
    %88 = vector.broadcast %87 : vector<1x128xf32> to vector<8x128xf32>
    %89 = arith.addf %86, %88 : vector<8x128xf32>
    %cst_44 = arith.constant 5.000000e-01 : f32
    %90 = vector.broadcast %cst_44 : f32 to vector<8x128xf32>
    %91 = arith.mulf %90, %89 : vector<8x128xf32>
    %cst_45 = arith.constant 4.471500e-02 : f32
    %92 = vector.broadcast %cst_45 : f32 to vector<8x128xf32>
    %93 = arith.mulf %92, %89 : vector<8x128xf32>
    %94 = arith.mulf %93, %89 : vector<8x128xf32>
    %95 = arith.mulf %94, %89 : vector<8x128xf32>
    %96 = arith.addf %89, %95 : vector<8x128xf32>
    %cst_46 = arith.constant 0.797884583 : f32
    %97 = vector.broadcast %cst_46 : f32 to vector<8x128xf32>
    %98 = arith.mulf %97, %96 : vector<8x128xf32>
    %99 = math.tanh %98 : vector<8x128xf32>
    %cst_47 = arith.constant 1.000000e+00 : f32
    %100 = vector.broadcast %cst_47 : f32 to vector<8x128xf32>
    %101 = arith.addf %100, %99 : vector<8x128xf32>
    %102 = arith.mulf %91, %101 : vector<8x128xf32>
    %c0_48 = arith.constant 0 : index
    %c0_49 = arith.constant 0 : index
    %103 = vector.load %arg12[%c0_48, %c0_49] : memref<128x32xf32, #tpu.memory_space<vmem>>, vector<128x32xf32>
    %cst_50 = arith.constant dense<0.000000e+00> : vector<8x32xf32>
    %104 = tpu.matmul %102, %103, %cst_50 {dimension_numbers = #tpu.dot_dimension_numbers<[1], [0], [0], [1], [0, 0, 1, 1], [], []>} : vector<8x128xf32>, vector<128x32xf32>, vector<8x32xf32> -> vector<8x32xf32>
    %c0_51 = arith.constant 0 : index
    %c0_52 = arith.constant 0 : index
    %105 = vector.load %arg13[%c0_51, %c0_52] : memref<1x32xf32, #tpu.memory_space<vmem>>, vector<1x32xf32>
    %106 = vector.broadcast %105 : vector<1x32xf32> to vector<8x32xf32>
    %107 = arith.addf %104, %106 : vector<8x32xf32>
    %108 = arith.addf %62, %107 : vector<8x32xf32>
    %c0_53 = arith.constant 0 : index
    %c0_54 = arith.constant 0 : index
    %c0_55 = arith.constant 0 : index
    %109 = vector.load %arg14[%c0_53, %c0_54, %c0_55] : memref<1x8x32xf32, #tpu.memory_space<vmem>>, vector<1x8x32xf32>
    %110 = vector.shape_cast %109 : vector<1x8x32xf32> to vector<8x32xf32>
    %111 = vector.shape_cast %108 : vector<8x32xf32> to vector<1x8x32xf32>
    tpu.vector_store %arg14[%c0_53, %c0_54, %c0_55], %111 {strides = array<i32>} : memref<1x8x32xf32, #tpu.memory_space<vmem>>, vector<1x8x32xf32>,
    return
  }
  func.func @transform_0(%arg0: i32) -> (i32, i32, i32) {
    %c0_i32 = arith.constant 0 : i32
    %c0_i32_0 = arith.constant 0 : i32
    %c0_i32_1 = arith.constant 0 : i32
    return %arg0, %c0_i32, %c0_i32_0 : i32, i32, i32
  }
  func.func @transform_1(%arg0: i32) -> (i32, i32) {
    %c0_i32 = arith.constant 0 : i32
    %c0_i32_0 = arith.constant 0 : i32
    %c0_i32_1 = arith.constant 0 : i32
    return %c0_i32, %c0_i32_0 : i32, i32
  }
  func.func @transform_2(%arg0: i32) -> (i32, i32) {
    %c0_i32 = arith.constant 0 : i32
    %c0_i32_0 = arith.constant 0 : i32
    %c0_i32_1 = arith.constant 0 : i32
    return %c0_i32, %c0_i32_0 : i32, i32
  }
  func.func @transform_3(%arg0: i32) -> (i32, i32, i32) {
    %c0_i32 = arith.constant 0 : i32
    %c0_i32_0 = arith.constant 0 : i32
    %c0_i32_1 = arith.constant 0 : i32
    %c0_i32_2 = arith.constant 0 : i32
    return %c0_i32, %c0_i32_0, %c0_i32_1 : i32, i32, i32
  }
  func.func @transform_4(%arg0: i32) -> (i32, i32, i32) {
    %c0_i32 = arith.constant 0 : i32
    %c0_i32_0 = arith.constant 0 : i32
    %c0_i32_1 = arith.constant 0 : i32
    %c0_i32_2 = arith.constant 0 : i32
    return %c0_i32, %c0_i32_0, %c0_i32_1 : i32, i32, i32
  }
  func.func @transform_5(%arg0: i32) -> (i32, i32, i32) {
    %c0_i32 = arith.constant 0 : i32
    %c0_i32_0 = arith.constant 0 : i32
    %c0_i32_1 = arith.constant 0 : i32
    %c0_i32_2 = arith.constant 0 : i32
    return %c0_i32, %c0_i32_0, %c0_i32_1 : i32, i32, i32
  }
  func.func @transform_6(%arg0: i32) -> (i32, i32) {
    %c0_i32 = arith.constant 0 : i32
    %c0_i32_0 = arith.constant 0 : i32
    %c0_i32_1 = arith.constant 0 : i32
    return %c0_i32, %c0_i32_0 : i32, i32
  }
  func.func @transform_7(%arg0: i32) -> (i32, i32) {
    %c0_i32 = arith.constant 0 : i32
    %c0_i32_0 = arith.constant 0 : i32
    %c0_i32_1 = arith.constant 0 : i32
    return %c0_i32, %c0_i32_0 : i32, i32
  }
  func.func @transform_8(%arg0: i32) -> (i32, i32) {
    %c0_i32 = arith.constant 0 : i32
    %c0_i32_0 = arith.constant 0 : i32
    %c0_i32_1 = arith.constant 0 : i32
    return %c0_i32, %c0_i32_0 : i32, i32
  }
  func.func @transform_9(%arg0: i32) -> (i32, i32) {
    %c0_i32 = arith.constant 0 : i32
    %c0_i32_0 = arith.constant 0 : i32
    %c0_i32_1 = arith.constant 0 : i32
    return %c0_i32, %c0_i32_0 : i32, i32
  }
  func.func @transform_10(%arg0: i32) -> (i32, i32) {
    %c0_i32 = arith.constant 0 : i32
    %c0_i32_0 = arith.constant 0 : i32
    %c0_i32_1 = arith.constant 0 : i32
    return %c0_i32, %c0_i32_0 : i32, i32
  }
  func.func @transform_11(%arg0: i32) -> (i32, i32) {
    %c0_i32 = arith.constant 0 : i32
    %c0_i32_0 = arith.constant 0 : i32
    %c0_i32_1 = arith.constant 0 : i32
    return %c0_i32, %c0_i32_0 : i32, i32
  }
  func.func @transform_12(%arg0: i32) -> (i32, i32) {
    %c0_i32 = arith.constant 0 : i32
    %c0_i32_0 = arith.constant 0 : i32
    %c0_i32_1 = arith.constant 0 : i32
    return %c0_i32, %c0_i32_0 : i32, i32
  }
  func.func @transform_13(%arg0: i32) -> (i32, i32, i32) {
    %c0_i32 = arith.constant 0 : i32
    %c0_i32_0 = arith.constant 0 : i32
    %c0_i32_1 = arith.constant 0 : i32
    return %arg0, %c0_i32, %c0_i32_0 : i32, i32, i32
  }
}

</mosaic_0001>

<llo_original>
// kernel: gpt_forward.4
$region0: #{gpt_forward.4}
  #allocation0 [shape = 'u32[]', space=smem, size = 0x4, offset = 0x4, fixed_abs, tag = 'smem constant byte address 0x4 - core index']
  #allocation1 [shape = 'u32[144,128]{1,0:T(1,128)}', space=vmem, size = 0x12000, scoped, tag = 'internal scratch']
  %s0 = inlined_call_operand.vmem [shape: s32[16,1], index: 0, kind: input, shape index: {}]
  %s1 = inlined_call_operand.vmem [shape: f32[128,32], index: 1, kind: input, shape index: {}]
  %s2 = inlined_call_operand.vmem [shape: f32[16,32], index: 2, kind: input, shape index: {}]
  %s3 = inlined_call_operand.vmem [shape: f32[16,32], index: 3, kind: output, shape index: {}]
  %s4 = sld [smem:[#allocation0]]
  $region22: #{gpt_forward.4} parent=0
    _
  %s6 = ssub.s32 1, %s4
  %s7 = scalar_select 0, %s6, %s4
  // Predicated region
  $region2: #{gpt_forward.4} parent=0 // pred_check
    _
  $region3: #{gpt_forward.4} parent=0 // pred_check_branch
    %9 = sbr.rel (0) target = $region5
  $region4: #{gpt_forward.4} parent=0 // pred_region
    _
  $region5: #{gpt_forward.4} parent=0 // pred_fallthru
    _
  // Predicated region
  $region6: #{gpt_forward.4} parent=0 // pred_check
    _
  $region7: #{gpt_forward.4} parent=0 // pred_check_branch
    %11 = sbr.rel (0) target = $region9
  $region8: #{gpt_forward.4} parent=0 // pred_region
    _
  $region9: #{gpt_forward.4} parent=0 // pred_fallthru
    _
  // Predicated region
  $region10: #{gpt_forward.4} parent=0 // pred_check
    _
  $region11: #{gpt_forward.4} parent=0 // pred_check_branch
    %13 = sbr.rel (0) target = $region13
  $region12: #{gpt_forward.4} parent=0 // pred_region
    _
  $region13: #{gpt_forward.4} parent=0 // pred_fallthru
    _
  %v14 = vlaneseq
  %v15 = vand.u32 %v14, 127
  %v16 = vld [vmem:[%s0] sm:$0xff]
  %v17 = vld [vmem:[%s0 + $0x8] sm:$0xff]
  %18 = vset.pattern.permute.xlu0 0
  %19 = vperm.xlu0 %18, %v16
  %v20 = vpop.permute.xlu0 %19
  %21 = vset.pattern.permute.xlu0 0
  %22 = vperm.xlu0 %21, %v17
  %v23 = vpop.permute.xlu0 %22
  %vm24 = vcmp.eq.s32.totalorder %v15, %v20
  %vm25 = vcmp.eq.s32.totalorder %v15, %v23
  %v26 = vsel %vm24, 1, 0
  %v27 = vsel %vm25, 1, 0
  %v28 = vcvt.s32.f32 %v26
  %v29 = vcvt.s32.f32 %v27
  %v30 = vld [vmem:[%s1] sm:$0xff]
  %v31 = vld [vmem:[%s1 + $0x8] sm:$0xff]
  %v32 = vld [vmem:[%s1 + $0x10] sm:$0xff]
  %v33 = vld [vmem:[%s1 + $0x18] sm:$0xff]
  %v34 = vld [vmem:[%s1 + $0x20] sm:$0xff]
  %v35 = vld [vmem:[%s1 + $0x28] sm:$0xff]
  %v36 = vld [vmem:[%s1 + $0x30] sm:$0xff]
  %v37 = vld [vmem:[%s1 + $0x38] sm:$0xff]
  %v38 = vld [vmem:[%s1 + $0x40] sm:$0xff]
  %v39 = vld [vmem:[%s1 + $0x48] sm:$0xff]
  %v40 = vld [vmem:[%s1 + $0x50] sm:$0xff]
  %v41 = vld [vmem:[%s1 + $0x58] sm:$0xff]
  %v42 = vld [vmem:[%s1 + $0x60] sm:$0xff]
  %v43 = vld [vmem:[%s1 + $0x68] sm:$0xff]
  %v44 = vld [vmem:[%s1 + $0x70] sm:$0xff]
  %v45 = vld [vmem:[%s1 + $0x78] sm:$0xff]
  %v46 = vld [vmem:[%s2] sm:$0xff]
  %v47 = vld [vmem:[%s2 + $0x8] sm:$0xff]
  %48 = vmatprep.subr.mxu0 0.0
  %49 = vmatpush1.msra.mxu0 %v30
  %50 = vmatprep.subr.mxu0 0.0
  %51 = vmatpush1.msra.mxu0 %v31
  %52 = vmatprep.subr.mxu0 0.0
  %53 = vmatpush1.msra.mxu0 %v32
  %54 = vmatprep.subr.mxu0 0.0
  %55 = vmatpush1.msra.mxu0 %v33
  %56 = vmatprep.subr.mxu0 0.0
  %57 = vmatpush1.msra.mxu0 %v34
  %58 = vmatprep.subr.mxu0 0.0
  %59 = vmatpush1.msra.mxu0 %v35
  %60 = vmatprep.subr.mxu0 0.0
  %61 = vmatpush1.msra.mxu0 %v36
  %62 = vmatprep.subr.mxu0 0.0
  %63 = vmatpush1.msra.mxu0 %v37
  %64 = vmatprep.subr.mxu0 0.0
  %65 = vmatpush1.msra.mxu0 %v38
  %66 = vmatprep.subr.mxu0 0.0
  %67 = vmatpush1.msra.mxu0 %v39
  %68 = vmatprep.subr.mxu0 0.0
  %69 = vmatpush1.msra.mxu0 %v40
  %70 = vmatprep.subr.mxu0 0.0
  %71 = vmatpush1.msra.mxu0 %v41
  %72 = vmatprep.subr.mxu0 0.0
  %73 = vmatpush1.msra.mxu0 %v42
  %74 = vmatprep.subr.mxu0 0.0
  %75 = vmatpush1.msra.mxu0 %v43
  %76 = vmatprep.subr.mxu0 0.0
  %77 = vmatpush1.msra.mxu0 %v44
  %78 = vmatprep.subr.mxu0 0.0
  %79 = vmatpush1.msra.mxu0 %v45
  %80 = vmatprep.subr.mxu0 0.0
  %81 = vmatpush1.msra.mxu0 0.0
  %82 = vmatprep.subr.mxu0 0.0
  %83 = vmatpush1.msra.mxu0 0.0
  %84 = vmatprep.subr.mxu0 0.0
  %85 = vmatpush1.msra.mxu0 0.0
  %86 = vmatprep.subr.mxu0 0.0
  %87 = vmatpush1.msra.mxu0 0.0
  %88 = vmatprep.subr.mxu0 0.0
  %89 = vmatpush1.msra.mxu0 0.0
  %90 = vmatprep.subr.mxu0 0.0
  %91 = vmatpush1.msra.mxu0 0.0
  %92 = vmatprep.subr.mxu0 0.0
  %93 = vmatpush1.msra.mxu0 0.0
  %94 = vmatprep.subr.mxu0 0.0
  %95 = vmatpush1.msra.mxu0 0.0
  %96 = vmatprep.subr.mxu0 0.0
  %97 = vmatpush1.msra.mxu0 0.0
  %98 = vmatprep.subr.mxu0 0.0
  %99 = vmatpush1.msra.mxu0 0.0
  %100 = vmatprep.subr.mxu0 0.0
  %101 = vmatpush1.msra.mxu0 0.0
  %102 = vmatprep.subr.mxu0 0.0
  %103 = vmatpush1.msra.mxu0 0.0
  %104 = vmatprep.subr.mxu0 0.0
  %105 = vmatpush1.msra.mxu0 0.0
  %106 = vmatprep.subr.mxu0 0.0
  %107 = vmatpush1.msra.mxu0 0.0
  %108 = vmatprep.subr.mxu0 0.0
  %109 = vmatpush1.msra.mxu0 0.0
  %110 = vmatprep.subr.mxu0 0.0
  %111 = vmatpush1.msra.mxu0 0.0
  %112 = vmatprep.mubr.f32.mxu0 0.0
  %113 = vmatmul.mubr.f32.gmra.mrb[0].mxu0 %v28
  %v114 = vpop.f32.mrb[0].mxu0
  %v115 = vadd.f32 %v46, %v114
  %v116 = vpop.f32.mrb[0].mxu0
  %117 = vmatprep.mubr.f32.mxu0 0.0
  %118 = vmatmul.mubr.f32.gmra.mrb[0].mxu0 %v29
  %v119 = vpop.f32.mrb[0].mxu0
  %v120 = vadd.f32 %v47, %v119
  %v121 = vpop.f32.mrb[0].mxu0
  %122 = vdwg.mxu0
  %vm123 = vcmask 261120
  %124 = vst.msk [vmem:[%s3] sm:$0xff] %vm123, %v115
  %125 = vst.msk [vmem:[%s3 + $0x8] sm:$0xff] %vm123, %v120
  // Predicated region
  $region14: #{gpt_forward.4} parent=0 // pred_check
    _
  $region15: #{gpt_forward.4} parent=0 // pred_check_branch
    %127 = sbr.rel (0) target = $region17
  $region16: #{gpt_forward.4} parent=0 // pred_region
    _
  $region17: #{gpt_forward.4} parent=0 // pred_fallthru
    _
  // Predicated region
  $region18: #{gpt_forward.4} parent=0 // pred_check
    _
  $region19: #{gpt_forward.4} parent=0 // pred_check_branch
    %129 = sbr.rel (0) target = $region21
  $region20: #{gpt_forward.4} parent=0 // pred_region
    _
  $region21: #{gpt_forward.4} parent=0 // pred_fallthru
    _

// kernel: gpt_forward.7
$region0: #{gpt_forward.7}
  #allocation0 [shape = 'u32[]', space=smem, size = 0x4, offset = 0x4, fixed_abs, tag = 'smem constant byte address 0x4 - core index']
  #allocation1 [shape = 'u32[144,128]{1,0:T(1,128)}', space=vmem, size = 0x12000, scoped, tag = 'internal scratch']
  %s0 = inlined_call_operand.vmem [shape: f32[2,8,32], index: 0, kind: input, shape index: {}]
  %s1 = inlined_call_operand.vmem [shape: f32[1,32], index: 1, kind: input, shape index: {}]
  %s2 = inlined_call_operand.vmem [shape: f32[1,32], index: 2, kind: input, shape index: {}]
  %s3 = inlined_call_operand.vmem [shape: f32[32,128], index: 3, kind: input, shape index: {}]
  %s4 = inlined_call_operand.hbm [shape: f32[2,8,128], index: 4, kind: output, shape index: {}]
  %s5 = sld [smem:[#allocation0]]
  $region49: #{gpt_forward.7} parent=0
    _
  %s7 = ssub.s32 1, %s5
  %s8 = scalar_select 0, %s7, %s5
  $region1: #{gpt_forward.7} parent=0
    #allocation2 [shape = 'u8[8192]{0}', space=vmem, size = 0x2000, scoped, tag = 'output window, operand 0']
    #allocation3 [shape = 's32[2]{0}', space=sflag, size = 0x8, scoped, tag = 'scoped memory for gpt_forward.7']
    %9 = vsyncpa [#allocation3], 0
    %s10 = scalar_lea.sflag [#allocation3], 1
    %11 = vsyncpa %s10, 0
    loop: start=0, step=1, limit=4
    $region2: #{gpt_forward.7} parent=1 // loop_pre_header
      _
    $region3: #{gpt_forward.7} parent=1 // loop_header
      %s13 = sphi 0, %s17
      %p14 = scmp.ge.s32.totalorder %s13, 4
      %s23 = sphi 0, %s25
      %s26 = sphi 0, %s23
      %s27 = sphi 0, %s26
      %s43 = sphi 0, %s27
      %s47 = sphi 0, %s47
      %s49 = sphi 0, %s47
      %s50 = sphi 0, %s49
      %s64 = sphi 0, %s50
      %s68 = sphi 0, %s68
      %s70 = sphi 0, %s68
      %s71 = sphi 0, %s70
      %s85 = sphi 0, %s71
      %s89 = sphi 0, %s89
      %s91 = sphi 0, %s89
      %s92 = sphi 0, %s91
      %s106 = sphi 0, %s92
      %s112 = sphi 0, %s114
      %s115 = sphi 0, %s112
      %s116 = sphi 0, %s115
      %s132 = sphi 0, %s116
    $region4: #{gpt_forward.7} parent=1 // loop_header_branch
      %16 = sbr.rel (%p14) target = $region8
    $region5: #{gpt_forward.7} parent=1 // loop_body
      %s18 = ssub.s32 %s13, 1
      %s19 = ssub.s32 %s13, 2
      %s20 = sadd.s32 %s13, 1
      %s21 = ssub.s32 %s13, %s20
      %p22 = scmp.eq.s32.totalorder %s21, 0
      %s24 = sadd.s32 %s23, 1
      %s25 = scalar_select %p22, %s23, %s24
      %p28 = pneg %p22
      %p29 = scmp.eq.s32.totalorder %s13, 1
      %p30 = por %p28, %p29
      %p31 = scmp.ne.s32.totalorder %s23, %s26
      %p32 = scmp.eq.s32.totalorder %s13, 0
      %p33 = por %p31, %p32
      %p34 = scmp.ne.s32.totalorder %s23, %s26
      %p35 = scmp.eq.s32.totalorder %s18, 1
      %p36 = por %p34, %p35
      %p37 = scmp.ne.s32.totalorder %s26, %s27
      %p38 = scmp.eq.s32.totalorder %s18, 0
      %p39 = por %p37, %p38
      %p40 = scmp.ne.s32.totalorder %s26, %s27
      %p41 = scmp.eq.s32.totalorder %s19, 1
      %p42 = por %p40, %p41
      %p44 = scmp.ne.s32.totalorder %s27, %s43
      %p45 = scmp.eq.s32.totalorder %s19, 0
      %p46 = por %p44, %p45
      %s48 = sadd.s32 %s47, 1
      %p51 = scmp.eq.s32.totalorder %s13, 1
      %p52 = scmp.ne.s32.totalorder %s47, %s49
      %p53 = scmp.eq.s32.totalorder %s13, 0
      %p54 = por %p52, %p53
      %p55 = scmp.ne.s32.totalorder %s47, %s49
      %p56 = scmp.eq.s32.totalorder %s18, 1
      %p57 = por %p55, %p56
      %p58 = scmp.ne.s32.totalorder %s49, %s50
      %p59 = scmp.eq.s32.totalorder %s18, 0
      %p60 = por %p58, %p59
      %p61 = scmp.ne.s32.totalorder %s49, %s50
      %p62 = scmp.eq.s32.totalorder %s19, 1
      %p63 = por %p61, %p62
      %p65 = scmp.ne.s32.totalorder %s50, %s64
      %p66 = scmp.eq.s32.totalorder %s19, 0
      %p67 = por %p65, %p66
      %s69 = sadd.s32 %s68, 1
      %p72 = scmp.eq.s32.totalorder %s13, 1
      %p73 = scmp.ne.s32.totalorder %s68, %s70
      %p74 = scmp.eq.s32.totalorder %s13, 0
      %p75 = por %p73, %p74
      %p76 = scmp.ne.s32.totalorder %s68, %s70
      %p77 = scmp.eq.s32.totalorder %s18, 1
      %p78 = por %p76, %p77
      %p79 = scmp.ne.s32.totalorder %s70, %s71
      %p80 = scmp.eq.s32.totalorder %s18, 0
      %p81 = por %p79, %p80
      %p82 = scmp.ne.s32.totalorder %s70, %s71
      %p83 = scmp.eq.s32.totalorder %s19, 1
      %p84 = por %p82, %p83
      %p86 = scmp.ne.s32.totalorder %s71, %s85
      %p87 = scmp.eq.s32.totalorder %s19, 0
      %p88 = por %p86, %p87
      %s90 = sadd.s32 %s89, 1
      %p93 = scmp.eq.s32.totalorder %s13, 1
      %p94 = scmp.ne.s32.totalorder %s89, %s91
      %p95 = scmp.eq.s32.totalorder %s13, 0
      %p96 = por %p94, %p95
      %p97 = scmp.ne.s32.totalorder %s89, %s91
      %p98 = scmp.eq.s32.totalorder %s18, 1
      %p99 = por %p97, %p98
      %p100 = scmp.ne.s32.totalorder %s91, %s92
      %p101 = scmp.eq.s32.totalorder %s18, 0
      %p102 = por %p100, %p101
      %p103 = scmp.ne.s32.totalorder %s91, %s92
      %p104 = scmp.eq.s32.totalorder %s19, 1
      %p105 = por %p103, %p104
      %p107 = scmp.ne.s32.totalorder %s92, %s106
      %p108 = scmp.eq.s32.totalorder %s19, 0
      %p109 = por %p107, %p108
      %s110 = ssub.s32 %s13, %s20
      %p111 = scmp.eq.s32.totalorder %s110, 0
      %s113 = sadd.s32 %s112, 1
      %s114 = scalar_select %p111, %s112, %s113
      %p117 = pneg %p111
      %p118 = scmp.eq.s32.totalorder %s13, 1
      %p119 = por %p117, %p118
      %p120 = scmp.ne.s32.totalorder %s112, %s115
      %p121 = scmp.eq.s32.totalorder %s13, 0
      %p122 = por %p120, %p121
      %p123 = scmp.ne.s32.totalorder %s112, %s115
      %p124 = scmp.eq.s32.totalorder %s18, 1
      %p125 = por %p123, %p124
      %p126 = scmp.ne.s32.totalorder %s115, %s116
      %p127 = scmp.eq.s32.totalorder %s18, 0
      %p128 = por %p126, %p127
      %p129 = scmp.ne.s32.totalorder %s115, %s116
      %p130 = scmp.eq.s32.totalorder %s19, 1
      %p131 = por %p129, %p130
      %p133 = scmp.ne.s32.totalorder %s116, %s132
      %p134 = scmp.eq.s32.totalorder %s19, 0
      %p135 = por %p133, %p134
      %p136 = scmp.le.s32.totalorder 1, %s13
      %p137 = scmp.lt.s32.totalorder %s13, 3
      %p138 = pnand %p136, %p137
      %p139 = pneg %p138
      // Predicated region
      $region9: #{gpt_forward.7} parent=5 // pred_check
        _
      $region10: #{gpt_forward.7} parent=5 // pred_check_branch
        %141 = sbr.rel (%p138) target = $region12
      $region11: #{gpt_forward.7} parent=5 // pred_region
        %s142 = ssub.s32 %s13, 1
        // Predicated region
        $region13: #{gpt_forward.7} parent=11 // pred_check
          %p143 = pneg %p60
        $region14: #{gpt_forward.7} parent=11 // pred_check_branch
          %145 = sbr.rel (%p143) target = $region16
        $region15: #{gpt_forward.7} parent=11 // pred_region
          _
        $region16: #{gpt_forward.7} parent=11 // pred_fallthru
          _
        // Predicated region
        $region17: #{gpt_forward.7} parent=11 // pred_check
          %p146 = pneg %p81
        $region18: #{gpt_forward.7} parent=11 // pred_check_branch
          %148 = sbr.rel (%p146) target = $region20
        $region19: #{gpt_forward.7} parent=11 // pred_region
          _
        $region20: #{gpt_forward.7} parent=11 // pred_fallthru
          _
        // Predicated region
        $region21: #{gpt_forward.7} parent=11 // pred_check
          %p149 = pneg %p102
        $region22: #{gpt_forward.7} parent=11 // pred_check_branch
          %151 = sbr.rel (%p149) target = $region24
        $region23: #{gpt_forward.7} parent=11 // pred_region
          _
        $region24: #{gpt_forward.7} parent=11 // pred_fallthru
          _
      $region12: #{gpt_forward.7} parent=5 // pred_fallthru
        _
      %p152 = scmp.lt.s32.totalorder %s13, 2
      // Predicated region
      $region25: #{gpt_forward.7} parent=5 // pred_check
        %p153 = pneg %p152
      $region26: #{gpt_forward.7} parent=5 // pred_check_branch
        %155 = sbr.rel (%p153) target = $region28
      $region27: #{gpt_forward.7} parent=5 // pred_region
        // Predicated region
        $region29: #{gpt_forward.7} parent=27 // pred_check
          %p156 = pneg %p33
        $region30: #{gpt_forward.7} parent=27 // pred_check_branch
          %158 = sbr.rel (%p156) target = $region32
        $region31: #{gpt_forward.7} parent=27 // pred_region
          %p159 = scmp.lt.s32.totalorder %s13, 1
          %s160 = scalar_select %p159, %s13, 1
          %s161 = smul.addr %s160, 8
          %s162 = scalar_lea.vmem %s0, %s161
        $region32: #{gpt_forward.7} parent=27 // pred_fallthru
          _
      $region28: #{gpt_forward.7} parent=5 // pred_fallthru
        _
      %p163 = scmp.le.s32.totalorder 1, %s13
      %p164 = scmp.lt.s32.totalorder %s13, 3
      %p165 = pnand %p163, %p164
      %p166 = pneg %p165
      // Predicated region
      $region33: #{gpt_forward.7} parent=5 // pred_check
        _
      $region34: #{gpt_forward.7} parent=5 // pred_check_branch
        %168 = sbr.rel (%p165) target = $region36
      $region35: #{gpt_forward.7} parent=5 // pred_region
        %s169 = ssub.s32 %s13, 1
        %p170 = scmp.lt.s32.totalorder %s18, 1
        %s171 = scalar_select %p170, %s18, 1
        %s172 = smul.addr %s171, 8
        %s173 = scalar_lea.vmem %s0, %s172
        %p174 = pneg %p39
        %p175 = pneg %p36
        %p176 = pneg %p60
        %p177 = pneg %p57
        %p178 = pneg %p81
        %p179 = pneg %p78
        %p180 = pneg %p102
        %p181 = pneg %p99
        %p182 = pneg %p128
        %p183 = pneg %p125
        %s184 = sand.u32 %s115, 1
        %s185 = scalar_lea.sflag [#allocation3], %s184
        %s186 = sand.u32 %s115, 1
        %s187 = smul.addr %s186, 8
        %s188 = scalar_lea.vmem [#allocation2], %s187
        %p189 = scmp.lt.s32.totalorder %s18, 1
        %s190 = scalar_select %p189, %s18, 1
        %s191 = smul.addr %s190, 8
        %s192 = scalar_lea.vmem %s0, %s191
        %v193 = vld [vmem:[%s192] sm:$0xff]
        %v194 = vld [vmem:[%s1] sm:$0x1]
        %v195 = vld [vmem:[%s2] sm:$0x1]
        %vm196 = vcmask 261120
        %v197 = vsel %vm196, %v193, 0.0
        %198 = vadd.xlane.f32.xlu0 %v197
        %v199 = vpop.xlane.xlu0 %198
        %v200 = vrcp.pop 32.0
        %v201 = vmul.f32 %v199, %v200
        %v202 = vsub.f32 %v193, %v201
        %v203 = vmul.f32 %v202, %v202
        %v204 = vsel %vm196, %v203, 0.0
        %205 = vadd.xlane.f32.xlu0 %v204
        %v206 = vpop.xlane.xlu0 %205
        %v207 = vmul.f32 %v206, %v200
        %v208 = vadd.f32 %v207, 1e-05
        %v209 = vrsqrt.pop %v208
        %v210 = vmul.f32 %v202, %v209
        %v212 = vlaneseq
        %v213 = vshrl.u32 %v212, 7
        %v214 = vsub.s32 0, %v213
        %v215 = vrot.slane %v194, %v214
        %v217 = vmul.f32 %v210, %v215
        %v219 = vlaneseq
        %v220 = vshrl.u32 %v219, 7
        %v221 = vsub.s32 0, %v220
        %v222 = vrot.slane %v195, %v221
        %v224 = vadd.f32 %v217, %v222
        %v225 = vld [vmem:[%s3] sm:$0xff]
        %v226 = vld [vmem:[%s3 + $0x8] sm:$0xff]
        %v227 = vld [vmem:[%s3 + $0x10] sm:$0xff]
        %v228 = vld [vmem:[%s3 + $0x18] sm:$0xff]
        %v230 = vsel %vm196, %v224, 0
        %232 = vmatprep.subr.mxu0 0.0
        %233 = vmatpush1.msra.mxu0 %v225
        %234 = vmatprep.subr.mxu0 0.0
        %235 = vmatpush1.msra.mxu0 %v226
        %236 = vmatprep.subr.mxu0 0.0
        %237 = vmatpush1.msra.mxu0 %v227
        %238 = vmatprep.subr.mxu0 0.0
        %239 = vmatpush1.msra.mxu0 %v228
        %240 = vmatprep.subr.mxu0 0.0
        %241 = vmatpush1.msra.mxu0 0.0
        %242 = vmatprep.subr.mxu0 0.0
        %243 = vmatpush1.msra.mxu0 0.0
        %244 = vmatprep.subr.mxu0 0.0
        %245 = vmatpush1.msra.mxu0 0.0
        %246 = vmatprep.subr.mxu0 0.0
        %247 = vmatpush1.msra.mxu0 0.0
        %248 = vmatprep.subr.mxu0 0.0
        %249 = vmatpush1.msra.mxu0 0.0
        %250 = vmatprep.subr.mxu0 0.0
        %251 = vmatpush1.msra.mxu0 0.0
        %252 = vmatprep.subr.mxu0 0.0
        %253 = vmatpush1.msra.mxu0 0.0
        %254 = vmatprep.subr.mxu0 0.0
        %255 = vmatpush1.msra.mxu0 0.0
        %256 = vmatprep.subr.mxu0 0.0
        %257 = vmatpush1.msra.mxu0 0.0
        %258 = vmatprep.subr.mxu0 0.0
        %259 = vmatpush1.msra.mxu0 0.0
        %260 = vmatprep.subr.mxu0 0.0
        %261 = vmatpush1.msra.mxu0 0.0
        %262 = vmatprep.subr.mxu0 0.0
        %263 = vmatpush1.msra.mxu0 0.0
        %264 = vmatprep.subr.mxu0 0.0
        %265 = vmatpush1.msra.mxu0 0.0
        %266 = vmatprep.subr.mxu0 0.0
        %267 = vmatpush1.msra.mxu0 0.0
        %268 = vmatprep.subr.mxu0 0.0
        %269 = vmatpush1.msra.mxu0 0.0
        %270 = vmatprep.subr.mxu0 0.0
        %271 = vmatpush1.msra.mxu0 0.0
        %272 = vmatprep.subr.mxu0 0.0
        %273 = vmatpush1.msra.mxu0 0.0
        %274 = vmatprep.subr.mxu0 0.0
        %275 = vmatpush1.msra.mxu0 0.0
        %276 = vmatprep.subr.mxu0 0.0
        %277 = vmatpush1.msra.mxu0 0.0
        %278 = vmatprep.subr.mxu0 0.0
        %279 = vmatpush1.msra.mxu0 0.0
        %280 = vmatprep.subr.mxu0 0.0
        %281 = vmatpush1.msra.mxu0 0.0
        %282 = vmatprep.subr.mxu0 0.0
        %283 = vmatpush1.msra.mxu0 0.0
        %284 = vmatprep.subr.mxu0 0.0
        %285 = vmatpush1.msra.mxu0 0.0
        %286 = vmatprep.subr.mxu0 0.0
        %287 = vmatpush1.msra.mxu0 0.0
        %288 = vmatprep.subr.mxu0 0.0
        %289 = vmatpush1.msra.mxu0 0.0
        %290 = vmatprep.subr.mxu0 0.0
        %291 = vmatpush1.msra.mxu0 0.0
        %292 = vmatprep.subr.mxu0 0.0
        %293 = vmatpush1.msra.mxu0 0.0
        %294 = vmatprep.subr.mxu0 0.0
        %295 = vmatpush1.msra.mxu0 0.0
        %296 = vmatprep.mubr.f32.mxu0 0.0
        %297 = vmatmul.mubr.f32.gmra.mrb[0].mxu0 %v230
        %v298 = vpop.f32.mrb[0].mxu0
        %v299 = vadd.f32 0.0, %v298
        %v300 = vpop.f32.mrb[0].mxu0
        %301 = vdwg.mxu0
        %302 = vst [vmem:[%s188] sm:$0xff] %v299
        %s303 = sand.u32 %s115, 1
        %s304 = scalar_lea.sflag [#allocation3], %s303
        %s305 = sand.u32 %s115, 1
        %s306 = smul.addr %s305, 8
        %s307 = scalar_lea.vmem [#allocation2], %s306
        // Predicated region
        $region37: #{gpt_forward.7} parent=35 // pred_check
          %p308 = pneg %p125
        $region38: #{gpt_forward.7} parent=35 // pred_check_branch
          %310 = sbr.rel (%p308) target = $region40
        $region39: #{gpt_forward.7} parent=35 // pred_region
          %s312 = ssub.s32 128, 128
          %313 = vsyncadd %s304, %s312
          %s314 = smul.addr %s18, 128
          %s315 = scalar_lea.hbm %s4, %s314
          %s317 = sshll.u32 %s307, 4
          %s318 = int_to_ptr.vmem [resolvable:$true] %s317
          %320 = dma.vmem_to_hbm [thread:$0]  %s318, 128, %s315, %s304
        $region40: #{gpt_forward.7} parent=35 // pred_fallthru
          _
      $region36: #{gpt_forward.7} parent=5 // pred_fallthru
        _
      %p321 = scmp.le.s32.totalorder 2, %s13
      // Predicated region
      $region41: #{gpt_forward.7} parent=5 // pred_check
        %p322 = pneg %p321
      $region42: #{gpt_forward.7} parent=5 // pred_check_branch
        %324 = sbr.rel (%p322) target = $region44
      $region43: #{gpt_forward.7} parent=5 // pred_region
        %s325 = ssub.s32 %s13, 2
        // Predicated region
        $region45: #{gpt_forward.7} parent=43 // pred_check
          %p326 = pneg %p131
        $region46: #{gpt_forward.7} parent=43 // pred_check_branch
          %328 = sbr.rel (%p326) target = $region48
        $region47: #{gpt_forward.7} parent=43 // pred_region
          %s329 = sand.u32 %s116, 1
          %s330 = scalar_lea.sflag [#allocation3], %s329
          %s331 = sand.u32 %s116, 1
          %s332 = smul.addr %s331, 8
          %s333 = scalar_lea.vmem [#allocation2], %s332
          %334 = dma.done %s330, 128
        $region48: #{gpt_forward.7} parent=43 // pred_fallthru
          _
      $region44: #{gpt_forward.7} parent=5 // pred_fallthru
        _
    $region6: #{gpt_forward.7} parent=1 // loop_footer
      %s17 = sadd.s32 1, %s13
    $region7: #{gpt_forward.7} parent=1 // loop_footer_branch
      %12 = sbr.rel target = $region3
    $region8: #{gpt_forward.7} parent=1 // loop_exit
      _
    %335 = vsyncpa [#allocation3], 1
    %s336 = scalar_lea.sflag [#allocation3], 1
    %337 = vsyncpa %s336, 1

// kernel: gpt_forward.5
$region0: #{gpt_forward.5}
  #allocation0 [shape = 'u32[]', space=smem, size = 0x4, offset = 0x4, fixed_abs, tag = 'smem constant byte address 0x4 - core index']
  #allocation1 [shape = 'u32[144,128]{1,0:T(1,128)}', space=vmem, size = 0x12000, scoped, tag = 'internal scratch']
  %s0 = inlined_call_operand.vmem [shape: f32[2,8,32], index: 0, kind: input, shape index: {}]
  %s1 = inlined_call_operand.vmem [shape: f32[1,32], index: 1, kind: input, shape index: {}]
  %s2 = inlined_call_operand.vmem [shape: f32[1,32], index: 2, kind: input, shape index: {}]
  %s3 = inlined_call_operand.vmem [shape: f32[4,32,384], index: 3, kind: input, shape index: {}]
  %s4 = inlined_call_operand.vmem [shape: f32[4,1,384], index: 4, kind: input, shape index: {}]
  %s5 = inlined_call_operand.vmem [shape: f32[4,128,32], index: 5, kind: input, shape index: {}]
  %s6 = inlined_call_operand.vmem [shape: f32[1,32], index: 6, kind: input, shape index: {}]
  %s7 = inlined_call_operand.vmem [shape: f32[1,32], index: 7, kind: input, shape index: {}]
  %s8 = inlined_call_operand.vmem [shape: f32[1,32], index: 8, kind: input, shape index: {}]
  %s9 = inlined_call_operand.vmem [shape: f32[32,128], index: 9, kind: input, shape index: {}]
  %s10 = inlined_call_operand.vmem [shape: f32[1,128], index: 10, kind: input, shape index: {}]
  %s11 = inlined_call_operand.vmem [shape: f32[128,32], index: 11, kind: input, shape index: {}]
  %s12 = inlined_call_operand.vmem [shape: f32[1,32], index: 12, kind: input, shape index: {}]
  %s13 = inlined_call_operand.vmem [shape: f32[2,8,32], index: 13, kind: output, shape index: {}]
  %s14 = sld [smem:[#allocation0]]
  $region85: #{gpt_forward.5} parent=0
    _
  %s16 = ssub.s32 1, %s14
  %s17 = scalar_select 0, %s16, %s14
  loop: start=0, step=1, limit=4
  $region2: #{gpt_forward.5} parent=0 // loop_pre_header
    _
  $region3: #{gpt_forward.5} parent=0 // loop_header
    %s19 = sphi 0, %s23
    %p20 = scmp.ge.s32.totalorder %s19, 4
    %s29 = sphi 0, %s31
    %s32 = sphi 0, %s29
    %s33 = sphi 0, %s32
    %s49 = sphi 0, %s33
    %s53 = sphi 0, %s53
    %s55 = sphi 0, %s53
    %s56 = sphi 0, %s55
    %s70 = sphi 0, %s56
    %s74 = sphi 0, %s74
    %s76 = sphi 0, %s74
    %s77 = sphi 0, %s76
    %s91 = sphi 0, %s77
    %s95 = sphi 0, %s95
    %s97 = sphi 0, %s95
    %s98 = sphi 0, %s97
    %s112 = sphi 0, %s98
    %s116 = sphi 0, %s116
    %s118 = sphi 0, %s116
    %s119 = sphi 0, %s118
    %s133 = sphi 0, %s119
    %s137 = sphi 0, %s137
    %s139 = sphi 0, %s137
    %s140 = sphi 0, %s139
    %s154 = sphi 0, %s140
    %s158 = sphi 0, %s158
    %s160 = sphi 0, %s158
    %s161 = sphi 0, %s160
    %s175 = sphi 0, %s161
    %s179 = sphi 0, %s179
    %s181 = sphi 0, %s179
    %s182 = sphi 0, %s181
    %s196 = sphi 0, %s182
    %s200 = sphi 0, %s200
    %s202 = sphi 0, %s200
    %s203 = sphi 0, %s202
    %s217 = sphi 0, %s203
    %s221 = sphi 0, %s221
    %s223 = sphi 0, %s221
    %s224 = sphi 0, %s223
    %s238 = sphi 0, %s224
    %s242 = sphi 0, %s242
    %s244 = sphi 0, %s242
    %s245 = sphi 0, %s244
    %s259 = sphi 0, %s245
    %s263 = sphi 0, %s263
    %s265 = sphi 0, %s263
    %s266 = sphi 0, %s265
    %s280 = sphi 0, %s266
    %s284 = sphi 0, %s284
    %s286 = sphi 0, %s284
    %s287 = sphi 0, %s286
    %s301 = sphi 0, %s287
    %s307 = sphi 0, %s309
    %s310 = sphi 0, %s307
    %s311 = sphi 0, %s310
    %s327 = sphi 0, %s311
  $region4: #{gpt_forward.5} parent=0 // loop_header_branch
    %22 = sbr.rel (%p20) target = $region8
  $region5: #{gpt_forward.5} parent=0 // loop_body
    %s24 = ssub.s32 %s19, 1
    %s25 = ssub.s32 %s19, 2
    %s26 = sadd.s32 %s19, 1
    %s27 = ssub.s32 %s19, %s26
    %p28 = scmp.eq.s32.totalorder %s27, 0
    %s30 = sadd.s32 %s29, 1
    %s31 = scalar_select %p28, %s29, %s30
    %p34 = pneg %p28
    %p35 = scmp.eq.s32.totalorder %s19, 1
    %p36 = por %p34, %p35
    %p37 = scmp.ne.s32.totalorder %s29, %s32
    %p38 = scmp.eq.s32.totalorder %s19, 0
    %p39 = por %p37, %p38
    %p40 = scmp.ne.s32.totalorder %s29, %s32
    %p41 = scmp.eq.s32.totalorder %s24, 1
    %p42 = por %p40, %p41
    %p43 = scmp.ne.s32.totalorder %s32, %s33
    %p44 = scmp.eq.s32.totalorder %s24, 0
    %p45 = por %p43, %p44
    %p46 = scmp.ne.s32.totalorder %s32, %s33
    %p47 = scmp.eq.s32.totalorder %s25, 1
    %p48 = por %p46, %p47
    %p50 = scmp.ne.s32.totalorder %s33, %s49
    %p51 = scmp.eq.s32.totalorder %s25, 0
    %p52 = por %p50, %p51
    %s54 = sadd.s32 %s53, 1
    %p57 = scmp.eq.s32.totalorder %s19, 1
    %p58 = scmp.ne.s32.totalorder %s53, %s55
    %p59 = scmp.eq.s32.totalorder %s19, 0
    %p60 = por %p58, %p59
    %p61 = scmp.ne.s32.totalorder %s53, %s55
    %p62 = scmp.eq.s32.totalorder %s24, 1
    %p63 = por %p61, %p62
    %p64 = scmp.ne.s32.totalorder %s55, %s56
    %p65 = scmp.eq.s32.totalorder %s24, 0
    %p66 = por %p64, %p65
    %p67 = scmp.ne.s32.totalorder %s55, %s56
    %p68 = scmp.eq.s32.totalorder %s25, 1
    %p69 = por %p67, %p68
    %p71 = scmp.ne.s32.totalorder %s56, %s70
    %p72 = scmp.eq.s32.totalorder %s25, 0
    %p73 = por %p71, %p72
    %s75 = sadd.s32 %s74, 1
    %p78 = scmp.eq.s32.totalorder %s19, 1
    %p79 = scmp.ne.s32.totalorder %s74, %s76
    %p80 = scmp.eq.s32.totalorder %s19, 0
    %p81 = por %p79, %p80
    %p82 = scmp.ne.s32.totalorder %s74, %s76
    %p83 = scmp.eq.s32.totalorder %s24, 1
    %p84 = por %p82, %p83
    %p85 = scmp.ne.s32.totalorder %s76, %s77
    %p86 = scmp.eq.s32.totalorder %s24, 0
    %p87 = por %p85, %p86
    %p88 = scmp.ne.s32.totalorder %s76, %s77
    %p89 = scmp.eq.s32.totalorder %s25, 1
    %p90 = por %p88, %p89
    %p92 = scmp.ne.s32.totalorder %s77, %s91
    %p93 = scmp.eq.s32.totalorder %s25, 0
    %p94 = por %p92, %p93
    %s96 = sadd.s32 %s95, 1
    %p99 = scmp.eq.s32.totalorder %s19, 1
    %p100 = scmp.ne.s32.totalorder %s95, %s97
    %p101 = scmp.eq.s32.totalorder %s19, 0
    %p102 = por %p100, %p101
    %p103 = scmp.ne.s32.totalorder %s95, %s97
    %p104 = scmp.eq.s32.totalorder %s24, 1
    %p105 = por %p103, %p104
    %p106 = scmp.ne.s32.totalorder %s97, %s98
    %p107 = scmp.eq.s32.totalorder %s24, 0
    %p108 = por %p106, %p107
    %p109 = scmp.ne.s32.totalorder %s97, %s98
    %p110 = scmp.eq.s32.totalorder %s25, 1
    %p111 = por %p109, %p110
    %p113 = scmp.ne.s32.totalorder %s98, %s112
    %p114 = scmp.eq.s32.totalorder %s25, 0
    %p115 = por %p113, %p114
    %s117 = sadd.s32 %s116, 1
    %p120 = scmp.eq.s32.totalorder %s19, 1
    %p121 = scmp.ne.s32.totalorder %s116, %s118
    %p122 = scmp.eq.s32.totalorder %s19, 0
    %p123 = por %p121, %p122
    %p124 = scmp.ne.s32.totalorder %s116, %s118
    %p125 = scmp.eq.s32.totalorder %s24, 1
    %p126 = por %p124, %p125
    %p127 = scmp.ne.s32.totalorder %s118, %s119
    %p128 = scmp.eq.s32.totalorder %s24, 0
    %p129 = por %p127, %p128
    %p130 = scmp.ne.s32.totalorder %s118, %s119
    %p131 = scmp.eq.s32.totalorder %s25, 1
    %p132 = por %p130, %p131
    %p134 = scmp.ne.s32.totalorder %s119, %s133
    %p135 = scmp.eq.s32.totalorder %s25, 0
    %p136 = por %p134, %p135
    %s138 = sadd.s32 %s137, 1
    %p141 = scmp.eq.s32.totalorder %s19, 1
    %p142 = scmp.ne.s32.totalorder %s137, %s139
    %p143 = scmp.eq.s32.totalorder %s19, 0
    %p144 = por %p142, %p143
    %p145 = scmp.ne.s32.totalorder %s137, %s139
    %p146 = scmp.eq.s32.totalorder %s24, 1
    %p147 = por %p145, %p146
    %p148 = scmp.ne.s32.totalorder %s139, %s140
    %p149 = scmp.eq.s32.totalorder %s24, 0
    %p150 = por %p148, %p149
    %p151 = scmp.ne.s32.totalorder %s139, %s140
    %p152 = scmp.eq.s32.totalorder %s25, 1
    %p153 = por %p151, %p152
    %p155 = scmp.ne.s32.totalorder %s140, %s154
    %p156 = scmp.eq.s32.totalorder %s25, 0
    %p157 = por %p155, %p156
    %s159 = sadd.s32 %s158, 1
    %p162 = scmp.eq.s32.totalorder %s19, 1
    %p163 = scmp.ne.s32.totalorder %s158, %s160
    %p164 = scmp.eq.s32.totalorder %s19, 0
    %p165 = por %p163, %p164
    %p166 = scmp.ne.s32.totalorder %s158, %s160
    %p167 = scmp.eq.s32.totalorder %s24, 1
    %p168 = por %p166, %p167
    %p169 = scmp.ne.s32.totalorder %s160, %s161
    %p170 = scmp.eq.s32.totalorder %s24, 0
    %p171 = por %p169, %p170
    %p172 = scmp.ne.s32.totalorder %s160, %s161
    %p173 = scmp.eq.s32.totalorder %s25, 1
    %p174 = por %p172, %p173
    %p176 = scmp.ne.s32.totalorder %s161, %s175
    %p177 = scmp.eq.s32.totalorder %s25, 0
    %p178 = por %p176, %p177
    %s180 = sadd.s32 %s179, 1
    %p183 = scmp.eq.s32.totalorder %s19, 1
    %p184 = scmp.ne.s32.totalorder %s179, %s181
    %p185 = scmp.eq.s32.totalorder %s19, 0
    %p186 = por %p184, %p185
    %p187 = scmp.ne.s32.totalorder %s179, %s181
    %p188 = scmp.eq.s32.totalorder %s24, 1
    %p189 = por %p187, %p188
    %p190 = scmp.ne.s32.totalorder %s181, %s182
    %p191 = scmp.eq.s32.totalorder %s24, 0
    %p192 = por %p190, %p191
    %p193 = scmp.ne.s32.totalorder %s181, %s182
    %p194 = scmp.eq.s32.totalorder %s25, 1
    %p195 = por %p193, %p194
    %p197 = scmp.ne.s32.totalorder %s182, %s196
    %p198 = scmp.eq.s32.totalorder %s25, 0
    %p199 = por %p197, %p198
    %s201 = sadd.s32 %s200, 1
    %p204 = scmp.eq.s32.totalorder %s19, 1
    %p205 = scmp.ne.s32.totalorder %s200, %s202
    %p206 = scmp.eq.s32.totalorder %s19, 0
    %p207 = por %p205, %p206
    %p208 = scmp.ne.s32.totalorder %s200, %s202
    %p209 = scmp.eq.s32.totalorder %s24, 1
    %p210 = por %p208, %p209
    %p211 = scmp.ne.s32.totalorder %s202, %s203
    %p212 = scmp.eq.s32.totalorder %s24, 0
    %p213 = por %p211, %p212
    %p214 = scmp.ne.s32.totalorder %s202, %s203
    %p215 = scmp.eq.s32.totalorder %s25, 1
    %p216 = por %p214, %p215
    %p218 = scmp.ne.s32.totalorder %s203, %s217
    %p219 = scmp.eq.s32.totalorder %s25, 0
    %p220 = por %p218, %p219
    %s222 = sadd.s32 %s221, 1
    %p225 = scmp.eq.s32.totalorder %s19, 1
    %p226 = scmp.ne.s32.totalorder %s221, %s223
    %p227 = scmp.eq.s32.totalorder %s19, 0
    %p228 = por %p226, %p227
    %p229 = scmp.ne.s32.totalorder %s221, %s223
    %p230 = scmp.eq.s32.totalorder %s24, 1
    %p231 = por %p229, %p230
    %p232 = scmp.ne.s32.totalorder %s223, %s224
    %p233 = scmp.eq.s32.totalorder %s24, 0
    %p234 = por %p232, %p233
    %p235 = scmp.ne.s32.totalorder %s223, %s224
    %p236 = scmp.eq.s32.totalorder %s25, 1
    %p237 = por %p235, %p236
    %p239 = scmp.ne.s32.totalorder %s224, %s238
    %p240 = scmp.eq.s32.totalorder %s25, 0
    %p241 = por %p239, %p240
    %s243 = sadd.s32 %s242, 1
    %p246 = scmp.eq.s32.totalorder %s19, 1
    %p247 = scmp.ne.s32.totalorder %s242, %s244
    %p248 = scmp.eq.s32.totalorder %s19, 0
    %p249 = por %p247, %p248
    %p250 = scmp.ne.s32.totalorder %s242, %s244
    %p251 = scmp.eq.s32.totalorder %s24, 1
    %p252 = por %p250, %p251
    %p253 = scmp.ne.s32.totalorder %s244, %s245
    %p254 = scmp.eq.s32.totalorder %s24, 0
    %p255 = por %p253, %p254
    %p256 = scmp.ne.s32.totalorder %s244, %s245
    %p257 = scmp.eq.s32.totalorder %s25, 1
    %p258 = por %p256, %p257
    %p260 = scmp.ne.s32.totalorder %s245, %s259
    %p261 = scmp.eq.s32.totalorder %s25, 0
    %p262 = por %p260, %p261
    %s264 = sadd.s32 %s263, 1
    %p267 = scmp.eq.s32.totalorder %s19, 1
    %p268 = scmp.ne.s32.totalorder %s263, %s265
    %p269 = scmp.eq.s32.totalorder %s19, 0
    %p270 = por %p268, %p269
    %p271 = scmp.ne.s32.totalorder %s263, %s265
    %p272 = scmp.eq.s32.totalorder %s24, 1
    %p273 = por %p271, %p272
    %p274 = scmp.ne.s32.totalorder %s265, %s266
    %p275 = scmp.eq.s32.totalorder %s24, 0
    %p276 = por %p274, %p275
    %p277 = scmp.ne.s32.totalorder %s265, %s266
    %p278 = scmp.eq.s32.totalorder %s25, 1
    %p279 = por %p277, %p278
    %p281 = scmp.ne.s32.totalorder %s266, %s280
    %p282 = scmp.eq.s32.totalorder %s25, 0
    %p283 = por %p281, %p282
    %s285 = sadd.s32 %s284, 1
    %p288 = scmp.eq.s32.totalorder %s19, 1
    %p289 = scmp.ne.s32.totalorder %s284, %s286
    %p290 = scmp.eq.s32.totalorder %s19, 0
    %p291 = por %p289, %p290
    %p292 = scmp.ne.s32.totalorder %s284, %s286
    %p293 = scmp.eq.s32.totalorder %s24, 1
    %p294 = por %p292, %p293
    %p295 = scmp.ne.s32.totalorder %s286, %s287
    %p296 = scmp.eq.s32.totalorder %s24, 0
    %p297 = por %p295, %p296
    %p298 = scmp.ne.s32.totalorder %s286, %s287
    %p299 = scmp.eq.s32.totalorder %s25, 1
    %p300 = por %p298, %p299
    %p302 = scmp.ne.s32.totalorder %s287, %s301
    %p303 = scmp.eq.s32.totalorder %s25, 0
    %p304 = por %p302, %p303
    %s305 = ssub.s32 %s19, %s26
    %p306 = scmp.eq.s32.totalorder %s305, 0
    %s308 = sadd.s32 %s307, 1
    %s309 = scalar_select %p306, %s307, %s308
    %p312 = pneg %p306
    %p313 = scmp.eq.s32.totalorder %s19, 1
    %p314 = por %p312, %p313
    %p315 = scmp.ne.s32.totalorder %s307, %s310
    %p316 = scmp.eq.s32.totalorder %s19, 0
    %p317 = por %p315, %p316
    %p318 = scmp.ne.s32.totalorder %s307, %s310
    %p319 = scmp.eq.s32.totalorder %s24, 1
    %p320 = por %p318, %p319
    %p321 = scmp.ne.s32.totalorder %s310, %s311
    %p322 = scmp.eq.s32.totalorder %s24, 0
    %p323 = por %p321, %p322
    %p324 = scmp.ne.s32.totalorder %s310, %s311
    %p325 = scmp.eq.s32.totalorder %s25, 1
    %p326 = por %p324, %p325
    %p328 = scmp.ne.s32.totalorder %s311, %s327
    %p329 = scmp.eq.s32.totalorder %s25, 0
    %p330 = por %p328, %p329
    %p331 = scmp.le.s32.totalorder 1, %s19
    %p332 = scmp.lt.s32.totalorder %s19, 3
    %p333 = pnand %p331, %p332
    %p334 = pneg %p333
    // Predicated region
    $region9: #{gpt_forward.5} parent=5 // pred_check
      _
    $region10: #{gpt_forward.5} parent=5 // pred_check_branch
      %336 = sbr.rel (%p333) target = $region12
    $region11: #{gpt_forward.5} parent=5 // pred_region
      %s337 = ssub.s32 %s19, 1
      // Predicated region
      $region13: #{gpt_forward.5} parent=11 // pred_check
        %p338 = pneg %p66
      $region14: #{gpt_forward.5} parent=11 // pred_check_branch
        %340 = sbr.rel (%p338) target = $region16
      $region15: #{gpt_forward.5} parent=11 // pred_region
        _
      $region16: #{gpt_forward.5} parent=11 // pred_fallthru
        _
      // Predicated region
      $region17: #{gpt_forward.5} parent=11 // pred_check
        %p341 = pneg %p87
      $region18: #{gpt_forward.5} parent=11 // pred_check_branch
        %343 = sbr.rel (%p341) target = $region20
      $region19: #{gpt_forward.5} parent=11 // pred_region
        _
      $region20: #{gpt_forward.5} parent=11 // pred_fallthru
        _
      // Predicated region
      $region21: #{gpt_forward.5} parent=11 // pred_check
        %p344 = pneg %p108
      $region22: #{gpt_forward.5} parent=11 // pred_check_branch
        %346 = sbr.rel (%p344) target = $region24
      $region23: #{gpt_forward.5} parent=11 // pred_region
        _
      $region24: #{gpt_forward.5} parent=11 // pred_fallthru
        _
      // Predicated region
      $region25: #{gpt_forward.5} parent=11 // pred_check
        %p347 = pneg %p129
      $region26: #{gpt_forward.5} parent=11 // pred_check_branch
        %349 = sbr.rel (%p347) target = $region28
      $region27: #{gpt_forward.5} parent=11 // pred_region
        _
      $region28: #{gpt_forward.5} parent=11 // pred_fallthru
        _
      // Predicated region
      $region29: #{gpt_forward.5} parent=11 // pred_check
        %p350 = pneg %p150
      $region30: #{gpt_forward.5} parent=11 // pred_check_branch
        %352 = sbr.rel (%p350) target = $region32
      $region31: #{gpt_forward.5} parent=11 // pred_region
        _
      $region32: #{gpt_forward.5} parent=11 // pred_fallthru
        _
      // Predicated region
      $region33: #{gpt_forward.5} parent=11 // pred_check
        %p353 = pneg %p171
      $region34: #{gpt_forward.5} parent=11 // pred_check_branch
        %355 = sbr.rel (%p353) target = $region36
      $region35: #{gpt_forward.5} parent=11 // pred_region
        _
      $region36: #{gpt_forward.5} parent=11 // pred_fallthru
        _
      // Predicated region
      $region37: #{gpt_forward.5} parent=11 // pred_check
        %p356 = pneg %p192
      $region38: #{gpt_forward.5} parent=11 // pred_check_branch
        %358 = sbr.rel (%p356) target = $region40
      $region39: #{gpt_forward.5} parent=11 // pred_region
        _
      $region40: #{gpt_forward.5} parent=11 // pred_fallthru
        _
      // Predicated region
      $region41: #{gpt_forward.5} parent=11 // pred_check
        %p359 = pneg %p213
      $region42: #{gpt_forward.5} parent=11 // pred_check_branch
        %361 = sbr.rel (%p359) target = $region44
      $region43: #{gpt_forward.5} parent=11 // pred_region
        _
      $region44: #{gpt_forward.5} parent=11 // pred_fallthru
        _
      // Predicated region
      $region45: #{gpt_forward.5} parent=11 // pred_check
        %p362 = pneg %p234
      $region46: #{gpt_forward.5} parent=11 // pred_check_branch
        %364 = sbr.rel (%p362) target = $region48
      $region47: #{gpt_forward.5} parent=11 // pred_region
        _
      $region48: #{gpt_forward.5} parent=11 // pred_fallthru
        _
      // Predicated region
      $region49: #{gpt_forward.5} parent=11 // pred_check
        %p365 = pneg %p255
      $region50: #{gpt_forward.5} parent=11 // pred_check_branch
        %367 = sbr.rel (%p365) target = $region52
      $region51: #{gpt_forward.5} parent=11 // pred_region
        _
      $region52: #{gpt_forward.5} parent=11 // pred_fallthru
        _
      // Predicated region
      $region53: #{gpt_forward.5} parent=11 // pred_check
        %p368 = pneg %p276
      $region54: #{gpt_forward.5} parent=11 // pred_check_branch
        %370 = sbr.rel (%p368) target = $region56
      $region55: #{gpt_forward.5} parent=11 // pred_region
        _
      $region56: #{gpt_forward.5} parent=11 // pred_fallthru
        _
      // Predicated region
      $region57: #{gpt_forward.5} parent=11 // pred_check
        %p371 = pneg %p297
      $region58: #{gpt_forward.5} parent=11 // pred_check_branch
        %373 = sbr.rel (%p371) target = $region60
      $region59: #{gpt_forward.5} parent=11 // pred_region
        _
      $region60: #{gpt_forward.5} parent=11 // pred_fallthru
        _
    $region12: #{gpt_forward.5} parent=5 // pred_fallthru
      _
    %p374 = scmp.lt.s32.totalorder %s19, 2
    // Predicated region
    $region61: #{gpt_forward.5} parent=5 // pred_check
      %p375 = pneg %p374
    $region62: #{gpt_forward.5} parent=5 // pred_check_branch
      %377 = sbr.rel (%p375) target = $region64
    $region63: #{gpt_forward.5} parent=5 // pred_region
      // Predicated region
      $region65: #{gpt_forward.5} parent=63 // pred_check
        %p378 = pneg %p39
      $region66: #{gpt_forward.5} parent=63 // pred_check_branch
        %380 = sbr.rel (%p378) target = $region68
      $region67: #{gpt_forward.5} parent=63 // pred_region
        %p381 = scmp.lt.s32.totalorder %s19, 1
        %s382 = scalar_select %p381, %s19, 1
        %s383 = smul.addr %s382, 8
        %s384 = scalar_lea.vmem %s0, %s383
      $region68: #{gpt_forward.5} parent=63 // pred_fallthru
        _
    $region64: #{gpt_forward.5} parent=5 // pred_fallthru
      _
    %p385 = scmp.le.s32.totalorder 1, %s19
    %p386 = scmp.lt.s32.totalorder %s19, 3
    %p387 = pnand %p385, %p386
    %p388 = pneg %p387
    // Predicated region
    $region69: #{gpt_forward.5} parent=5 // pred_check
      _
    $region70: #{gpt_forward.5} parent=5 // pred_check_branch
      %390 = sbr.rel (%p387) target = $region72
    $region71: #{gpt_forward.5} parent=5 // pred_region
      %s391 = ssub.s32 %s19, 1
      %p392 = scmp.lt.s32.totalorder %s24, 1
      %s393 = scalar_select %p392, %s24, 1
      %s394 = smul.addr %s393, 8
      %s395 = scalar_lea.vmem %s0, %s394
      %p396 = pneg %p45
      %p397 = pneg %p42
      %p398 = pneg %p66
      %p399 = pneg %p63
      %p400 = pneg %p87
      %p401 = pneg %p84
      %p402 = pneg %p108
      %p403 = pneg %p105
      %p404 = pneg %p129
      %p405 = pneg %p126
      %p406 = pneg %p150
      %p407 = pneg %p147
      %p408 = pneg %p171
      %p409 = pneg %p168
      %p410 = pneg %p192
      %p411 = pneg %p189
      %p412 = pneg %p213
      %p413 = pneg %p210
      %p414 = pneg %p234
      %p415 = pneg %p231
      %p416 = pneg %p255
      %p417 = pneg %p252
      %p418 = pneg %p276
      %p419 = pneg %p273
      %p420 = pneg %p297
      %p421 = pneg %p294
      %p422 = pneg %p323
      %p423 = pneg %p320
      %p424 = scmp.lt.s32.totalorder %s24, 1
      %s425 = scalar_select %p424, %s24, 1
      %s426 = smul.addr %s425, 8
      %s427 = scalar_lea.vmem %s13, %s426
      %p428 = scmp.lt.s32.totalorder %s24, 1
      %s429 = scalar_select %p428, %s24, 1
      %s430 = smul.addr %s429, 8
      %s431 = scalar_lea.vmem %s0, %s430
      %p432 = scmp.lt.s32.totalorder %s24, 1
      %s433 = scalar_select %p432, %s24, 1
      %s434 = smul.addr %s433, 8
      %s435 = scalar_lea.vmem %s13, %s434
      %v436 = vld [vmem:[%s431] sm:$0xff]
      %v437 = vld [vmem:[%s1] sm:$0x1]
      %v438 = vld [vmem:[%s2] sm:$0x1]
      %vm439 = vcmask 261120
      %v440 = vsel %vm439, %v436, 0.0
      %441 = vadd.xlane.f32.xlu0 %v440
      %v442 = vpop.xlane.xlu0 %441
      %v443 = vrcp.pop 32.0
      %v444 = vmul.f32 %v442, %v443
      %v445 = vsub.f32 %v436, %v444
      %v446 = vmul.f32 %v445, %v445
      %v447 = vsel %vm439, %v446, 0.0
      %448 = vadd.xlane.f32.xlu0 %v447
      %v449 = vpop.xlane.xlu0 %448
      %v450 = vmul.f32 %v449, %v443
      %v451 = vadd.f32 %v450, 1e-05
      %v452 = vrsqrt.pop %v451
      %v453 = vmul.f32 %v445, %v452
      %v455 = vlaneseq
      %v456 = vshrl.u32 %v455, 7
      %v457 = vsub.s32 0, %v456
      %v458 = vrot.slane %v437, %v457
      %v460 = vmul.f32 %v453, %v458
      %v462 = vlaneseq
      %v463 = vshrl.u32 %v462, 7
      %v464 = vsub.s32 0, %v463
      %v465 = vrot.slane %v438, %v464
      %v467 = vadd.f32 %v460, %v465
      %v468 = vld [vmem:[%s3] sm:$0xff]
      %v469 = vld [vmem:[%s3 + $0x8] sm:$0xff]
      %v470 = vld [vmem:[%s3 + $0x10] sm:$0xff]
      %v471 = vld [vmem:[%s3 + $0x18] sm:$0xff]
      %v472 = vld [vmem:[%s3 + $0x20] sm:$0xff]
      %v473 = vld [vmem:[%s3 + $0x28] sm:$0xff]
      %v474 = vld [vmem:[%s3 + $0x30] sm:$0xff]
      %v475 = vld [vmem:[%s3 + $0x38] sm:$0xff]
      %v476 = vld [vmem:[%s3 + $0x40] sm:$0xff]
      %v477 = vld [vmem:[%s3 + $0x48] sm:$0xff]
      %v478 = vld [vmem:[%s3 + $0x50] sm:$0xff]
      %v479 = vld [vmem:[%s3 + $0x58] sm:$0xff]
      %v480 = vld [vmem:[%s3 + $0x60] sm:$0xff]
      %v481 = vld [vmem:[%s3 + $0x68] sm:$0xff]
      %v482 = vld [vmem:[%s3 + $0x70] sm:$0xff]
      %v483 = vld [vmem:[%s3 + $0x78] sm:$0xff]
      %v484 = vld [vmem:[%s3 + $0x80] sm:$0xff]
      %v485 = vld [vmem:[%s3 + $0x88] sm:$0xff]
      %v486 = vld [vmem:[%s3 + $0x90] sm:$0xff]
      %v487 = vld [vmem:[%s3 + $0x98] sm:$0xff]
      %v488 = vld [vmem:[%s3 + $0xa0] sm:$0xff]
      %v489 = vld [vmem:[%s3 + $0xa8] sm:$0xff]
      %v490 = vld [vmem:[%s3 + $0xb0] sm:$0xff]
      %v491 = vld [vmem:[%s3 + $0xb8] sm:$0xff]
      %v492 = vld [vmem:[%s3 + $0xc0] sm:$0xff]
      %v493 = vld [vmem:[%s3 + $0xc8] sm:$0xff]
      %v494 = vld [vmem:[%s3 + $0xd0] sm:$0xff]
      %v495 = vld [vmem:[%s3 + $0xd8] sm:$0xff]
      %v496 = vld [vmem:[%s3 + $0xe0] sm:$0xff]
      %v497 = vld [vmem:[%s3 + $0xe8] sm:$0xff]
      %v498 = vld [vmem:[%s3 + $0xf0] sm:$0xff]
      %v499 = vld [vmem:[%s3 + $0xf8] sm:$0xff]
      %v500 = vld [vmem:[%s3 + $0x100] sm:$0xff]
      %v501 = vld [vmem:[%s3 + $0x108] sm:$0xff]
      %v502 = vld [vmem:[%s3 + $0x110] sm:$0xff]
      %v503 = vld [vmem:[%s3 + $0x118] sm:$0xff]
      %v504 = vld [vmem:[%s3 + $0x120] sm:$0xff]
      %v505 = vld [vmem:[%s3 + $0x128] sm:$0xff]
      %v506 = vld [vmem:[%s3 + $0x130] sm:$0xff]
      %v507 = vld [vmem:[%s3 + $0x138] sm:$0xff]
      %v508 = vld [vmem:[%s3 + $0x140] sm:$0xff]
      %v509 = vld [vmem:[%s3 + $0x148] sm:$0xff]
      %v510 = vld [vmem:[%s3 + $0x150] sm:$0xff]
      %v511 = vld [vmem:[%s3 + $0x158] sm:$0xff]
      %v512 = vld [vmem:[%s3 + $0x160] sm:$0xff]
      %v513 = vld [vmem:[%s3 + $0x168] sm:$0xff]
      %v514 = vld [vmem:[%s3 + $0x170] sm:$0xff]
      %v515 = vld [vmem:[%s3 + $0x178] sm:$0xff]
      %v516 = vld [vmem:[%s4] sm:$0x7]
      %v517 = vld [vmem:[%s4 + $0x3] sm:$0x7]
      %v518 = vld [vmem:[%s4 + $0x6] sm:$0x7]
      %v519 = vld [vmem:[%s4 + $0x9] sm:$0x7]
      %v524 = vlaneseq
      %v525 = vshrl.u32 %v524, 7
      %v526 = vsub.s32 0, %v525
      %v527 = vrot.slane %v516, %v526
      %v528 = vlaneseq
      %v529 = vshrl.u32 %v528, 7
      %v530 = vsub.s32 1, %v529
      %v531 = vrot.slane %v516, %v530
      %v532 = vlaneseq
      %v533 = vshrl.u32 %v532, 7
      %v534 = vsub.s32 2, %v533
      %v535 = vrot.slane %v516, %v534
      %v536 = vlaneseq
      %v537 = vshrl.u32 %v536, 7
      %v538 = vsub.s32 0, %v537
      %v539 = vrot.slane %v517, %v538
      %v540 = vlaneseq
      %v541 = vshrl.u32 %v540, 7
      %v542 = vsub.s32 1, %v541
      %v543 = vrot.slane %v517, %v542
      %v544 = vlaneseq
      %v545 = vshrl.u32 %v544, 7
      %v546 = vsub.s32 2, %v545
      %v547 = vrot.slane %v517, %v546
      %v548 = vlaneseq
      %v549 = vshrl.u32 %v548, 7
      %v550 = vsub.s32 0, %v549
      %v551 = vrot.slane %v518, %v550
      %v552 = vlaneseq
      %v553 = vshrl.u32 %v552, 7
      %v554 = vsub.s32 1, %v553
      %v555 = vrot.slane %v518, %v554
      %v556 = vlaneseq
      %v557 = vshrl.u32 %v556, 7
      %v558 = vsub.s32 2, %v557
      %v559 = vrot.slane %v518, %v558
      %v560 = vlaneseq
      %v561 = vshrl.u32 %v560, 7
      %v562 = vsub.s32 0, %v561
      %v563 = vrot.slane %v519, %v562
      %v564 = vlaneseq
      %v565 = vshrl.u32 %v564, 7
      %v566 = vsub.s32 1, %v565
      %v567 = vrot.slane %v519, %v566
      %v568 = vlaneseq
      %v569 = vshrl.u32 %v568, 7
      %v570 = vsub.s32 2, %v569
      %v571 = vrot.slane %v519, %v570
      %v585 = vsel %vm439, %v467, 0
      %587 = vmatprep.subr.mxu0 %v469
      %588 = vmatpush1.msra.mxu0 %v468
      %589 = vmatprep.subr.mxu0 %v472
      %590 = vmatpush1.msra.mxu0 %v471
      %591 = vmatprep.subr.mxu0 %v475
      %592 = vmatpush1.msra.mxu0 %v474
      %593 = vmatprep.subr.mxu0 %v478
      %594 = vmatpush1.msra.mxu0 %v477
      %595 = vmatprep.subr.mxu0 0.0
      %596 = vmatpush1.msra.mxu0 0.0
      %597 = vmatprep.subr.mxu0 0.0
      %598 = vmatpush1.msra.mxu0 0.0
      %599 = vmatprep.subr.mxu0 0.0
      %600 = vmatpush1.msra.mxu0 0.0
      %601 = vmatprep.subr.mxu0 0.0
      %602 = vmatpush1.msra.mxu0 0.0
      %603 = vmatprep.subr.mxu0 0.0
      %604 = vmatpush1.msra.mxu0 0.0
      %605 = vmatprep.subr.mxu0 0.0
      %606 = vmatpush1.msra.mxu0 0.0
      %607 = vmatprep.subr.mxu0 0.0
      %608 = vmatpush1.msra.mxu0 0.0
      %609 = vmatprep.subr.mxu0 0.0
      %610 = vmatpush1.msra.mxu0 0.0
      %611 = vmatprep.subr.mxu0 0.0
      %612 = vmatpush1.msra.mxu0 0.0
      %613 = vmatprep.subr.mxu0 0.0
      %614 = vmatpush1.msra.mxu0 0.0
      %615 = vmatprep.subr.mxu0 0.0
      %616 = vmatpush1.msra.mxu0 0.0
      %617 = vmatprep.subr.mxu0 0.0
      %618 = vmatpush1.msra.mxu0 0.0
      %619 = vmatprep.subr.mxu0 0.0
      %620 = vmatpush1.msra.mxu0 0.0
      %621 = vmatprep.subr.mxu0 0.0
      %622 = vmatpush1.msra.mxu0 0.0
      %623 = vmatprep.subr.mxu0 0.0
      %624 = vmatpush1.msra.mxu0 0.0
      %625 = vmatprep.subr.mxu0 0.0
      %626 = vmatpush1.msra.mxu0 0.0
      %627 = vmatprep.subr.mxu0 0.0
      %628 = vmatpush1.msra.mxu0 0.0
      %629 = vmatprep.subr.mxu0 0.0
      %630 = vmatpush1.msra.mxu0 0.0
      %631 = vmatprep.subr.mxu0 0.0
      %632 = vmatpush1.msra.mxu0 0.0
      %633 = vmatprep.subr.mxu0 0.0
      %634 = vmatpush1.msra.mxu0 0.0
      %635 = vmatprep.subr.mxu0 0.0
      %636 = vmatpush1.msra.mxu0 0.0
      %637 = vmatprep.subr.mxu0 0.0
      %638 = vmatpush1.msra.mxu0 0.0
      %639 = vmatprep.subr.mxu0 0.0
      %640 = vmatpush1.msra.mxu0 0.0
      %641 = vmatprep.subr.mxu0 0.0
      %642 = vmatpush1.msra.mxu0 0.0
      %643 = vmatprep.subr.mxu0 0.0
      %644 = vmatpush1.msra.mxu0 0.0
      %645 = vmatprep.subr.mxu0 0.0
      %646 = vmatpush1.msra.mxu0 0.0
      %647 = vmatprep.subr.mxu0 0.0
      %648 = vmatpush1.msra.mxu0 0.0
      %649 = vmatprep.subr.mxu0 0.0
      %650 = vmatpush1.msra.mxu0 0.0
      %651 = vmatprep.mubr.f32.mxu0 0.0
      %652 = vmatmul.mubr.f32.gmra.mrb[0].mxu0 %v585
      %v653 = vpop.f32.mrb[0].mxu0
      %v654 = vadd.f32 %v527, %v653
      %v655 = vpop.f32.mrb[0].mxu0
      %v656 = vadd.f32 %v531, %v655
      %657 = vdwg.mxu0
      %658 = vmatprep.subr.mxu0 0.0
      %659 = vmatpush1.msra.mxu0 %v470
      %660 = vmatprep.subr.mxu0 0.0
      %661 = vmatpush1.msra.mxu0 %v473
      %662 = vmatprep.subr.mxu0 0.0
      %663 = vmatpush1.msra.mxu0 %v476
      %664 = vmatprep.subr.mxu0 0.0
      %665 = vmatpush1.msra.mxu0 %v479
      %666 = vmatprep.subr.mxu0 0.0
      %667 = vmatpush1.msra.mxu0 0.0
      %668 = vmatprep.subr.mxu0 0.0
      %669 = vmatpush1.msra.mxu0 0.0
      %670 = vmatprep.subr.mxu0 0.0
      %671 = vmatpush1.msra.mxu0 0.0
      %672 = vmatprep.subr.mxu0 0.0
      %673 = vmatpush1.msra.mxu0 0.0
      %674 = vmatprep.subr.mxu0 0.0
      %675 = vmatpush1.msra.mxu0 0.0
      %676 = vmatprep.subr.mxu0 0.0
      %677 = vmatpush1.msra.mxu0 0.0
      %678 = vmatprep.subr.mxu0 0.0
      %679 = vmatpush1.msra.mxu0 0.0
      %680 = vmatprep.subr.mxu0 0.0
      %681 = vmatpush1.msra.mxu0 0.0
      %682 = vmatprep.subr.mxu0 0.0
      %683 = vmatpush1.msra.mxu0 0.0
      %684 = vmatprep.subr.mxu0 0.0
      %685 = vmatpush1.msra.mxu0 0.0
      %686 = vmatprep.subr.mxu0 0.0
      %687 = vmatpush1.msra.mxu0 0.0
      %688 = vmatprep.subr.mxu0 0.0
      %689 = vmatpush1.msra.mxu0 0.0
      %690 = vmatprep.subr.mxu0 0.0
      %691 = vmatpush1.msra.mxu0 0.0
      %692 = vmatprep.subr.mxu0 0.0
      %693 = vmatpush1.msra.mxu0 0.0
      %694 = vmatprep.subr.mxu0 0.0
      %695 = vmatpush1.msra.mxu0 0.0
      %696 = vmatprep.subr.mxu0 0.0
      %697 = vmatpush1.msra.mxu0 0.0
      %698 = vmatprep.subr.mxu0 0.0
      %699 = vmatpush1.msra.mxu0 0.0
      %700 = vmatprep.subr.mxu0 0.0
      %701 = vmatpush1.msra.mxu0 0.0
      %702 = vmatprep.subr.mxu0 0.0
      %703 = vmatpush1.msra.mxu0 0.0
      %704 = vmatprep.subr.mxu0 0.0
      %705 = vmatpush1.msra.mxu0 0.0
      %706 = vmatprep.subr.mxu0 0.0
      %707 = vmatpush1.msra.mxu0 0.0
      %708 = vmatprep.subr.mxu0 0.0
      %709 = vmatpush1.msra.mxu0 0.0
      %710 = vmatprep.subr.mxu0 0.0
      %711 = vmatpush1.msra.mxu0 0.0
      %712 = vmatprep.subr.mxu0 0.0
      %713 = vmatpush1.msra.mxu0 0.0
      %714 = vmatprep.subr.mxu0 0.0
      %715 = vmatpush1.msra.mxu0 0.0
      %716 = vmatprep.subr.mxu0 0.0
      %717 = vmatpush1.msra.mxu0 0.0
      %718 = vmatprep.subr.mxu0 0.0
      %719 = vmatpush1.msra.mxu0 0.0
      %720 = vmatprep.subr.mxu0 0.0
      %721 = vmatpush1.msra.mxu0 0.0
      %722 = vmatprep.mubr.f32.mxu0 0.0
      %723 = vmatmul.mubr.f32.gmra.mrb[0].mxu0 %v585
      %v724 = vpop.f32.mrb[0].mxu0
      %v725 = vadd.f32 %v535, %v724
      %v726 = vpop.f32.mrb[0].mxu0
      %727 = vdwg.mxu0
      %728 = vmatprep.subr.mxu0 %v481
      %729 = vmatpush1.msra.mxu0 %v480
      %730 = vmatprep.subr.mxu0 %v484
      %731 = vmatpush1.msra.mxu0 %v483
      %732 = vmatprep.subr.mxu0 %v487
      %733 = vmatpush1.msra.mxu0 %v486
      %734 = vmatprep.subr.mxu0 %v490
      %735 = vmatpush1.msra.mxu0 %v489
      %736 = vmatprep.subr.mxu0 0.0
      %737 = vmatpush1.msra.mxu0 0.0
      %738 = vmatprep.subr.mxu0 0.0
      %739 = vmatpush1.msra.mxu0 0.0
      %740 = vmatprep.subr.mxu0 0.0
      %741 = vmatpush1.msra.mxu0 0.0
      %742 = vmatprep.subr.mxu0 0.0
      %743 = vmatpush1.msra.mxu0 0.0
      %744 = vmatprep.subr.mxu0 0.0
      %745 = vmatpush1.msra.mxu0 0.0
      %746 = vmatprep.subr.mxu0 0.0
      %747 = vmatpush1.msra.mxu0 0.0
      %748 = vmatprep.subr.mxu0 0.0
      %749 = vmatpush1.msra.mxu0 0.0
      %750 = vmatprep.subr.mxu0 0.0
      %751 = vmatpush1.msra.mxu0 0.0
      %752 = vmatprep.subr.mxu0 0.0
      %753 = vmatpush1.msra.mxu0 0.0
      %754 = vmatprep.subr.mxu0 0.0
      %755 = vmatpush1.msra.mxu0 0.0
      %756 = vmatprep.subr.mxu0 0.0
      %757 = vmatpush1.msra.mxu0 0.0
      %758 = vmatprep.subr.mxu0 0.0
      %759 = vmatpush1.msra.mxu0 0.0
      %760 = vmatprep.subr.mxu0 0.0
      %761 = vmatpush1.msra.mxu0 0.0
      %762 = vmatprep.subr.mxu0 0.0
      %763 = vmatpush1.msra.mxu0 0.0
      %764 = vmatprep.subr.mxu0 0.0
      %765 = vmatpush1.msra.mxu0 0.0
      %766 = vmatprep.subr.mxu0 0.0
      %767 = vmatpush1.msra.mxu0 0.0
      %768 = vmatprep.subr.mxu0 0.0
      %769 = vmatpush1.msra.mxu0 0.0
      %770 = vmatprep.subr.mxu0 0.0
      %771 = vmatpush1.msra.mxu0 0.0
      %772 = vmatprep.subr.mxu0 0.0
      %773 = vmatpush1.msra.mxu0 0.0
      %774 = vmatprep.subr.mxu0 0.0
      %775 = vmatpush1.msra.mxu0 0.0
      %776 = vmatprep.subr.mxu0 0.0
      %777 = vmatpush1.msra.mxu0 0.0
      %778 = vmatprep.subr.mxu0 0.0
      %779 = vmatpush1.msra.mxu0 0.0
      %780 = vmatprep.subr.mxu0 0.0
      %781 = vmatpush1.msra.mxu0 0.0
      %782 = vmatprep.subr.mxu0 0.0
      %783 = vmatpush1.msra.mxu0 0.0
      %784 = vmatprep.subr.mxu0 0.0
      %785 = vmatpush1.msra.mxu0 0.0
      %786 = vmatprep.subr.mxu0 0.0
      %787 = vmatpush1.msra.mxu0 0.0
      %788 = vmatprep.subr.mxu0 0.0
      %789 = vmatpush1.msra.mxu0 0.0
      %790 = vmatprep.subr.mxu0 0.0
      %791 = vmatpush1.msra.mxu0 0.0
      %792 = vmatprep.mubr.f32.mxu0 0.0
      %793 = vmatmul.mubr.f32.gmra.mrb[0].mxu0 %v585
      %v794 = vpop.f32.mrb[0].mxu0
      %v795 = vadd.f32 %v539, %v794
      %v796 = vpop.f32.mrb[0].mxu0
      %v797 = vadd.f32 %v543, %v796
      %798 = vdwg.mxu0
      %799 = vmatprep.subr.mxu0 0.0
      %800 = vmatpush1.msra.mxu0 %v482
      %801 = vmatprep.subr.mxu0 0.0
      %802 = vmatpush1.msra.mxu0 %v485
      %803 = vmatprep.subr.mxu0 0.0
      %804 = vmatpush1.msra.mxu0 %v488
      %805 = vmatprep.subr.mxu0 0.0
      %806 = vmatpush1.msra.mxu0 %v491
      %807 = vmatprep.subr.mxu0 0.0
      %808 = vmatpush1.msra.mxu0 0.0
      %809 = vmatprep.subr.mxu0 0.0
      %810 = vmatpush1.msra.mxu0 0.0
      %811 = vmatprep.subr.mxu0 0.0
      %812 = vmatpush1.msra.mxu0 0.0
      %813 = vmatprep.subr.mxu0 0.0
      %814 = vmatpush1.msra.mxu0 0.0
      %815 = vmatprep.subr.mxu0 0.0
      %816 = vmatpush1.msra.mxu0 0.0
      %817 = vmatprep.subr.mxu0 0.0
      %818 = vmatpush1.msra.mxu0 0.0
      %819 = vmatprep.subr.mxu0 0.0
      %820 = vmatpush1.msra.mxu0 0.0
      %821 = vmatprep.subr.mxu0 0.0
      %822 = vmatpush1.msra.mxu0 0.0
      %823 = vmatprep.subr.mxu0 0.0
      %824 = vmatpush1.msra.mxu0 0.0
      %825 = vmatprep.subr.mxu0 0.0
      %826 = vmatpush1.msra.mxu0 0.0
      %827 = vmatprep.subr.mxu0 0.0
      %828 = vmatpush1.msra.mxu0 0.0
      %829 = vmatprep.subr.mxu0 0.0
      %830 = vmatpush1.msra.mxu0 0.0
      %831 = vmatprep.subr.mxu0 0.0
      %832 = vmatpush1.msra.mxu0 0.0
      %833 = vmatprep.subr.mxu0 0.0
      %834 = vmatpush1.msra.mxu0 0.0
      %835 = vmatprep.subr.mxu0 0.0
      %836 = vmatpush1.msra.mxu0 0.0
      %837 = vmatprep.subr.mxu0 0.0
      %838 = vmatpush1.msra.mxu0 0.0
      %839 = vmatprep.subr.mxu0 0.0
      %840 = vmatpush1.msra.mxu0 0.0
      %841 = vmatprep.subr.mxu0 0.0
      %842 = vmatpush1.msra.mxu0 0.0
      %843 = vmatprep.subr.mxu0 0.0
      %844 = vmatpush1.msra.mxu0 0.0
      %845 = vmatprep.subr.mxu0 0.0
      %846 = vmatpush1.msra.mxu0 0.0
      %847 = vmatprep.subr.mxu0 0.0
      %848 = vmatpush1.msra.mxu0 0.0
      %849 = vmatprep.subr.mxu0 0.0
      %850 = vmatpush1.msra.mxu0 0.0
      %851 = vmatprep.subr.mxu0 0.0
      %852 = vmatpush1.msra.mxu0 0.0
      %853 = vmatprep.subr.mxu0 0.0
      %854 = vmatpush1.msra.mxu0 0.0
      %855 = vmatprep.subr.mxu0 0.0
      %856 = vmatpush1.msra.mxu0 0.0
      %857 = vmatprep.subr.mxu0 0.0
      %858 = vmatpush1.msra.mxu0 0.0
      %859 = vmatprep.subr.mxu0 0.0
      %860 = vmatpush1.msra.mxu0 0.0
      %861 = vmatprep.subr.mxu0 0.0
      %862 = vmatpush1.msra.mxu0 0.0
      %863 = vmatprep.mubr.f32.mxu0 0.0
      %864 = vmatmul.mubr.f32.gmra.mrb[0].mxu0 %v585
      %v865 = vpop.f32.mrb[0].mxu0
      %v866 = vadd.f32 %v547, %v865
      %v867 = vpop.f32.mrb[0].mxu0
      %868 = vdwg.mxu0
      %869 = vmatprep.subr.mxu0 %v493
      %870 = vmatpush1.msra.mxu0 %v492
      %871 = vmatprep.subr.mxu0 %v496
      %872 = vmatpush1.msra.mxu0 %v495
      %873 = vmatprep.subr.mxu0 %v499
      %874 = vmatpush1.msra.mxu0 %v498
      %875 = vmatprep.subr.mxu0 %v502
      %876 = vmatpush1.msra.mxu0 %v501
      %877 = vmatprep.subr.mxu0 0.0
      %878 = vmatpush1.msra.mxu0 0.0
      %879 = vmatprep.subr.mxu0 0.0
      %880 = vmatpush1.msra.mxu0 0.0
      %881 = vmatprep.subr.mxu0 0.0
      %882 = vmatpush1.msra.mxu0 0.0
      %883 = vmatprep.subr.mxu0 0.0
      %884 = vmatpush1.msra.mxu0 0.0
      %885 = vmatprep.subr.mxu0 0.0
      %886 = vmatpush1.msra.mxu0 0.0
      %887 = vmatprep.subr.mxu0 0.0
      %888 = vmatpush1.msra.mxu0 0.0
      %889 = vmatprep.subr.mxu0 0.0
      %890 = vmatpush1.msra.mxu0 0.0
      %891 = vmatprep.subr.mxu0 0.0
      %892 = vmatpush1.msra.mxu0 0.0
      %893 = vmatprep.subr.mxu0 0.0
      %894 = vmatpush1.msra.mxu0 0.0
      %895 = vmatprep.subr.mxu0 0.0
      %896 = vmatpush1.msra.mxu0 0.0
      %897 = vmatprep.subr.mxu0 0.0
      %898 = vmatpush1.msra.mxu0 0.0
      %899 = vmatprep.subr.mxu0 0.0
      %900 = vmatpush1.msra.mxu0 0.0
      %901 = vmatprep.subr.mxu0 0.0
      %902 = vmatpush1.msra.mxu0 0.0
      %903 = vmatprep.subr.mxu0 0.0
      %904 = vmatpush1.msra.mxu0 0.0
      %905 = vmatprep.subr.mxu0 0.0
      %906 = vmatpush1.msra.mxu0 0.0
      %907 = vmatprep.subr.mxu0 0.0
      %908 = vmatpush1.msra.mxu0 0.0
      %909 = vmatprep.subr.mxu0 0.0
      %910 = vmatpush1.msra.mxu0 0.0
      %911 = vmatprep.subr.mxu0 0.0
      %912 = vmatpush1.msra.mxu0 0.0
      %913 = vmatprep.subr.mxu0 0.0
      %914 = vmatpush1.msra.mxu0 0.0
      %915 = vmatprep.subr.mxu0 0.0
      %916 = vmatpush1.msra.mxu0 0.0
      %917 = vmatprep.subr.mxu0 0.0
      %918 = vmatpush1.msra.mxu0 0.0
      %919 = vmatprep.subr.mxu0 0.0
      %920 = vmatpush1.msra.mxu0 0.0
      %921 = vmatprep.subr.mxu0 0.0
      %922 = vmatpush1.msra.mxu0 0.0
      %923 = vmatprep.subr.mxu0 0.0
      %924 = vmatpush1.msra.mxu0 0.0
      %925 = vmatprep.subr.mxu0 0.0
      %926 = vmatpush1.msra.mxu0 0.0
      %927 = vmatprep.subr.mxu0 0.0
      %928 = vmatpush1.msra.mxu0 0.0
      %929 = vmatprep.subr.mxu0 0.0
      %930 = vmatpush1.msra.mxu0 0.0
      %931 = vmatprep.subr.mxu0 0.0
      %932 = vmatpush1.msra.mxu0 0.0
      %933 = vmatprep.mubr.f32.mxu0 0.0
      %934 = vmatmul.mubr.f32.gmra.mrb[0].mxu0 %v585
      %v935 = vpop.f32.mrb[0].mxu0
      %v936 = vadd.f32 %v551, %v935
      %v937 = vpop.f32.mrb[0].mxu0
      %v938 = vadd.f32 %v555, %v937
      %939 = vdwg.mxu0
      %940 = vmatprep.subr.mxu0 0.0
      %941 = vmatpush1.msra.mxu0 %v494
      %942 = vmatprep.subr.mxu0 0.0
      %943 = vmatpush1.msra.mxu0 %v497
      %944 = vmatprep.subr.mxu0 0.0
      %945 = vmatpush1.msra.mxu0 %v500
      %946 = vmatprep.subr.mxu0 0.0
      %947 = vmatpush1.msra.mxu0 %v503
      %948 = vmatprep.subr.mxu0 0.0
      %949 = vmatpush1.msra.mxu0 0.0
      %950 = vmatprep.subr.mxu0 0.0
      %951 = vmatpush1.msra.mxu0 0.0
      %952 = vmatprep.subr.mxu0 0.0
      %953 = vmatpush1.msra.mxu0 0.0
      %954 = vmatprep.subr.mxu0 0.0
      %955 = vmatpush1.msra.mxu0 0.0
      %956 = vmatprep.subr.mxu0 0.0
      %957 = vmatpush1.msra.mxu0 0.0
      %958 = vmatprep.subr.mxu0 0.0
      %959 = vmatpush1.msra.mxu0 0.0
      %960 = vmatprep.subr.mxu0 0.0
      %961 = vmatpush1.msra.mxu0 0.0
      %962 = vmatprep.subr.mxu0 0.0
      %963 = vmatpush1.msra.mxu0 0.0
      %964 = vmatprep.subr.mxu0 0.0
      %965 = vmatpush1.msra.mxu0 0.0
      %966 = vmatprep.subr.mxu0 0.0
      %967 = vmatpush1.msra.mxu0 0.0
      %968 = vmatprep.subr.mxu0 0.0
      %969 = vmatpush1.msra.mxu0 0.0
      %970 = vmatprep.subr.mxu0 0.0
      %971 = vmatpush1.msra.mxu0 0.0
      %972 = vmatprep.subr.mxu0 0.0
      %973 = vmatpush1.msra.mxu0 0.0
      %974 = vmatprep.subr.mxu0 0.0
      %975 = vmatpush1.msra.mxu0 0.0
      %976 = vmatprep.subr.mxu0 0.0
      %977 = vmatpush1.msra.mxu0 0.0
      %978 = vmatprep.subr.mxu0 0.0
      %979 = vmatpush1.msra.mxu0 0.0
      %980 = vmatprep.subr.mxu0 0.0
      %981 = vmatpush1.msra.mxu0 0.0
      %982 = vmatprep.subr.mxu0 0.0
      %983 = vmatpush1.msra.mxu0 0.0
      %984 = vmatprep.subr.mxu0 0.0
      %985 = vmatpush1.msra.mxu0 0.0
      %986 = vmatprep.subr.mxu0 0.0
      %987 = vmatpush1.msra.mxu0 0.0
      %988 = vmatprep.subr.mxu0 0.0
      %989 = vmatpush1.msra.mxu0 0.0
      %990 = vmatprep.subr.mxu0 0.0
      %991 = vmatpush1.msra.mxu0 0.0
      %992 = vmatprep.subr.mxu0 0.0
      %993 = vmatpush1.msra.mxu0 0.0
      %994 = vmatprep.subr.mxu0 0.0
      %995 = vmatpush1.msra.mxu0 0.0
      %996 = vmatprep.subr.mxu0 0.0
      %997 = vmatpush1.msra.mxu0 0.0
      %998 = vmatprep.subr.mxu0 0.0
      %999 = vmatpush1.msra.mxu0 0.0
      %1000 = vmatprep.subr.mxu0 0.0
      %1001 = vmatpush1.msra.mxu0 0.0
      %1002 = vmatprep.subr.mxu0 0.0
      %1003 = vmatpush1.msra.mxu0 0.0
      %1004 = vmatprep.mubr.f32.mxu0 0.0
      %1005 = vmatmul.mubr.f32.gmra.mrb[0].mxu0 %v585
      %v1006 = vpop.f32.mrb[0].mxu0
      %v1007 = vadd.f32 %v559, %v1006
      %v1008 = vpop.f32.mrb[0].mxu0
      %1009 = vdwg.mxu0
      %1010 = vmatprep.subr.mxu0 %v505
      %1011 = vmatpush1.msra.mxu0 %v504
      %1012 = vmatprep.subr.mxu0 %v508
      %1013 = vmatpush1.msra.mxu0 %v507
      %1014 = vmatprep.subr.mxu0 %v511
      %1015 = vmatpush1.msra.mxu0 %v510
      %1016 = vmatprep.subr.mxu0 %v514
      %1017 = vmatpush1.msra.mxu0 %v513
      %1018 = vmatprep.subr.mxu0 0.0
      %1019 = vmatpush1.msra.mxu0 0.0
      %1020 = vmatprep.subr.mxu0 0.0
      %1021 = vmatpush1.msra.mxu0 0.0
      %1022 = vmatprep.subr.mxu0 0.0
      %1023 = vmatpush1.msra.mxu0 0.0
      %1024 = vmatprep.subr.mxu0 0.0
      %1025 = vmatpush1.msra.mxu0 0.0
      %1026 = vmatprep.subr.mxu0 0.0
      %1027 = vmatpush1.msra.mxu0 0.0
      %1028 = vmatprep.subr.mxu0 0.0
      %1029 = vmatpush1.msra.mxu0 0.0
      %1030 = vmatprep.subr.mxu0 0.0
      %1031 = vmatpush1.msra.mxu0 0.0
      %1032 = vmatprep.subr.mxu0 0.0
      %1033 = vmatpush1.msra.mxu0 0.0
      %1034 = vmatprep.subr.mxu0 0.0
      %1035 = vmatpush1.msra.mxu0 0.0
      %1036 = vmatprep.subr.mxu0 0.0
      %1037 = vmatpush1.msra.mxu0 0.0
      %1038 = vmatprep.subr.mxu0 0.0
      %1039 = vmatpush1.msra.mxu0 0.0
      %1040 = vmatprep.subr.mxu0 0.0
      %1041 = vmatpush1.msra.mxu0 0.0
      %1042 = vmatprep.subr.mxu0 0.0
      %1043 = vmatpush1.msra.mxu0 0.0
      %1044 = vmatprep.subr.mxu0 0.0
      %1045 = vmatpush1.msra.mxu0 0.0
      %1046 = vmatprep.subr.mxu0 0.0
      %1047 = vmatpush1.msra.mxu0 0.0
      %1048 = vmatprep.subr.mxu0 0.0
      %1049 = vmatpush1.msra.mxu0 0.0
      %1050 = vmatprep.subr.mxu0 0.0
      %1051 = vmatpush1.msra.mxu0 0.0
      %1052 = vmatprep.subr.mxu0 0.0
      %1053 = vmatpush1.msra.mxu0 0.0
      %1054 = vmatprep.subr.mxu0 0.0
      %1055 = vmatpush1.msra.mxu0 0.0
      %1056 = vmatprep.subr.mxu0 0.0
      %1057 = vmatpush1.msra.mxu0 0.0
      %1058 = vmatprep.subr.mxu0 0.0
      %1059 = vmatpush1.msra.mxu0 0.0
      %1060 = vmatprep.subr.mxu0 0.0
      %1061 = vmatpush1.msra.mxu0 0.0
      %1062 = vmatprep.subr.mxu0 0.0
      %1063 = vmatpush1.msra.mxu0 0.0
      %1064 = vmatprep.subr.mxu0 0.0
      %1065 = vmatpush1.msra.mxu0 0.0
      %1066 = vmatprep.subr.mxu0 0.0
      %1067 = vmatpush1.msra.mxu0 0.0
      %1068 = vmatprep.subr.mxu0 0.0
      %1069 = vmatpush1.msra.mxu0 0.0
      %1070 = vmatprep.subr.mxu0 0.0
      %1071 = vmatpush1.msra.mxu0 0.0
      %1072 = vmatprep.subr.mxu0 0.0
      %1073 = vmatpush1.msra.mxu0 0.0
      %1074 = vmatprep.mubr.f32.mxu0 0.0
      %1075 = vmatmul.mubr.f32.gmra.mrb[0].mxu0 %v585
      %v1076 = vpop.f32.mrb[0].mxu0
      %v1077 = vadd.f32 %v563, %v1076
      %v1078 = vpop.f32.mrb[0].mxu0
      %v1079 = vadd.f32 %v567, %v1078
      %1080 = vdwg.mxu0
      %1081 = vmatprep.subr.mxu0 0.0
      %1082 = vmatpush1.msra.mxu0 %v506
      %1083 = vmatprep.subr.mxu0 0.0
      %1084 = vmatpush1.msra.mxu0 %v509
      %1085 = vmatprep.subr.mxu0 0.0
      %1086 = vmatpush1.msra.mxu0 %v512
      %1087 = vmatprep.subr.mxu0 0.0
      %1088 = vmatpush1.msra.mxu0 %v515
      %1089 = vmatprep.subr.mxu0 0.0
      %1090 = vmatpush1.msra.mxu0 0.0
      %1091 = vmatprep.subr.mxu0 0.0
      %1092 = vmatpush1.msra.mxu0 0.0
      %1093 = vmatprep.subr.mxu0 0.0
      %1094 = vmatpush1.msra.mxu0 0.0
      %1095 = vmatprep.subr.mxu0 0.0
      %1096 = vmatpush1.msra.mxu0 0.0
      %1097 = vmatprep.subr.mxu0 0.0
      %1098 = vmatpush1.msra.mxu0 0.0
      %1099 = vmatprep.subr.mxu0 0.0
      %1100 = vmatpush1.msra.mxu0 0.0
      %1101 = vmatprep.subr.mxu0 0.0
      %1102 = vmatpush1.msra.mxu0 0.0
      %1103 = vmatprep.subr.mxu0 0.0
      %1104 = vmatpush1.msra.mxu0 0.0
      %1105 = vmatprep.subr.mxu0 0.0
      %1106 = vmatpush1.msra.mxu0 0.0
      %1107 = vmatprep.subr.mxu0 0.0
      %1108 = vmatpush1.msra.mxu0 0.0
      %1109 = vmatprep.subr.mxu0 0.0
      %1110 = vmatpush1.msra.mxu0 0.0
      %1111 = vmatprep.subr.mxu0 0.0
      %1112 = vmatpush1.msra.mxu0 0.0
      %1113 = vmatprep.subr.mxu0 0.0
      %1114 = vmatpush1.msra.mxu0 0.0
      %1115 = vmatprep.subr.mxu0 0.0
      %1116 = vmatpush1.msra.mxu0 0.0
      %1117 = vmatprep.subr.mxu0 0.0
      %1118 = vmatpush1.msra.mxu0 0.0
      %1119 = vmatprep.subr.mxu0 0.0
      %1120 = vmatpush1.msra.mxu0 0.0
      %1121 = vmatprep.subr.mxu0 0.0
      %1122 = vmatpush1.msra.mxu0 0.0
      %1123 = vmatprep.subr.mxu0 0.0
      %1124 = vmatpush1.msra.mxu0 0.0
      %1125 = vmatprep.subr.mxu0 0.0
      %1126 = vmatpush1.msra.mxu0 0.0
      %1127 = vmatprep.subr.mxu0 0.0
      %1128 = vmatpush1.msra.mxu0 0.0
      %1129 = vmatprep.subr.mxu0 0.0
      %1130 = vmatpush1.msra.mxu0 0.0
      %1131 = vmatprep.subr.mxu0 0.0
      %1132 = vmatpush1.msra.mxu0 0.0
      %1133 = vmatprep.subr.mxu0 0.0
      %1134 = vmatpush1.msra.mxu0 0.0
      %1135 = vmatprep.subr.mxu0 0.0
      %1136 = vmatpush1.msra.mxu0 0.0
      %1137 = vmatprep.subr.mxu0 0.0
      %1138 = vmatpush1.msra.mxu0 0.0
      %1139 = vmatprep.subr.mxu0 0.0
      %1140 = vmatpush1.msra.mxu0 0.0
      %1141 = vmatprep.subr.mxu0 0.0
      %1142 = vmatpush1.msra.mxu0 0.0
      %1143 = vmatprep.subr.mxu0 0.0
      %1144 = vmatpush1.msra.mxu0 0.0
      %1145 = vmatprep.mubr.f32.mxu0 0.0
      %1146 = vmatmul.mubr.f32.gmra.mrb[0].mxu0 %v585
      %v1147 = vpop.f32.mrb[0].mxu0
      %v1148 = vadd.f32 %v571, %v1147
      %v1149 = vpop.f32.mrb[0].mxu0
      %1150 = vdwg.mxu0
      %1151 = vmatprep.subr.mxu0 0.0
      %1152 = vmatpush1.xpose.msra.mxu0 %v656
      %1153 = vmatprep.subr.mxu0 0.0
      %1154 = vmatpush1.xpose.msra.mxu0 0.0
      %1155 = vmatprep.subr.mxu0 0.0
      %1156 = vmatpush1.xpose.msra.mxu0 0.0
      %1157 = vmatprep.subr.mxu0 0.0
      %1158 = vmatpush1.xpose.msra.mxu0 0.0
      %1159 = vmatprep.subr.mxu0 0.0
      %1160 = vmatpush1.xpose.msra.mxu0 0.0
      %1161 = vmatprep.subr.mxu0 0.0
      %1162 = vmatpush1.xpose.msra.mxu0 0.0
      %1163 = vmatprep.subr.mxu0 0.0
      %1164 = vmatpush1.xpose.msra.mxu0 0.0
      %1165 = vmatprep.subr.mxu0 0.0
      %1166 = vmatpush1.xpose.msra.mxu0 0.0
      %1167 = vmatprep.subr.mxu0 0.0
      %1168 = vmatpush1.xpose.msra.mxu0 0.0
      %1169 = vmatprep.subr.mxu0 0.0
      %1170 = vmatpush1.xpose.msra.mxu0 0.0
      %1171 = vmatprep.subr.mxu0 0.0
      %1172 = vmatpush1.xpose.msra.mxu0 0.0
      %1173 = vmatprep.subr.mxu0 0.0
      %1174 = vmatpush1.xpose.msra.mxu0 0.0
      %1175 = vmatprep.subr.mxu0 0.0
      %1176 = vmatpush1.xpose.msra.mxu0 0.0
      %1177 = vmatprep.subr.mxu0 0.0
      %1178 = vmatpush1.xpose.msra.mxu0 0.0
      %1179 = vmatprep.subr.mxu0 0.0
      %1180 = vmatpush1.xpose.msra.mxu0 0.0
      %1181 = vmatprep.subr.mxu0 0.0
      %1182 = vmatpush1.xpose.msra.mxu0 0.0
      %1183 = vmatprep.subr.mxu0 0.0
      %1184 = vmatpush1.xpose.msra.mxu0 0.0
      %1185 = vmatprep.subr.mxu0 0.0
      %1186 = vmatpush1.xpose.msra.mxu0 0.0
      %1187 = vmatprep.subr.mxu0 0.0
      %1188 = vmatpush1.xpose.msra.mxu0 0.0
      %1189 = vmatprep.subr.mxu0 0.0
      %1190 = vmatpush1.xpose.msra.mxu0 0.0
      %1191 = vmatprep.subr.mxu0 0.0
      %1192 = vmatpush1.xpose.msra.mxu0 0.0
      %1193 = vmatprep.subr.mxu0 0.0
      %1194 = vmatpush1.xpose.msra.mxu0 0.0
      %1195 = vmatprep.subr.mxu0 0.0
      %1196 = vmatpush1.xpose.msra.mxu0 0.0
      %1197 = vmatprep.subr.mxu0 0.0
      %1198 = vmatpush1.xpose.msra.mxu0 0.0
      %1199 = vmatprep.subr.mxu0 0.0
      %1200 = vmatpush1.xpose.msra.mxu0 0.0
      %1201 = vmatprep.subr.mxu0 0.0
      %1202 = vmatpush1.xpose.msra.mxu0 0.0
      %1203 = vmatprep.subr.mxu0 0.0
      %1204 = vmatpush1.xpose.msra.mxu0 0.0
      %1205 = vmatprep.subr.mxu0 0.0
      %1206 = vmatpush1.xpose.msra.mxu0 0.0
      %1207 = vmatprep.subr.mxu0 0.0
      %1208 = vmatpush1.xpose.msra.mxu0 0.0
      %1209 = vmatprep.subr.mxu0 0.0
      %1210 = vmatpush1.xpose.msra.mxu0 0.0
      %1211 = vmatprep.subr.mxu0 0.0
      %1212 = vmatpush1.xpose.msra.mxu0 0.0
      %1213 = vmatprep.subr.mxu0 0.0
      %1214 = vmatpush1.xpose.msra.mxu0 0.0
      %1215 = vmatprep.mubr.f32.mxu0 0.0
      %1216 = vmatmul.mubr.f32.gmra.mrb[0].mxu0 %v654
      %v1217 = vpop.f32.mrb[0].mxu0
      %v1218 = vadd.f32 0.0, %v1217
      %v1219 = vpop.f32.mrb[0].mxu0
      %1220 = vdwg.mxu0
      %1221 = vmatprep.subr.mxu0 0.0
      %1222 = vmatpush1.xpose.msra.mxu0 %v797
      %1223 = vmatprep.subr.mxu0 0.0
      %1224 = vmatpush1.xpose.msra.mxu0 0.0
      %1225 = vmatprep.subr.mxu0 0.0
      %1226 = vmatpush1.xpose.msra.mxu0 0.0
      %1227 = vmatprep.subr.mxu0 0.0
      %1228 = vmatpush1.xpose.msra.mxu0 0.0
      %1229 = vmatprep.subr.mxu0 0.0
      %1230 = vmatpush1.xpose.msra.mxu0 0.0
      %1231 = vmatprep.subr.mxu0 0.0
      %1232 = vmatpush1.xpose.msra.mxu0 0.0
      %1233 = vmatprep.subr.mxu0 0.0
      %1234 = vmatpush1.xpose.msra.mxu0 0.0
      %1235 = vmatprep.subr.mxu0 0.0
      %1236 = vmatpush1.xpose.msra.mxu0 0.0
      %1237 = vmatprep.subr.mxu0 0.0
      %1238 = vmatpush1.xpose.msra.mxu0 0.0
      %1239 = vmatprep.subr.mxu0 0.0
      %1240 = vmatpush1.xpose.msra.mxu0 0.0
      %1241 = vmatprep.subr.mxu0 0.0
      %1242 = vmatpush1.xpose.msra.mxu0 0.0
      %1243 = vmatprep.subr.mxu0 0.0
      %1244 = vmatpush1.xpose.msra.mxu0 0.0
      %1245 = vmatprep.subr.mxu0 0.0
      %1246 = vmatpush1.xpose.msra.mxu0 0.0
      %1247 = vmatprep.subr.mxu0 0.0
      %1248 = vmatpush1.xpose.msra.mxu0 0.0
      %1249 = vmatprep.subr.mxu0 0.0
      %1250 = vmatpush1.xpose.msra.mxu0 0.0
      %1251 = vmatprep.subr.mxu0 0.0
      %1252 = vmatpush1.xpose.msra.mxu0 0.0
      %1253 = vmatprep.subr.mxu0 0.0
      %1254 = vmatpush1.xpose.msra.mxu0 0.0
      %1255 = vmatprep.subr.mxu0 0.0
      %1256 = vmatpush1.xpose.msra.mxu0 0.0
      %1257 = vmatprep.subr.mxu0 0.0
      %1258 = vmatpush1.xpose.msra.mxu0 0.0
      %1259 = vmatprep.subr.mxu0 0.0
      %1260 = vmatpush1.xpose.msra.mxu0 0.0
      %1261 = vmatprep.subr.mxu0 0.0
      %1262 = vmatpush1.xpose.msra.mxu0 0.0
      %1263 = vmatprep.subr.mxu0 0.0
      %1264 = vmatpush1.xpose.msra.mxu0 0.0
      %1265 = vmatprep.subr.mxu0 0.0
      %1266 = vmatpush1.xpose.msra.mxu0 0.0
      %1267 = vmatprep.subr.mxu0 0.0
      %1268 = vmatpush1.xpose.msra.mxu0 0.0
      %1269 = vmatprep.subr.mxu0 0.0
      %1270 = vmatpush1.xpose.msra.mxu0 0.0
      %1271 = vmatprep.subr.mxu0 0.0
      %1272 = vmatpush1.xpose.msra.mxu0 0.0
      %1273 = vmatprep.subr.mxu0 0.0
      %1274 = vmatpush1.xpose.msra.mxu0 0.0
      %1275 = vmatprep.subr.mxu0 0.0
      %1276 = vmatpush1.xpose.msra.mxu0 0.0
      %1277 = vmatprep.subr.mxu0 0.0
      %1278 = vmatpush1.xpose.msra.mxu0 0.0
      %1279 = vmatprep.subr.mxu0 0.0
      %1280 = vmatpush1.xpose.msra.mxu0 0.0
      %1281 = vmatprep.subr.mxu0 0.0
      %1282 = vmatpush1.xpose.msra.mxu0 0.0
      %1283 = vmatprep.subr.mxu0 0.0
      %1284 = vmatpush1.xpose.msra.mxu0 0.0
      %1285 = vmatprep.mubr.f32.mxu0 0.0
      %1286 = vmatmul.mubr.f32.gmra.mrb[0].mxu0 %v795
      %v1287 = vpop.f32.mrb[0].mxu0
      %v1288 = vadd.f32 0.0, %v1287
      %v1289 = vpop.f32.mrb[0].mxu0
      %1290 = vdwg.mxu0
      %1291 = vmatprep.subr.mxu0 0.0
      %1292 = vmatpush1.xpose.msra.mxu0 %v938
      %1293 = vmatprep.subr.mxu0 0.0
      %1294 = vmatpush1.xpose.msra.mxu0 0.0
      %1295 = vmatprep.subr.mxu0 0.0
      %1296 = vmatpush1.xpose.msra.mxu0 0.0
      %1297 = vmatprep.subr.mxu0 0.0
      %1298 = vmatpush1.xpose.msra.mxu0 0.0
      %1299 = vmatprep.subr.mxu0 0.0
      %1300 = vmatpush1.xpose.msra.mxu0 0.0
      %1301 = vmatprep.subr.mxu0 0.0
      %1302 = vmatpush1.xpose.msra.mxu0 0.0
      %1303 = vmatprep.subr.mxu0 0.0
      %1304 = vmatpush1.xpose.msra.mxu0 0.0
      %1305 = vmatprep.subr.mxu0 0.0
      %1306 = vmatpush1.xpose.msra.mxu0 0.0
      %1307 = vmatprep.subr.mxu0 0.0
      %1308 = vmatpush1.xpose.msra.mxu0 0.0
      %1309 = vmatprep.subr.mxu0 0.0
      %1310 = vmatpush1.xpose.msra.mxu0 0.0
      %1311 = vmatprep.subr.mxu0 0.0
      %1312 = vmatpush1.xpose.msra.mxu0 0.0
      %1313 = vmatprep.subr.mxu0 0.0
      %1314 = vmatpush1.xpose.msra.mxu0 0.0
      %1315 = vmatprep.subr.mxu0 0.0
      %1316 = vmatpush1.xpose.msra.mxu0 0.0
      %1317 = vmatprep.subr.mxu0 0.0
      %1318 = vmatpush1.xpose.msra.mxu0 0.0
      %1319 = vmatprep.subr.mxu0 0.0
      %1320 = vmatpush1.xpose.msra.mxu0 0.0
      %1321 = vmatprep.subr.mxu0 0.0
      %1322 = vmatpush1.xpose.msra.mxu0 0.0
      %1323 = vmatprep.subr.mxu0 0.0
      %1324 = vmatpush1.xpose.msra.mxu0 0.0
      %1325 = vmatprep.subr.mxu0 0.0
      %1326 = vmatpush1.xpose.msra.mxu0 0.0
      %1327 = vmatprep.subr.mxu0 0.0
      %1328 = vmatpush1.xpose.msra.mxu0 0.0
      %1329 = vmatprep.subr.mxu0 0.0
      %1330 = vmatpush1.xpose.msra.mxu0 0.0
      %1331 = vmatprep.subr.mxu0 0.0
      %1332 = vmatpush1.xpose.msra.mxu0 0.0
      %1333 = vmatprep.subr.mxu0 0.0
      %1334 = vmatpush1.xpose.msra.mxu0 0.0
      %1335 = vmatprep.subr.mxu0 0.0
      %1336 = vmatpush1.xpose.msra.mxu0 0.0
      %1337 = vmatprep.subr.mxu0 0.0
      %1338 = vmatpush1.xpose.msra.mxu0 0.0
      %1339 = vmatprep.subr.mxu0 0.0
      %1340 = vmatpush1.xpose.msra.mxu0 0.0
      %1341 = vmatprep.subr.mxu0 0.0
      %1342 = vmatpush1.xpose.msra.mxu0 0.0
      %1343 = vmatprep.subr.mxu0 0.0
      %1344 = vmatpush1.xpose.msra.mxu0 0.0
      %1345 = vmatprep.subr.mxu0 0.0
      %1346 = vmatpush1.xpose.msra.mxu0 0.0
      %1347 = vmatprep.subr.mxu0 0.0
      %1348 = vmatpush1.xpose.msra.mxu0 0.0
      %1349 = vmatprep.subr.mxu0 0.0
      %1350 = vmatpush1.xpose.msra.mxu0 0.0
      %1351 = vmatprep.subr.mxu0 0.0
      %1352 = vmatpush1.xpose.msra.mxu0 0.0
      %1353 = vmatprep.subr.mxu0 0.0
      %1354 = vmatpush1.xpose.msra.mxu0 0.0
      %1355 = vmatprep.mubr.f32.mxu0 0.0
      %1356 = vmatmul.mubr.f32.gmra.mrb[0].mxu0 %v936
      %v1357 = vpop.f32.mrb[0].mxu0
      %v1358 = vadd.f32 0.0, %v1357
      %v1359 = vpop.f32.mrb[0].mxu0
      %1360 = vdwg.mxu0
      %1361 = vmatprep.subr.mxu0 0.0
      %1362 = vmatpush1.xpose.msra.mxu0 %v1079
      %1363 = vmatprep.subr.mxu0 0.0
      %1364 = vmatpush1.xpose.msra.mxu0 0.0
      %1365 = vmatprep.subr.mxu0 0.0
      %1366 = vmatpush1.xpose.msra.mxu0 0.0
      %1367 = vmatprep.subr.mxu0 0.0
      %1368 = vmatpush1.xpose.msra.mxu0 0.0
      %1369 = vmatprep.subr.mxu0 0.0
      %1370 = vmatpush1.xpose.msra.mxu0 0.0
      %1371 = vmatprep.subr.mxu0 0.0
      %1372 = vmatpush1.xpose.msra.mxu0 0.0
      %1373 = vmatprep.subr.mxu0 0.0
      %1374 = vmatpush1.xpose.msra.mxu0 0.0
      %1375 = vmatprep.subr.mxu0 0.0
      %1376 = vmatpush1.xpose.msra.mxu0 0.0
      %1377 = vmatprep.subr.mxu0 0.0
      %1378 = vmatpush1.xpose.msra.mxu0 0.0
      %1379 = vmatprep.subr.mxu0 0.0
      %1380 = vmatpush1.xpose.msra.mxu0 0.0
      %1381 = vmatprep.subr.mxu0 0.0
      %1382 = vmatpush1.xpose.msra.mxu0 0.0
      %1383 = vmatprep.subr.mxu0 0.0
      %1384 = vmatpush1.xpose.msra.mxu0 0.0
      %1385 = vmatprep.subr.mxu0 0.0
      %1386 = vmatpush1.xpose.msra.mxu0 0.0
      %1387 = vmatprep.subr.mxu0 0.0
      %1388 = vmatpush1.xpose.msra.mxu0 0.0
      %1389 = vmatprep.subr.mxu0 0.0
      %1390 = vmatpush1.xpose.msra.mxu0 0.0
      %1391 = vmatprep.subr.mxu0 0.0
      %1392 = vmatpush1.xpose.msra.mxu0 0.0
      %1393 = vmatprep.subr.mxu0 0.0
      %1394 = vmatpush1.xpose.msra.mxu0 0.0
      %1395 = vmatprep.subr.mxu0 0.0
      %1396 = vmatpush1.xpose.msra.mxu0 0.0
      %1397 = vmatprep.subr.mxu0 0.0
      %1398 = vmatpush1.xpose.msra.mxu0 0.0
      %1399 = vmatprep.subr.mxu0 0.0
      %1400 = vmatpush1.xpose.msra.mxu0 0.0
      %1401 = vmatprep.subr.mxu0 0.0
      %1402 = vmatpush1.xpose.msra.mxu0 0.0
      %1403 = vmatprep.subr.mxu0 0.0
      %1404 = vmatpush1.xpose.msra.mxu0 0.0
      %1405 = vmatprep.subr.mxu0 0.0
      %1406 = vmatpush1.xpose.msra.mxu0 0.0
      %1407 = vmatprep.subr.mxu0 0.0
      %1408 = vmatpush1.xpose.msra.mxu0 0.0
      %1409 = vmatprep.subr.mxu0 0.0
      %1410 = vmatpush1.xpose.msra.mxu0 0.0
      %1411 = vmatprep.subr.mxu0 0.0
      %1412 = vmatpush1.xpose.msra.mxu0 0.0
      %1413 = vmatprep.subr.mxu0 0.0
      %1414 = vmatpush1.xpose.msra.mxu0 0.0
      %1415 = vmatprep.subr.mxu0 0.0
      %1416 = vmatpush1.xpose.msra.mxu0 0.0
      %1417 = vmatprep.subr.mxu0 0.0
      %1418 = vmatpush1.xpose.msra.mxu0 0.0
      %1419 = vmatprep.subr.mxu0 0.0
      %1420 = vmatpush1.xpose.msra.mxu0 0.0
      %1421 = vmatprep.subr.mxu0 0.0
      %1422 = vmatpush1.xpose.msra.mxu0 0.0
      %1423 = vmatprep.subr.mxu0 0.0
      %1424 = vmatpush1.xpose.msra.mxu0 0.0
      %1425 = vmatprep.mubr.f32.mxu0 0.0
      %1426 = vmatmul.mubr.f32.gmra.mrb[0].mxu0 %v1077
      %v1427 = vpop.f32.mrb[0].mxu0
      %v1428 = vadd.f32 0.0, %v1427
      %v1429 = vpop.f32.mrb[0].mxu0
      %1430 = vdwg.mxu0
      %v1431 = vmul.f32 %v1218, 0.35355338
      %v1432 = vmul.f32 %v1288, 0.35355338
      %v1433 = vmul.f32 %v1358, 0.35355338
      %v1434 = vmul.f32 %v1428, 0.35355338
      %v1435 = vlaneseq
      %v1436 = vshrl.u32 %v1435, 7
      %v1437 = vlaneseq
      %v1438 = vand.u32 %v1437, 127
      %vm1439 = vcmp.le.s32.totalorder %v1438, %v1436
      %v1440 = vsel %vm1439, 1, 0
      %vm1441 = vcmp.eq.s32.totalorder %v1440, 1
      %v1442 = vsel %vm1441, %v1431, -1e+30
      %v1443 = vsel %vm1441, %v1432, -1e+30
      %v1444 = vsel %vm1441, %v1433, -1e+30
      %v1445 = vsel %vm1441, %v1434, -1e+30
      %vm1446 = vcmask 64512
      %v1447 = vsel %vm1446, %v1442, -inf
      %1448 = vmax.xlane.f32.xlu0 %v1447
      %v1449 = vpop.xlane.xlu0 %1448
      %v1450 = vsel %vm1446, %v1443, -inf
      %1451 = vmax.xlane.f32.xlu0 %v1450
      %v1452 = vpop.xlane.xlu0 %1451
      %v1453 = vsel %vm1446, %v1444, -inf
      %1454 = vmax.xlane.f32.xlu0 %v1453
      %v1455 = vpop.xlane.xlu0 %1454
      %v1456 = vsel %vm1446, %v1445, -inf
      %1457 = vmax.xlane.f32.xlu0 %v1456
      %v1458 = vpop.xlane.xlu0 %1457
      %v1459 = vsub.f32 %v1442, %v1449
      %v1460 = vsub.f32 %v1443, %v1452
      %v1461 = vsub.f32 %v1444, %v1455
      %v1462 = vsub.f32 %v1445, %v1458
      %v1463 = vmul.f32 %v1459, 1.442695
      %v1464 = vpow.pop %v1463
      %v1465 = vmul.f32 %v1460, 1.442695
      %v1466 = vpow.pop %v1465
      %v1467 = vmul.f32 %v1461, 1.442695
      %v1468 = vpow.pop %v1467
      %v1469 = vmul.f32 %v1462, 1.442695
      %v1470 = vpow.pop %v1469
      %v1471 = vsel %vm1446, %v1464, 0.0
      %1472 = vadd.xlane.f32.xlu0 %v1471
      %v1473 = vpop.xlane.xlu0 %1472
      %v1474 = vsel %vm1446, %v1466, 0.0
      %1475 = vadd.xlane.f32.xlu0 %v1474
      %v1476 = vpop.xlane.xlu0 %1475
      %v1477 = vsel %vm1446, %v1468, 0.0
      %1478 = vadd.xlane.f32.xlu0 %v1477
      %v1479 = vpop.xlane.xlu0 %1478
      %v1480 = vsel %vm1446, %v1470, 0.0
      %1481 = vadd.xlane.f32.xlu0 %v1480
      %v1482 = vpop.xlane.xlu0 %1481
      %v1483 = vrcp.pop %v1473
      %v1484 = vrcp.pop %v1476
      %v1485 = vrcp.pop %v1479
      %v1486 = vrcp.pop %v1482
      %v1487 = vmul.f32 %v1464, %v1483
      %v1488 = vmul.f32 %v1466, %v1484
      %v1489 = vmul.f32 %v1468, %v1485
      %v1490 = vmul.f32 %v1470, %v1486
      %v1492 = vsel %vm1446, %v1487, 0
      %1494 = vmatprep.subr.mxu0 0.0
      %1495 = vmatpush1.msra.mxu0 %v725
      %1496 = vmatprep.subr.mxu0 0.0
      %1497 = vmatpush1.msra.mxu0 0.0
      %1498 = vmatprep.subr.mxu0 0.0
      %1499 = vmatpush1.msra.mxu0 0.0
      %1500 = vmatprep.subr.mxu0 0.0
      %1501 = vmatpush1.msra.mxu0 0.0
      %1502 = vmatprep.subr.mxu0 0.0
      %1503 = vmatpush1.msra.mxu0 0.0
      %1504 = vmatprep.subr.mxu0 0.0
      %1505 = vmatpush1.msra.mxu0 0.0
      %1506 = vmatprep.subr.mxu0 0.0
      %1507 = vmatpush1.msra.mxu0 0.0
      %1508 = vmatprep.subr.mxu0 0.0
      %1509 = vmatpush1.msra.mxu0 0.0
      %1510 = vmatprep.subr.mxu0 0.0
      %1511 = vmatpush1.msra.mxu0 0.0
      %1512 = vmatprep.subr.mxu0 0.0
      %1513 = vmatpush1.msra.mxu0 0.0
      %1514 = vmatprep.subr.mxu0 0.0
      %1515 = vmatpush1.msra.mxu0 0.0
      %1516 = vmatprep.subr.mxu0 0.0
      %1517 = vmatpush1.msra.mxu0 0.0
      %1518 = vmatprep.subr.mxu0 0.0
      %1519 = vmatpush1.msra.mxu0 0.0
      %1520 = vmatprep.subr.mxu0 0.0
      %1521 = vmatpush1.msra.mxu0 0.0
      %1522 = vmatprep.subr.mxu0 0.0
      %1523 = vmatpush1.msra.mxu0 0.0
      %1524 = vmatprep.subr.mxu0 0.0
      %1525 = vmatpush1.msra.mxu0 0.0
      %1526 = vmatprep.subr.mxu0 0.0
      %1527 = vmatpush1.msra.mxu0 0.0
      %1528 = vmatprep.subr.mxu0 0.0
      %1529 = vmatpush1.msra.mxu0 0.0
      %1530 = vmatprep.subr.mxu0 0.0
      %1531 = vmatpush1.msra.mxu0 0.0
      %1532 = vmatprep.subr.mxu0 0.0
      %1533 = vmatpush1.msra.mxu0 0.0
      %1534 = vmatprep.subr.mxu0 0.0
      %1535 = vmatpush1.msra.mxu0 0.0
      %1536 = vmatprep.subr.mxu0 0.0
      %1537 = vmatpush1.msra.mxu0 0.0
      %1538 = vmatprep.subr.mxu0 0.0
      %1539 = vmatpush1.msra.mxu0 0.0
      %1540 = vmatprep.subr.mxu0 0.0
      %1541 = vmatpush1.msra.mxu0 0.0
      %1542 = vmatprep.subr.mxu0 0.0
      %1543 = vmatpush1.msra.mxu0 0.0
      %1544 = vmatprep.subr.mxu0 0.0
      %1545 = vmatpush1.msra.mxu0 0.0
      %1546 = vmatprep.subr.mxu0 0.0
      %1547 = vmatpush1.msra.mxu0 0.0
      %1548 = vmatprep.subr.mxu0 0.0
      %1549 = vmatpush1.msra.mxu0 0.0
      %1550 = vmatprep.subr.mxu0 0.0
      %1551 = vmatpush1.msra.mxu0 0.0
      %1552 = vmatprep.subr.mxu0 0.0
      %1553 = vmatpush1.msra.mxu0 0.0
      %1554 = vmatprep.subr.mxu0 0.0
      %1555 = vmatpush1.msra.mxu0 0.0
      %1556 = vmatprep.subr.mxu0 0.0
      %1557 = vmatpush1.msra.mxu0 0.0
      %1558 = vmatprep.mubr.f32.mxu0 0.0
      %1559 = vmatmul.mubr.f32.gmra.mrb[0].mxu0 %v1492
      %v1560 = vpop.f32.mrb[0].mxu0
      %v1561 = vadd.f32 0.0, %v1560
      %v1562 = vpop.f32.mrb[0].mxu0
      %1563 = vdwg.mxu0
      %v1565 = vsel %vm1446, %v1488, 0
      %1567 = vmatprep.subr.mxu0 0.0
      %1568 = vmatpush1.msra.mxu0 %v866
      %1569 = vmatprep.subr.mxu0 0.0
      %1570 = vmatpush1.msra.mxu0 0.0
      %1571 = vmatprep.subr.mxu0 0.0
      %1572 = vmatpush1.msra.mxu0 0.0
      %1573 = vmatprep.subr.mxu0 0.0
      %1574 = vmatpush1.msra.mxu0 0.0
      %1575 = vmatprep.subr.mxu0 0.0
      %1576 = vmatpush1.msra.mxu0 0.0
      %1577 = vmatprep.subr.mxu0 0.0
      %1578 = vmatpush1.msra.mxu0 0.0
      %1579 = vmatprep.subr.mxu0 0.0
      %1580 = vmatpush1.msra.mxu0 0.0
      %1581 = vmatprep.subr.mxu0 0.0
      %1582 = vmatpush1.msra.mxu0 0.0
      %1583 = vmatprep.subr.mxu0 0.0
      %1584 = vmatpush1.msra.mxu0 0.0
      %1585 = vmatprep.subr.mxu0 0.0
      %1586 = vmatpush1.msra.mxu0 0.0
      %1587 = vmatprep.subr.mxu0 0.0
      %1588 = vmatpush1.msra.mxu0 0.0
      %1589 = vmatprep.subr.mxu0 0.0
      %1590 = vmatpush1.msra.mxu0 0.0
      %1591 = vmatprep.subr.mxu0 0.0
      %1592 = vmatpush1.msra.mxu0 0.0
      %1593 = vmatprep.subr.mxu0 0.0
      %1594 = vmatpush1.msra.mxu0 0.0
      %1595 = vmatprep.subr.mxu0 0.0
      %1596 = vmatpush1.msra.mxu0 0.0
      %1597 = vmatprep.subr.mxu0 0.0
      %1598 = vmatpush1.msra.mxu0 0.0
      %1599 = vmatprep.subr.mxu0 0.0
      %1600 = vmatpush1.msra.mxu0 0.0
      %1601 = vmatprep.subr.mxu0 0.0
      %1602 = vmatpush1.msra.mxu0 0.0
      %1603 = vmatprep.subr.mxu0 0.0
      %1604 = vmatpush1.msra.mxu0 0.0
      %1605 = vmatprep.subr.mxu0 0.0
      %1606 = vmatpush1.msra.mxu0 0.0
      %1607 = vmatprep.subr.mxu0 0.0
      %1608 = vmatpush1.msra.mxu0 0.0
      %1609 = vmatprep.subr.mxu0 0.0
      %1610 = vmatpush1.msra.mxu0 0.0
      %1611 = vmatprep.subr.mxu0 0.0
      %1612 = vmatpush1.msra.mxu0 0.0
      %1613 = vmatprep.subr.mxu0 0.0
      %1614 = vmatpush1.msra.mxu0 0.0
      %1615 = vmatprep.subr.mxu0 0.0
      %1616 = vmatpush1.msra.mxu0 0.0
      %1617 = vmatprep.subr.mxu0 0.0
      %1618 = vmatpush1.msra.mxu0 0.0
      %1619 = vmatprep.subr.mxu0 0.0
      %1620 = vmatpush1.msra.mxu0 0.0
      %1621 = vmatprep.subr.mxu0 0.0
      %1622 = vmatpush1.msra.mxu0 0.0
      %1623 = vmatprep.subr.mxu0 0.0
      %1624 = vmatpush1.msra.mxu0 0.0
      %1625 = vmatprep.subr.mxu0 0.0
      %1626 = vmatpush1.msra.mxu0 0.0
      %1627 = vmatprep.subr.mxu0 0.0
      %1628 = vmatpush1.msra.mxu0 0.0
      %1629 = vmatprep.subr.mxu0 0.0
      %1630 = vmatpush1.msra.mxu0 0.0
      %1631 = vmatprep.mubr.f32.mxu0 0.0
      %1632 = vmatmul.mubr.f32.gmra.mrb[0].mxu0 %v1565
      %v1633 = vpop.f32.mrb[0].mxu0
      %v1634 = vadd.f32 0.0, %v1633
      %v1635 = vpop.f32.mrb[0].mxu0
      %1636 = vdwg.mxu0
      %v1638 = vsel %vm1446, %v1489, 0
      %1640 = vmatprep.subr.mxu0 0.0
      %1641 = vmatpush1.msra.mxu0 %v1007
      %1642 = vmatprep.subr.mxu0 0.0
      %1643 = vmatpush1.msra.mxu0 0.0
      %1644 = vmatprep.subr.mxu0 0.0
      %1645 = vmatpush1.msra.mxu0 0.0
      %1646 = vmatprep.subr.mxu0 0.0
      %1647 = vmatpush1.msra.mxu0 0.0
      %1648 = vmatprep.subr.mxu0 0.0
      %1649 = vmatpush1.msra.mxu0 0.0
      %1650 = vmatprep.subr.mxu0 0.0
      %1651 = vmatpush1.msra.mxu0 0.0
      %1652 = vmatprep.subr.mxu0 0.0
      %1653 = vmatpush1.msra.mxu0 0.0
      %1654 = vmatprep.subr.mxu0 0.0
      %1655 = vmatpush1.msra.mxu0 0.0
      %1656 = vmatprep.subr.mxu0 0.0
      %1657 = vmatpush1.msra.mxu0 0.0
      %1658 = vmatprep.subr.mxu0 0.0
      %1659 = vmatpush1.msra.mxu0 0.0
      %1660 = vmatprep.subr.mxu0 0.0
      %1661 = vmatpush1.msra.mxu0 0.0
      %1662 = vmatprep.subr.mxu0 0.0
      %1663 = vmatpush1.msra.mxu0 0.0
      %1664 = vmatprep.subr.mxu0 0.0
      %1665 = vmatpush1.msra.mxu0 0.0
      %1666 = vmatprep.subr.mxu0 0.0
      %1667 = vmatpush1.msra.mxu0 0.0
      %1668 = vmatprep.subr.mxu0 0.0
      %1669 = vmatpush1.msra.mxu0 0.0
      %1670 = vmatprep.subr.mxu0 0.0
      %1671 = vmatpush1.msra.mxu0 0.0
      %1672 = vmatprep.subr.mxu0 0.0
      %1673 = vmatpush1.msra.mxu0 0.0
      %1674 = vmatprep.subr.mxu0 0.0
      %1675 = vmatpush1.msra.mxu0 0.0
      %1676 = vmatprep.subr.mxu0 0.0
      %1677 = vmatpush1.msra.mxu0 0.0
      %1678 = vmatprep.subr.mxu0 0.0
      %1679 = vmatpush1.msra.mxu0 0.0
      %1680 = vmatprep.subr.mxu0 0.0
      %1681 = vmatpush1.msra.mxu0 0.0
      %1682 = vmatprep.subr.mxu0 0.0
      %1683 = vmatpush1.msra.mxu0 0.0
      %1684 = vmatprep.subr.mxu0 0.0
      %1685 = vmatpush1.msra.mxu0 0.0
      %1686 = vmatprep.subr.mxu0 0.0
      %1687 = vmatpush1.msra.mxu0 0.0
      %1688 = vmatprep.subr.mxu0 0.0
      %1689 = vmatpush1.msra.mxu0 0.0
      %1690 = vmatprep.subr.mxu0 0.0
      %1691 = vmatpush1.msra.mxu0 0.0
      %1692 = vmatprep.subr.mxu0 0.0
      %1693 = vmatpush1.msra.mxu0 0.0
      %1694 = vmatprep.subr.mxu0 0.0
      %1695 = vmatpush1.msra.mxu0 0.0
      %1696 = vmatprep.subr.mxu0 0.0
      %1697 = vmatpush1.msra.mxu0 0.0
      %1698 = vmatprep.subr.mxu0 0.0
      %1699 = vmatpush1.msra.mxu0 0.0
      %1700 = vmatprep.subr.mxu0 0.0
      %1701 = vmatpush1.msra.mxu0 0.0
      %1702 = vmatprep.subr.mxu0 0.0
      %1703 = vmatpush1.msra.mxu0 0.0
      %1704 = vmatprep.mubr.f32.mxu0 0.0
      %1705 = vmatmul.mubr.f32.gmra.mrb[0].mxu0 %v1638
      %v1706 = vpop.f32.mrb[0].mxu0
      %v1707 = vadd.f32 0.0, %v1706
      %v1708 = vpop.f32.mrb[0].mxu0
      %1709 = vdwg.mxu0
      %v1711 = vsel %vm1446, %v1490, 0
      %1713 = vmatprep.subr.mxu0 0.0
      %1714 = vmatpush1.msra.mxu0 %v1148
      %1715 = vmatprep.subr.mxu0 0.0
      %1716 = vmatpush1.msra.mxu0 0.0
      %1717 = vmatprep.subr.mxu0 0.0
      %1718 = vmatpush1.msra.mxu0 0.0
      %1719 = vmatprep.subr.mxu0 0.0
      %1720 = vmatpush1.msra.mxu0 0.0
      %1721 = vmatprep.subr.mxu0 0.0
      %1722 = vmatpush1.msra.mxu0 0.0
      %1723 = vmatprep.subr.mxu0 0.0
      %1724 = vmatpush1.msra.mxu0 0.0
      %1725 = vmatprep.subr.mxu0 0.0
      %1726 = vmatpush1.msra.mxu0 0.0
      %1727 = vmatprep.subr.mxu0 0.0
      %1728 = vmatpush1.msra.mxu0 0.0
      %1729 = vmatprep.subr.mxu0 0.0
      %1730 = vmatpush1.msra.mxu0 0.0
      %1731 = vmatprep.subr.mxu0 0.0
      %1732 = vmatpush1.msra.mxu0 0.0
      %1733 = vmatprep.subr.mxu0 0.0
      %1734 = vmatpush1.msra.mxu0 0.0
      %1735 = vmatprep.subr.mxu0 0.0
      %1736 = vmatpush1.msra.mxu0 0.0
      %1737 = vmatprep.subr.mxu0 0.0
      %1738 = vmatpush1.msra.mxu0 0.0
      %1739 = vmatprep.subr.mxu0 0.0
      %1740 = vmatpush1.msra.mxu0 0.0
      %1741 = vmatprep.subr.mxu0 0.0
      %1742 = vmatpush1.msra.mxu0 0.0
      %1743 = vmatprep.subr.mxu0 0.0
      %1744 = vmatpush1.msra.mxu0 0.0
      %1745 = vmatprep.subr.mxu0 0.0
      %1746 = vmatpush1.msra.mxu0 0.0
      %1747 = vmatprep.subr.mxu0 0.0
      %1748 = vmatpush1.msra.mxu0 0.0
      %1749 = vmatprep.subr.mxu0 0.0
      %1750 = vmatpush1.msra.mxu0 0.0
      %1751 = vmatprep.subr.mxu0 0.0
      %1752 = vmatpush1.msra.mxu0 0.0
      %1753 = vmatprep.subr.mxu0 0.0
      %1754 = vmatpush1.msra.mxu0 0.0
      %1755 = vmatprep.subr.mxu0 0.0
      %1756 = vmatpush1.msra.mxu0 0.0
      %1757 = vmatprep.subr.mxu0 0.0
      %1758 = vmatpush1.msra.mxu0 0.0
      %1759 = vmatprep.subr.mxu0 0.0
      %1760 = vmatpush1.msra.mxu0 0.0
      %1761 = vmatprep.subr.mxu0 0.0
      %1762 = vmatpush1.msra.mxu0 0.0
      %1763 = vmatprep.subr.mxu0 0.0
      %1764 = vmatpush1.msra.mxu0 0.0
      %1765 = vmatprep.subr.mxu0 0.0
      %1766 = vmatpush1.msra.mxu0 0.0
      %1767 = vmatprep.subr.mxu0 0.0
      %1768 = vmatpush1.msra.mxu0 0.0
      %1769 = vmatprep.subr.mxu0 0.0
      %1770 = vmatpush1.msra.mxu0 0.0
      %1771 = vmatprep.subr.mxu0 0.0
      %1772 = vmatpush1.msra.mxu0 0.0
      %1773 = vmatprep.subr.mxu0 0.0
      %1774 = vmatpush1.msra.mxu0 0.0
      %1775 = vmatprep.subr.mxu0 0.0
      %1776 = vmatpush1.msra.mxu0 0.0
      %1777 = vmatprep.mubr.f32.mxu0 0.0
      %1778 = vmatmul.mubr.f32.gmra.mrb[0].mxu0 %v1711
      %v1779 = vpop.f32.mrb[0].mxu0
      %v1780 = vadd.f32 0.0, %v1779
      %v1781 = vpop.f32.mrb[0].mxu0
      %1782 = vdwg.mxu0
      %v1783 = vld [vmem:[%s5] sm:$0xff]
      %v1784 = vld [vmem:[%s5 + $0x8] sm:$0xff]
      %v1785 = vld [vmem:[%s5 + $0x10] sm:$0xff]
      %v1786 = vld [vmem:[%s5 + $0x18] sm:$0xff]
      %v1787 = vld [vmem:[%s5 + $0x20] sm:$0xff]
      %v1788 = vld [vmem:[%s5 + $0x28] sm:$0xff]
      %v1789 = vld [vmem:[%s5 + $0x30] sm:$0xff]
      %v1790 = vld [vmem:[%s5 + $0x38] sm:$0xff]
      %v1791 = vld [vmem:[%s5 + $0x40] sm:$0xff]
      %v1792 = vld [vmem:[%s5 + $0x48] sm:$0xff]
      %v1793 = vld [vmem:[%s5 + $0x50] sm:$0xff]
      %v1794 = vld [vmem:[%s5 + $0x58] sm:$0xff]
      %v1795 = vld [vmem:[%s5 + $0x60] sm:$0xff]
      %v1796 = vld [vmem:[%s5 + $0x68] sm:$0xff]
      %v1797 = vld [vmem:[%s5 + $0x70] sm:$0xff]
      %v1798 = vld [vmem:[%s5 + $0x78] sm:$0xff]
      %v1799 = vld [vmem:[%s5 + $0x80] sm:$0xff]
      %v1800 = vld [vmem:[%s5 + $0x88] sm:$0xff]
      %v1801 = vld [vmem:[%s5 + $0x90] sm:$0xff]
      %v1802 = vld [vmem:[%s5 + $0x98] sm:$0xff]
      %v1803 = vld [vmem:[%s5 + $0xa0] sm:$0xff]
      %v1804 = vld [vmem:[%s5 + $0xa8] sm:$0xff]
      %v1805 = vld [vmem:[%s5 + $0xb0] sm:$0xff]
      %v1806 = vld [vmem:[%s5 + $0xb8] sm:$0xff]
      %v1807 = vld [vmem:[%s5 + $0xc0] sm:$0xff]
      %v1808 = vld [vmem:[%s5 + $0xc8] sm:$0xff]
      %v1809 = vld [vmem:[%s5 + $0xd0] sm:$0xff]
      %v1810 = vld [vmem:[%s5 + $0xd8] sm:$0xff]
      %v1811 = vld [vmem:[%s5 + $0xe0] sm:$0xff]
      %v1812 = vld [vmem:[%s5 + $0xe8] sm:$0xff]
      %v1813 = vld [vmem:[%s5 + $0xf0] sm:$0xff]
      %v1814 = vld [vmem:[%s5 + $0xf8] sm:$0xff]
      %v1815 = vld [vmem:[%s5 + $0x100] sm:$0xff]
      %v1816 = vld [vmem:[%s5 + $0x108] sm:$0xff]
      %v1817 = vld [vmem:[%s5 + $0x110] sm:$0xff]
      %v1818 = vld [vmem:[%s5 + $0x118] sm:$0xff]
      %v1819 = vld [vmem:[%s5 + $0x120] sm:$0xff]
      %v1820 = vld [vmem:[%s5 + $0x128] sm:$0xff]
      %v1821 = vld [vmem:[%s5 + $0x130] sm:$0xff]
      %v1822 = vld [vmem:[%s5 + $0x138] sm:$0xff]
      %v1823 = vld [vmem:[%s5 + $0x140] sm:$0xff]
      %v1824 = vld [vmem:[%s5 + $0x148] sm:$0xff]
      %v1825 = vld [vmem:[%s5 + $0x150] sm:$0xff]
      %v1826 = vld [vmem:[%s5 + $0x158] sm:$0xff]
      %v1827 = vld [vmem:[%s5 + $0x160] sm:$0xff]
      %v1828 = vld [vmem:[%s5 + $0x168] sm:$0xff]
      %v1829 = vld [vmem:[%s5 + $0x170] sm:$0xff]
      %v1830 = vld [vmem:[%s5 + $0x178] sm:$0xff]
      %v1831 = vld [vmem:[%s5 + $0x180] sm:$0xff]
      %v1832 = vld [vmem:[%s5 + $0x188] sm:$0xff]
      %v1833 = vld [vmem:[%s5 + $0x190] sm:$0xff]
      %v1834 = vld [vmem:[%s5 + $0x198] sm:$0xff]
      %v1835 = vld [vmem:[%s5 + $0x1a0] sm:$0xff]
      %v1836 = vld [vmem:[%s5 + $0x1a8] sm:$0xff]
      %v1837 = vld [vmem:[%s5 + $0x1b0] sm:$0xff]
      %v1838 = vld [vmem:[%s5 + $0x1b8] sm:$0xff]
      %v1839 = vld [vmem:[%s5 + $0x1c0] sm:$0xff]
      %v1840 = vld [vmem:[%s5 + $0x1c8] sm:$0xff]
      %v1841 = vld [vmem:[%s5 + $0x1d0] sm:$0xff]
      %v1842 = vld [vmem:[%s5 + $0x1d8] sm:$0xff]
      %v1843 = vld [vmem:[%s5 + $0x1e0] sm:$0xff]
      %v1844 = vld [vmem:[%s5 + $0x1e8] sm:$0xff]
      %v1845 = vld [vmem:[%s5 + $0x1f0] sm:$0xff]
      %v1846 = vld [vmem:[%s5 + $0x1f8] sm:$0xff]
      %1847 = vmatprep.subr.mxu0 0.0
      %1848 = vmatpush1.msra.mxu0 %v1783
      %1849 = vmatprep.subr.mxu0 0.0
      %1850 = vmatpush1.msra.mxu0 %v1784
      %1851 = vmatprep.subr.mxu0 0.0
      %1852 = vmatpush1.msra.mxu0 %v1785
      %1853 = vmatprep.subr.mxu0 0.0
      %1854 = vmatpush1.msra.mxu0 %v1786
      %1855 = vmatprep.subr.mxu0 0.0
      %1856 = vmatpush1.msra.mxu0 %v1787
      %1857 = vmatprep.subr.mxu0 0.0
      %1858 = vmatpush1.msra.mxu0 %v1788
      %1859 = vmatprep.subr.mxu0 0.0
      %1860 = vmatpush1.msra.mxu0 %v1789
      %1861 = vmatprep.subr.mxu0 0.0
      %1862 = vmatpush1.msra.mxu0 %v1790
      %1863 = vmatprep.subr.mxu0 0.0
      %1864 = vmatpush1.msra.mxu0 %v1791
      %1865 = vmatprep.subr.mxu0 0.0
      %1866 = vmatpush1.msra.mxu0 %v1792
      %1867 = vmatprep.subr.mxu0 0.0
      %1868 = vmatpush1.msra.mxu0 %v1793
      %1869 = vmatprep.subr.mxu0 0.0
      %1870 = vmatpush1.msra.mxu0 %v1794
      %1871 = vmatprep.subr.mxu0 0.0
      %1872 = vmatpush1.msra.mxu0 %v1795
      %1873 = vmatprep.subr.mxu0 0.0
      %1874 = vmatpush1.msra.mxu0 %v1796
      %1875 = vmatprep.subr.mxu0 0.0
      %1876 = vmatpush1.msra.mxu0 %v1797
      %1877 = vmatprep.subr.mxu0 0.0
      %1878 = vmatpush1.msra.mxu0 %v1798
      %1879 = vmatprep.subr.mxu0 0.0
      %1880 = vmatpush1.msra.mxu0 0.0
      %1881 = vmatprep.subr.mxu0 0.0
      %1882 = vmatpush1.msra.mxu0 0.0
      %1883 = vmatprep.subr.mxu0 0.0
      %1884 = vmatpush1.msra.mxu0 0.0
      %1885 = vmatprep.subr.mxu0 0.0
      %1886 = vmatpush1.msra.mxu0 0.0
      %1887 = vmatprep.subr.mxu0 0.0
      %1888 = vmatpush1.msra.mxu0 0.0
      %1889 = vmatprep.subr.mxu0 0.0
      %1890 = vmatpush1.msra.mxu0 0.0
      %1891 = vmatprep.subr.mxu0 0.0
      %1892 = vmatpush1.msra.mxu0 0.0
      %1893 = vmatprep.subr.mxu0 0.0
      %1894 = vmatpush1.msra.mxu0 0.0
      %1895 = vmatprep.subr.mxu0 0.0
      %1896 = vmatpush1.msra.mxu0 0.0
      %1897 = vmatprep.subr.mxu0 0.0
      %1898 = vmatpush1.msra.mxu0 0.0
      %1899 = vmatprep.subr.mxu0 0.0
      %1900 = vmatpush1.msra.mxu0 0.0
      %1901 = vmatprep.subr.mxu0 0.0
      %1902 = vmatpush1.msra.mxu0 0.0
      %1903 = vmatprep.subr.mxu0 0.0
      %1904 = vmatpush1.msra.mxu0 0.0
      %1905 = vmatprep.subr.mxu0 0.0
      %1906 = vmatpush1.msra.mxu0 0.0
      %1907 = vmatprep.subr.mxu0 0.0
      %1908 = vmatpush1.msra.mxu0 0.0
      %1909 = vmatprep.subr.mxu0 0.0
      %1910 = vmatpush1.msra.mxu0 0.0
      %1911 = vmatprep.mubr.f32.mxu0 0.0
      %1912 = vmatmul.mubr.f32.gmra.mrb[0].mxu0 %v1561
      %v1913 = vpop.f32.mrb[0].mxu0
      %v1914 = vadd.f32 0.0, %v1913
      %v1915 = vpop.f32.mrb[0].mxu0
      %1916 = vdwg.mxu0
      %1917 = vmatprep.subr.mxu0 0.0
      %1918 = vmatpush1.msra.mxu0 %v1799
      %1919 = vmatprep.subr.mxu0 0.0
      %1920 = vmatpush1.msra.mxu0 %v1800
      %1921 = vmatprep.subr.mxu0 0.0
      %1922 = vmatpush1.msra.mxu0 %v1801
      %1923 = vmatprep.subr.mxu0 0.0
      %1924 = vmatpush1.msra.mxu0 %v1802
      %1925 = vmatprep.subr.mxu0 0.0
      %1926 = vmatpush1.msra.mxu0 %v1803
      %1927 = vmatprep.subr.mxu0 0.0
      %1928 = vmatpush1.msra.mxu0 %v1804
      %1929 = vmatprep.subr.mxu0 0.0
      %1930 = vmatpush1.msra.mxu0 %v1805
      %1931 = vmatprep.subr.mxu0 0.0
      %1932 = vmatpush1.msra.mxu0 %v1806
      %1933 = vmatprep.subr.mxu0 0.0
      %1934 = vmatpush1.msra.mxu0 %v1807
      %1935 = vmatprep.subr.mxu0 0.0
      %1936 = vmatpush1.msra.mxu0 %v1808
      %1937 = vmatprep.subr.mxu0 0.0
      %1938 = vmatpush1.msra.mxu0 %v1809
      %1939 = vmatprep.subr.mxu0 0.0
      %1940 = vmatpush1.msra.mxu0 %v1810
      %1941 = vmatprep.subr.mxu0 0.0
      %1942 = vmatpush1.msra.mxu0 %v1811
      %1943 = vmatprep.subr.mxu0 0.0
      %1944 = vmatpush1.msra.mxu0 %v1812
      %1945 = vmatprep.subr.mxu0 0.0
      %1946 = vmatpush1.msra.mxu0 %v1813
      %1947 = vmatprep.subr.mxu0 0.0
      %1948 = vmatpush1.msra.mxu0 %v1814
      %1949 = vmatprep.subr.mxu0 0.0
      %1950 = vmatpush1.msra.mxu0 0.0
      %1951 = vmatprep.subr.mxu0 0.0
      %1952 = vmatpush1.msra.mxu0 0.0
      %1953 = vmatprep.subr.mxu0 0.0
      %1954 = vmatpush1.msra.mxu0 0.0
      %1955 = vmatprep.subr.mxu0 0.0
      %1956 = vmatpush1.msra.mxu0 0.0
      %1957 = vmatprep.subr.mxu0 0.0
      %1958 = vmatpush1.msra.mxu0 0.0
      %1959 = vmatprep.subr.mxu0 0.0
      %1960 = vmatpush1.msra.mxu0 0.0
      %1961 = vmatprep.subr.mxu0 0.0
      %1962 = vmatpush1.msra.mxu0 0.0
      %1963 = vmatprep.subr.mxu0 0.0
      %1964 = vmatpush1.msra.mxu0 0.0
      %1965 = vmatprep.subr.mxu0 0.0
      %1966 = vmatpush1.msra.mxu0 0.0
      %1967 = vmatprep.subr.mxu0 0.0
      %1968 = vmatpush1.msra.mxu0 0.0
      %1969 = vmatprep.subr.mxu0 0.0
      %1970 = vmatpush1.msra.mxu0 0.0
      %1971 = vmatprep.subr.mxu0 0.0
      %1972 = vmatpush1.msra.mxu0 0.0
      %1973 = vmatprep.subr.mxu0 0.0
      %1974 = vmatpush1.msra.mxu0 0.0
      %1975 = vmatprep.subr.mxu0 0.0
      %1976 = vmatpush1.msra.mxu0 0.0
      %1977 = vmatprep.subr.mxu0 0.0
      %1978 = vmatpush1.msra.mxu0 0.0
      %1979 = vmatprep.subr.mxu0 0.0
      %1980 = vmatpush1.msra.mxu0 0.0
      %1981 = vmatprep.mubr.f32.mxu0 0.0
      %1982 = vmatmul.mubr.f32.gmra.mrb[0].mxu0 %v1634
      %v1983 = vpop.f32.mrb[0].mxu0
      %v1984 = vadd.f32 0.0, %v1983
      %v1985 = vpop.f32.mrb[0].mxu0
      %1986 = vdwg.mxu0
      %1987 = vmatprep.subr.mxu0 0.0
      %1988 = vmatpush1.msra.mxu0 %v1815
      %1989 = vmatprep.subr.mxu0 0.0
      %1990 = vmatpush1.msra.mxu0 %v1816
      %1991 = vmatprep.subr.mxu0 0.0
      %1992 = vmatpush1.msra.mxu0 %v1817
      %1993 = vmatprep.subr.mxu0 0.0
      %1994 = vmatpush1.msra.mxu0 %v1818
      %1995 = vmatprep.subr.mxu0 0.0
      %1996 = vmatpush1.msra.mxu0 %v1819
      %1997 = vmatprep.subr.mxu0 0.0
      %1998 = vmatpush1.msra.mxu0 %v1820
      %1999 = vmatprep.subr.mxu0 0.0
      %2000 = vmatpush1.msra.mxu0 %v1821
      %2001 = vmatprep.subr.mxu0 0.0
      %2002 = vmatpush1.msra.mxu0 %v1822
      %2003 = vmatprep.subr.mxu0 0.0
      %2004 = vmatpush1.msra.mxu0 %v1823
      %2005 = vmatprep.subr.mxu0 0.0
      %2006 = vmatpush1.msra.mxu0 %v1824
      %2007 = vmatprep.subr.mxu0 0.0
      %2008 = vmatpush1.msra.mxu0 %v1825
      %2009 = vmatprep.subr.mxu0 0.0
      %2010 = vmatpush1.msra.mxu0 %v1826
      %2011 = vmatprep.subr.mxu0 0.0
      %2012 = vmatpush1.msra.mxu0 %v1827
      %2013 = vmatprep.subr.mxu0 0.0
      %2014 = vmatpush1.msra.mxu0 %v1828
      %2015 = vmatprep.subr.mxu0 0.0
      %2016 = vmatpush1.msra.mxu0 %v1829
      %2017 = vmatprep.subr.mxu0 0.0
      %2018 = vmatpush1.msra.mxu0 %v1830
      %2019 = vmatprep.subr.mxu0 0.0
      %2020 = vmatpush1.msra.mxu0 0.0
      %2021 = vmatprep.subr.mxu0 0.0
      %2022 = vmatpush1.msra.mxu0 0.0
      %2023 = vmatprep.subr.mxu0 0.0
      %2024 = vmatpush1.msra.mxu0 0.0
      %2025 = vmatprep.subr.mxu0 0.0
      %2026 = vmatpush1.msra.mxu0 0.0
      %2027 = vmatprep.subr.mxu0 0.0
      %2028 = vmatpush1.msra.mxu0 0.0
      %2029 = vmatprep.subr.mxu0 0.0
      %2030 = vmatpush1.msra.mxu0 0.0
      %2031 = vmatprep.subr.mxu0 0.0
      %2032 = vmatpush1.msra.mxu0 0.0
      %2033 = vmatprep.subr.mxu0 0.0
      %2034 = vmatpush1.msra.mxu0 0.0
      %2035 = vmatprep.subr.mxu0 0.0
      %2036 = vmatpush1.msra.mxu0 0.0
      %2037 = vmatprep.subr.mxu0 0.0
      %2038 = vmatpush1.msra.mxu0 0.0
      %2039 = vmatprep.subr.mxu0 0.0
      %2040 = vmatpush1.msra.mxu0 0.0
      %2041 = vmatprep.subr.mxu0 0.0
      %2042 = vmatpush1.msra.mxu0 0.0
      %2043 = vmatprep.subr.mxu0 0.0
      %2044 = vmatpush1.msra.mxu0 0.0
      %2045 = vmatprep.subr.mxu0 0.0
      %2046 = vmatpush1.msra.mxu0 0.0
      %2047 = vmatprep.subr.mxu0 0.0
      %2048 = vmatpush1.msra.mxu0 0.0
      %2049 = vmatprep.subr.mxu0 0.0
      %2050 = vmatpush1.msra.mxu0 0.0
      %2051 = vmatprep.mubr.f32.mxu0 0.0
      %2052 = vmatmul.mubr.f32.gmra.mrb[0].mxu0 %v1707
      %v2053 = vpop.f32.mrb[0].mxu0
      %v2054 = vadd.f32 0.0, %v2053
      %v2055 = vpop.f32.mrb[0].mxu0
      %2056 = vdwg.mxu0
      %2057 = vmatprep.subr.mxu0 0.0
      %2058 = vmatpush1.msra.mxu0 %v1831
      %2059 = vmatprep.subr.mxu0 0.0
      %2060 = vmatpush1.msra.mxu0 %v1832
      %2061 = vmatprep.subr.mxu0 0.0
      %2062 = vmatpush1.msra.mxu0 %v1833
      %2063 = vmatprep.subr.mxu0 0.0
      %2064 = vmatpush1.msra.mxu0 %v1834
      %2065 = vmatprep.subr.mxu0 0.0
      %2066 = vmatpush1.msra.mxu0 %v1835
      %2067 = vmatprep.subr.mxu0 0.0
      %2068 = vmatpush1.msra.mxu0 %v1836
      %2069 = vmatprep.subr.mxu0 0.0
      %2070 = vmatpush1.msra.mxu0 %v1837
      %2071 = vmatprep.subr.mxu0 0.0
      %2072 = vmatpush1.msra.mxu0 %v1838
      %2073 = vmatprep.subr.mxu0 0.0
      %2074 = vmatpush1.msra.mxu0 %v1839
      %2075 = vmatprep.subr.mxu0 0.0
      %2076 = vmatpush1.msra.mxu0 %v1840
      %2077 = vmatprep.subr.mxu0 0.0
      %2078 = vmatpush1.msra.mxu0 %v1841
      %2079 = vmatprep.subr.mxu0 0.0
      %2080 = vmatpush1.msra.mxu0 %v1842
      %2081 = vmatprep.subr.mxu0 0.0
      %2082 = vmatpush1.msra.mxu0 %v1843
      %2083 = vmatprep.subr.mxu0 0.0
      %2084 = vmatpush1.msra.mxu0 %v1844
      %2085 = vmatprep.subr.mxu0 0.0
      %2086 = vmatpush1.msra.mxu0 %v1845
      %2087 = vmatprep.subr.mxu0 0.0
      %2088 = vmatpush1.msra.mxu0 %v1846
      %2089 = vmatprep.subr.mxu0 0.0
      %2090 = vmatpush1.msra.mxu0 0.0
      %2091 = vmatprep.subr.mxu0 0.0
      %2092 = vmatpush1.msra.mxu0 0.0
      %2093 = vmatprep.subr.mxu0 0.0
      %2094 = vmatpush1.msra.mxu0 0.0
      %2095 = vmatprep.subr.mxu0 0.0
      %2096 = vmatpush1.msra.mxu0 0.0
      %2097 = vmatprep.subr.mxu0 0.0
      %2098 = vmatpush1.msra.mxu0 0.0
      %2099 = vmatprep.subr.mxu0 0.0
      %2100 = vmatpush1.msra.mxu0 0.0
      %2101 = vmatprep.subr.mxu0 0.0
      %2102 = vmatpush1.msra.mxu0 0.0
      %2103 = vmatprep.subr.mxu0 0.0
      %2104 = vmatpush1.msra.mxu0 0.0
      %2105 = vmatprep.subr.mxu0 0.0
      %2106 = vmatpush1.msra.mxu0 0.0
      %2107 = vmatprep.subr.mxu0 0.0
      %2108 = vmatpush1.msra.mxu0 0.0
      %2109 = vmatprep.subr.mxu0 0.0
      %2110 = vmatpush1.msra.mxu0 0.0
      %2111 = vmatprep.subr.mxu0 0.0
      %2112 = vmatpush1.msra.mxu0 0.0
      %2113 = vmatprep.subr.mxu0 0.0
      %2114 = vmatpush1.msra.mxu0 0.0
      %2115 = vmatprep.subr.mxu0 0.0
      %2116 = vmatpush1.msra.mxu0 0.0
      %2117 = vmatprep.subr.mxu0 0.0
      %2118 = vmatpush1.msra.mxu0 0.0
      %2119 = vmatprep.subr.mxu0 0.0
      %2120 = vmatpush1.msra.mxu0 0.0
      %2121 = vmatprep.mubr.f32.mxu0 0.0
      %2122 = vmatmul.mubr.f32.gmra.mrb[0].mxu0 %v1780
      %v2123 = vpop.f32.mrb[0].mxu0
      %v2124 = vadd.f32 0.0, %v2123
      %v2125 = vpop.f32.mrb[0].mxu0
      %2126 = vdwg.mxu0
      %v2127 = vsel %vm439, %v1914, 0.0
      %v2128 = vsel %vm439, %v1984, 0.0
      %v2129 = vadd.f32 %v2127, %v2128
      %v2130 = vsel %vm439, %v2054, 0.0
      %v2131 = vadd.f32 %v2129, %v2130
      %v2132 = vsel %vm439, %v2124, 0.0
      %v2133 = vadd.f32 %v2131, %v2132
      %v2134 = vadd.f32 %v436, %v2133
      %v2135 = vld [vmem:[%s6] sm:$0x1]
      %v2137 = vlaneseq
      %v2138 = vshrl.u32 %v2137, 7
      %v2139 = vsub.s32 0, %v2138
      %v2140 = vrot.slane %v2135, %v2139
      %v2142 = vadd.f32 %v2134, %v2140
      %v2143 = vld [vmem:[%s7] sm:$0x1]
      %v2144 = vld [vmem:[%s8] sm:$0x1]
      %v2145 = vsel %vm439, %v2142, 0.0
      %2146 = vadd.xlane.f32.xlu0 %v2145
      %v2147 = vpop.xlane.xlu0 %2146
      %v2148 = vmul.f32 %v2147, %v443
      %v2149 = vsub.f32 %v2142, %v2148
      %v2150 = vmul.f32 %v2149, %v2149
      %v2151 = vsel %vm439, %v2150, 0.0
      %2152 = vadd.xlane.f32.xlu0 %v2151
      %v2153 = vpop.xlane.xlu0 %2152
      %v2154 = vmul.f32 %v2153, %v443
      %v2155 = vadd.f32 %v2154, 1e-05
      %v2156 = vrsqrt.pop %v2155
      %v2157 = vmul.f32 %v2149, %v2156
      %v2159 = vlaneseq
      %v2160 = vshrl.u32 %v2159, 7
      %v2161 = vsub.s32 0, %v2160
      %v2162 = vrot.slane %v2143, %v2161
      %v2164 = vmul.f32 %v2157, %v2162
      %v2166 = vlaneseq
      %v2167 = vshrl.u32 %v2166, 7
      %v2168 = vsub.s32 0, %v2167
      %v2169 = vrot.slane %v2144, %v2168
      %v2171 = vadd.f32 %v2164, %v2169
      %v2172 = vld [vmem:[%s9] sm:$0xff]
      %v2173 = vld [vmem:[%s9 + $0x8] sm:$0xff]
      %v2174 = vld [vmem:[%s9 + $0x10] sm:$0xff]
      %v2175 = vld [vmem:[%s9 + $0x18] sm:$0xff]
      %v2176 = vld [vmem:[%s10] sm:$0x1]
      %v2178 = vlaneseq
      %v2179 = vshrl.u32 %v2178, 7
      %v2180 = vsub.s32 0, %v2179
      %v2181 = vrot.slane %v2176, %v2180
      %v2184 = vsel %vm439, %v2171, 0
      %2186 = vmatprep.subr.mxu0 0.0
      %2187 = vmatpush1.msra.mxu0 %v2172
      %2188 = vmatprep.subr.mxu0 0.0
      %2189 = vmatpush1.msra.mxu0 %v2173
      %2190 = vmatprep.subr.mxu0 0.0
      %2191 = vmatpush1.msra.mxu0 %v2174
      %2192 = vmatprep.subr.mxu0 0.0
      %2193 = vmatpush1.msra.mxu0 %v2175
      %2194 = vmatprep.subr.mxu0 0.0
      %2195 = vmatpush1.msra.mxu0 0.0
      %2196 = vmatprep.subr.mxu0 0.0
      %2197 = vmatpush1.msra.mxu0 0.0
      %2198 = vmatprep.subr.mxu0 0.0
      %2199 = vmatpush1.msra.mxu0 0.0
      %2200 = vmatprep.subr.mxu0 0.0
      %2201 = vmatpush1.msra.mxu0 0.0
      %2202 = vmatprep.subr.mxu0 0.0
      %2203 = vmatpush1.msra.mxu0 0.0
      %2204 = vmatprep.subr.mxu0 0.0
      %2205 = vmatpush1.msra.mxu0 0.0
      %2206 = vmatprep.subr.mxu0 0.0
      %2207 = vmatpush1.msra.mxu0 0.0
      %2208 = vmatprep.subr.mxu0 0.0
      %2209 = vmatpush1.msra.mxu0 0.0
      %2210 = vmatprep.subr.mxu0 0.0
      %2211 = vmatpush1.msra.mxu0 0.0
      %2212 = vmatprep.subr.mxu0 0.0
      %2213 = vmatpush1.msra.mxu0 0.0
      %2214 = vmatprep.subr.mxu0 0.0
      %2215 = vmatpush1.msra.mxu0 0.0
      %2216 = vmatprep.subr.mxu0 0.0
      %2217 = vmatpush1.msra.mxu0 0.0
      %2218 = vmatprep.subr.mxu0 0.0
      %2219 = vmatpush1.msra.mxu0 0.0
      %2220 = vmatprep.subr.mxu0 0.0
      %2221 = vmatpush1.msra.mxu0 0.0
      %2222 = vmatprep.subr.mxu0 0.0
      %2223 = vmatpush1.msra.mxu0 0.0
      %2224 = vmatprep.subr.mxu0 0.0
      %2225 = vmatpush1.msra.mxu0 0.0
      %2226 = vmatprep.subr.mxu0 0.0
      %2227 = vmatpush1.msra.mxu0 0.0
      %2228 = vmatprep.subr.mxu0 0.0
      %2229 = vmatpush1.msra.mxu0 0.0
      %2230 = vmatprep.subr.mxu0 0.0
      %2231 = vmatpush1.msra.mxu0 0.0
      %2232 = vmatprep.subr.mxu0 0.0
      %2233 = vmatpush1.msra.mxu0 0.0
      %2234 = vmatprep.subr.mxu0 0.0
      %2235 = vmatpush1.msra.mxu0 0.0
      %2236 = vmatprep.subr.mxu0 0.0
      %2237 = vmatpush1.msra.mxu0 0.0
      %2238 = vmatprep.subr.mxu0 0.0
      %2239 = vmatpush1.msra.mxu0 0.0
      %2240 = vmatprep.subr.mxu0 0.0
      %2241 = vmatpush1.msra.mxu0 0.0
      %2242 = vmatprep.subr.mxu0 0.0
      %2243 = vmatpush1.msra.mxu0 0.0
      %2244 = vmatprep.subr.mxu0 0.0
      %2245 = vmatpush1.msra.mxu0 0.0
      %2246 = vmatprep.subr.mxu0 0.0
      %2247 = vmatpush1.msra.mxu0 0.0
      %2248 = vmatprep.subr.mxu0 0.0
      %2249 = vmatpush1.msra.mxu0 0.0
      %2250 = vmatprep.mubr.f32.mxu0 0.0
      %2251 = vmatmul.mubr.f32.gmra.mrb[0].mxu0 %v2184
      %v2252 = vpop.f32.mrb[0].mxu0
      %v2253 = vadd.f32 %v2181, %v2252
      %v2254 = vpop.f32.mrb[0].mxu0
      %2255 = vdwg.mxu0
      %v2256 = vmul.f32 %v2253, 0.5
      %v2257 = vmul.f32 %v2253, 0.044715
      %v2258 = vmul.f32 %v2257, %v2253
      %v2259 = vmul.f32 %v2258, %v2253
      %v2260 = vadd.f32 %v2253, %v2259
      %v2261 = vmul.f32 %v2260, 0.7978846
      %v2262 = vtanh.pop %v2261
      %v2263 = vadd.f32 %v2262, 1.0
      %v2264 = vmul.f32 %v2256, %v2263
      %v2265 = vld [vmem:[%s11] sm:$0xff]
      %v2266 = vld [vmem:[%s11 + $0x8] sm:$0xff]
      %v2267 = vld [vmem:[%s11 + $0x10] sm:$0xff]
      %v2268 = vld [vmem:[%s11 + $0x18] sm:$0xff]
      %v2269 = vld [vmem:[%s11 + $0x20] sm:$0xff]
      %v2270 = vld [vmem:[%s11 + $0x28] sm:$0xff]
      %v2271 = vld [vmem:[%s11 + $0x30] sm:$0xff]
      %v2272 = vld [vmem:[%s11 + $0x38] sm:$0xff]
      %v2273 = vld [vmem:[%s11 + $0x40] sm:$0xff]
      %v2274 = vld [vmem:[%s11 + $0x48] sm:$0xff]
      %v2275 = vld [vmem:[%s11 + $0x50] sm:$0xff]
      %v2276 = vld [vmem:[%s11 + $0x58] sm:$0xff]
      %v2277 = vld [vmem:[%s11 + $0x60] sm:$0xff]
      %v2278 = vld [vmem:[%s11 + $0x68] sm:$0xff]
      %v2279 = vld [vmem:[%s11 + $0x70] sm:$0xff]
      %v2280 = vld [vmem:[%s11 + $0x78] sm:$0xff]
      %v2281 = vld [vmem:[%s12] sm:$0x1]
      %v2283 = vlaneseq
      %v2284 = vshrl.u32 %v2283, 7
      %v2285 = vsub.s32 0, %v2284
      %v2286 = vrot.slane %v2281, %v2285
      %2288 = vmatprep.subr.mxu0 0.0
      %2289 = vmatpush1.msra.mxu0 %v2265
      %2290 = vmatprep.subr.mxu0 0.0
      %2291 = vmatpush1.msra.mxu0 %v2266
      %2292 = vmatprep.subr.mxu0 0.0
      %2293 = vmatpush1.msra.mxu0 %v2267
      %2294 = vmatprep.subr.mxu0 0.0
      %2295 = vmatpush1.msra.mxu0 %v2268
      %2296 = vmatprep.subr.mxu0 0.0
      %2297 = vmatpush1.msra.mxu0 %v2269
      %2298 = vmatprep.subr.mxu0 0.0
      %2299 = vmatpush1.msra.mxu0 %v2270
      %2300 = vmatprep.subr.mxu0 0.0
      %2301 = vmatpush1.msra.mxu0 %v2271
      %2302 = vmatprep.subr.mxu0 0.0
      %2303 = vmatpush1.msra.mxu0 %v2272
      %2304 = vmatprep.subr.mxu0 0.0
      %2305 = vmatpush1.msra.mxu0 %v2273
      %2306 = vmatprep.subr.mxu0 0.0
      %2307 = vmatpush1.msra.mxu0 %v2274
      %2308 = vmatprep.subr.mxu0 0.0
      %2309 = vmatpush1.msra.mxu0 %v2275
      %2310 = vmatprep.subr.mxu0 0.0
      %2311 = vmatpush1.msra.mxu0 %v2276
      %2312 = vmatprep.subr.mxu0 0.0
      %2313 = vmatpush1.msra.mxu0 %v2277
      %2314 = vmatprep.subr.mxu0 0.0
      %2315 = vmatpush1.msra.mxu0 %v2278
      %2316 = vmatprep.subr.mxu0 0.0
      %2317 = vmatpush1.msra.mxu0 %v2279
      %2318 = vmatprep.subr.mxu0 0.0
      %2319 = vmatpush1.msra.mxu0 %v2280
      %2320 = vmatprep.subr.mxu0 0.0
      %2321 = vmatpush1.msra.mxu0 0.0
      %2322 = vmatprep.subr.mxu0 0.0
      %2323 = vmatpush1.msra.mxu0 0.0
      %2324 = vmatprep.subr.mxu0 0.0
      %2325 = vmatpush1.msra.mxu0 0.0
      %2326 = vmatprep.subr.mxu0 0.0
      %2327 = vmatpush1.msra.mxu0 0.0
      %2328 = vmatprep.subr.mxu0 0.0
      %2329 = vmatpush1.msra.mxu0 0.0
      %2330 = vmatprep.subr.mxu0 0.0
      %2331 = vmatpush1.msra.mxu0 0.0
      %2332 = vmatprep.subr.mxu0 0.0
      %2333 = vmatpush1.msra.mxu0 0.0
      %2334 = vmatprep.subr.mxu0 0.0
      %2335 = vmatpush1.msra.mxu0 0.0
      %2336 = vmatprep.subr.mxu0 0.0
      %2337 = vmatpush1.msra.mxu0 0.0
      %2338 = vmatprep.subr.mxu0 0.0
      %2339 = vmatpush1.msra.mxu0 0.0
      %2340 = vmatprep.subr.mxu0 0.0
      %2341 = vmatpush1.msra.mxu0 0.0
      %2342 = vmatprep.subr.mxu0 0.0
      %2343 = vmatpush1.msra.mxu0 0.0
      %2344 = vmatprep.subr.mxu0 0.0
      %2345 = vmatpush1.msra.mxu0 0.0
      %2346 = vmatprep.subr.mxu0 0.0
      %2347 = vmatpush1.msra.mxu0 0.0
      %2348 = vmatprep.subr.mxu0 0.0
      %2349 = vmatpush1.msra.mxu0 0.0
      %2350 = vmatprep.subr.mxu0 0.0
      %2351 = vmatpush1.msra.mxu0 0.0
      %2352 = vmatprep.mubr.f32.mxu0 0.0
      %2353 = vmatmul.mubr.f32.gmra.mrb[0].mxu0 %v2264
      %v2354 = vpop.f32.mrb[0].mxu0
      %v2355 = vadd.f32 %v2286, %v2354
      %v2356 = vpop.f32.mrb[0].mxu0
      %2357 = vdwg.mxu0
      %v2358 = vadd.f32 %v2142, %v2355
      %2359 = vst.msk [vmem:[%s435] sm:$0xff] %vm439, %v2358
      %p2360 = scmp.lt.s32.totalorder %s24, 1
      %s2361 = scalar_select %p2360, %s24, 1
      %s2362 = smul.addr %s2361, 8
      %s2363 = scalar_lea.vmem %s13, %s2362
      // Predicated region
      $region73: #{gpt_forward.5} parent=71 // pred_check
        %p2364 = pneg %p320
      $region74: #{gpt_forward.5} parent=71 // pred_check_branch
        %2366 = sbr.rel (%p2364) target = $region76
      $region75: #{gpt_forward.5} parent=71 // pred_region
        _
      $region76: #{gpt_forward.5} parent=71 // pred_fallthru
        _
    $region72: #{gpt_forward.5} parent=5 // pred_fallthru
      _
    %p2367 = scmp.le.s32.totalorder 2, %s19
    // Predicated region
    $region77: #{gpt_forward.5} parent=5 // pred_check
      %p2368 = pneg %p2367
    $region78: #{gpt_forward.5} parent=5 // pred_check_branch
      %2370 = sbr.rel (%p2368) target = $region80
    $region79: #{gpt_forward.5} parent=5 // pred_region
      %s2371 = ssub.s32 %s19, 2
      // Predicated region
      $region81: #{gpt_forward.5} parent=79 // pred_check
        %p2372 = pneg %p326
      $region82: #{gpt_forward.5} parent=79 // pred_check_branch
        %2374 = sbr.rel (%p2372) target = $region84
      $region83: #{gpt_forward.5} parent=79 // pred_region
        %p2375 = scmp.lt.s32.totalorder %s25, 1
        %s2376 = scalar_select %p2375, %s25, 1
        %s2377 = smul.addr %s2376, 8
        %s2378 = scalar_lea.vmem %s13, %s2377
      $region84: #{gpt_forward.5} parent=79 // pred_fallthru
        _
    $region80: #{gpt_forward.5} parent=5 // pred_fallthru
      _
  $region6: #{gpt_forward.5} parent=0 // loop_footer
    %s23 = sadd.s32 1, %s19
  $region7: #{gpt_forward.5} parent=0 // loop_footer_branch
    %18 = sbr.rel target = $region3
  $region8: #{gpt_forward.5} parent=0 // loop_exit
    _

</llo_original>
